<compile_context>
chip_gen: v6e
topology: v6e:2x2x1
jax: 0.10.0
libtpu: 0.0.40
codegen_flags: <defaults>
</compile_context>

<pallas_src>
import functools

import jax
import jax.numpy as jnp
from jax import lax
from jax.experimental import pallas as pl
from jax.experimental.pallas import tpu as pltpu


# -----------------------------------------------------------------------------
# Single fused kernel: all GRU layers + pad-mask + fused head + time-mean.
#   x_ref    : (S*B, E)   time-major flattened input (row = t*B + b)
#   mask_ref : (S*B, 1)   1.0 where t < T[b] else 0.0
#   mean_ref : (B, S*B)   time-mean matrix (1/S on matching batch columns)
#   per layer (10 refs): wir, wiz, win (E,H); whr, whz, whn (H,H);
#                        br, bz, bn (1,H) input-side biases; bhn (1,H)
#   head: wf (H,H) = wsup@w1, bf (1,H), w2 (H,C), b2 (1,C)
#   out_ref  : (B, C)
#   scratch  : act (S*B,H), xr (S*B,H), xz (S*B,H), xn (S*B,H)
# -----------------------------------------------------------------------------
def fused_forward_kernel(x_ref, mask_ref, mean_ref, *refs,
                         num_layers, padding_value):
    out_ref = refs[-5]
    act_scr, xr_scr, xz_scr, xn_scr = refs[-4:]
    wf_ref, bf_ref, w2_ref, b2_ref = refs[10 * num_layers: 10 * num_layers + 4]

    SB = x_ref.shape[0]
    H = act_scr.shape[-1]
    B = mean_ref.shape[0]
    S = SB // B

    # ------------------------------ GRU stack --------------------------------
    for l in range(num_layers):
        (wir, wiz, win, whr, whz, whn, br, bz, bn, bhn) = refs[10 * l: 10 * l + 10]

        # Hoisted input projections (no time dependency, off the serial chain).
        xin = x_ref[...] if l == 0 else act_scr[...]
        xr_scr[...] = jnp.dot(xin, wir[...], preferred_element_type=jnp.float32) + br[...]
        xz_scr[...] = jnp.dot(xin, wiz[...], preferred_element_type=jnp.float32) + bz[...]
        xn_scr[...] = jnp.dot(xin, win[...], preferred_element_type=jnp.float32) + bn[...]

        whr_v = whr[...]
        whz_v = whz[...]
        whn_v = whn[...]
        bhn_b = jnp.broadcast_to(bhn[...], (B, H))   # hoist broadcast out of loop

        def step(t, h, whr_v=whr_v, whz_v=whz_v, whn_v=whn_v, bhn_b=bhn_b):
            sl = pl.ds(pl.multiple_of(t * B, B), B)
            # Three independent per-gate MXU pushes; no lane slicing anywhere.
            hr = jnp.dot(h, whr_v, preferred_element_type=jnp.float32)
            hz = jnp.dot(h, whz_v, preferred_element_type=jnp.float32)
            hn = jnp.dot(h, whn_v, preferred_element_type=jnp.float32)
            r = jax.nn.sigmoid(xr_scr[sl, :] + hr)
            z = jax.nn.sigmoid(xz_scr[sl, :] + hz)
            n = jnp.tanh(xn_scr[sl, :] + r * (hn + bhn_b))
            h_new = (1.0 - z) * n + z * h
            act_scr[sl, :] = h_new
            return h_new

        lax.fori_loop(0, S, step, jnp.zeros((B, H), jnp.float32), unroll=True)

    # ----------------- pad_packed_sequence mask + fused head -----------------
    maskf = mask_ref[...]                                        # (S*B, 1)
    ho = act_scr[...] * maskf + padding_value * (1.0 - maskf)    # (S*B, H)
    # Fused sup_linear + layer1 (wf = wsup@w1, bf = bsup@w1 + b1), then ReLU.
    h1 = jnp.maximum(
        jnp.dot(ho, wf_ref[...], preferred_element_type=jnp.float32) + bf_ref[...],
        0.0)
    # Time-mean BEFORE layer2: mean_t(h1) @ w2 + b2 == mean_t(h1 @ w2 + b2).
    hbar = jnp.dot(mean_ref[...], h1, preferred_element_type=jnp.float32)  # (B, H)
    out_ref[...] = (
        jnp.dot(hbar, w2_ref[...], preferred_element_type=jnp.float32) + b2_ref[...]
    )


# -----------------------------------------------------------------------------
# Parameter prep (runs under jit, traced once): fuse sup_linear with layer1.
# -----------------------------------------------------------------------------
def prepare_kernel_params(params):
    layers = []
    for lp in params["gru_layers"]:
        layers.append(dict(
            wir=lp["wir"], wiz=lp["wiz"], win=lp["win"],
            whr=lp["whr"], whz=lp["whz"], whn=lp["whn"],
            br=lp["br"], bz=lp["bz"], bn=lp["bin"], bhn=lp["bhn"],
        ))
    wf = params["wsup"] @ params["w1"]                       # (H, H)
    bf = params["bsup"] @ params["w1"] + params["b1"]        # (1, H)
    return dict(layers=layers, wf=wf, bf=bf, w2=params["w2"], b2=params["b2"])


# -----------------------------------------------------------------------------
# Full forward: H (B, S, E), T (B,) -> X (B, num_class).  Jitted end-to-end so
# param fusion / transpose / mask construction are traced once and fused by XLA.
# -----------------------------------------------------------------------------
@functools.partial(jax.jit, static_argnums=(3,))
def condition_classification_rnn(H, T, params, padding_value):
    kp = prepare_kernel_params(params)
    B, S, E = H.shape
    Hd = kp["layers"][0]["whr"].shape[0]
    C = kp["w2"].shape[1]

    # Time-major flattened input: row index = t*B + b.
    x = jnp.transpose(H, (1, 0, 2)).reshape(S * B, E).astype(jnp.float32)

    # Valid mask per flattened row (t < T[b]).
    t_idx = jnp.repeat(jnp.arange(S, dtype=jnp.int32), B)
    b_idx = jnp.tile(jnp.arange(B, dtype=jnp.int32), S)
    maskf = (t_idx < T.astype(jnp.int32)[b_idx]).astype(jnp.float32).reshape(S * B, 1)

    # Time-mean matrix: mean over t for each batch element as a tiny matmul.
    meanmat = jnp.tile(jnp.eye(B, dtype=jnp.float32), (1, S)) / S   # (B, S*B)

    vmem = pl.BlockSpec(memory_space=pltpu.MemorySpace.VMEM)
    inputs = [x, maskf, meanmat]
    for lp in kp["layers"]:
        inputs += [lp["wir"], lp["wiz"], lp["win"],
                   lp["whr"], lp["whz"], lp["whn"],
                   lp["br"], lp["bz"], lp["bn"], lp["bhn"]]
    inputs += [kp["wf"], kp["bf"], kp["w2"], kp["b2"]]

    kernel = functools.partial(fused_forward_kernel,
                               num_layers=len(kp["layers"]),
                               padding_value=float(padding_value))
    return pl.pallas_call(
        kernel,
        out_shape=jax.ShapeDtypeStruct((B, C), jnp.float32),
        in_specs=[vmem] * len(inputs),
        out_specs=vmem,
        scratch_shapes=[pltpu.VMEM((S * B, Hd), jnp.float32),   # activations
                        pltpu.VMEM((S * B, Hd), jnp.float32),   # xi_r
                        pltpu.VMEM((S * B, Hd), jnp.float32),   # xi_z
                        pltpu.VMEM((S * B, Hd), jnp.float32)],  # xi_n
    )(*inputs)


# -----------------------------------------------------------------------------
# Deterministic parameter init (synthetic; mimics the module's init scheme).
# -----------------------------------------------------------------------------
def _xavier(key, shape):
    limit = (6.0 / (shape[0] + shape[1])) ** 0.5
    return jax.random.uniform(key, shape, jnp.float32, -limit, limit)


def init_params(key, hidden_dim, num_gru_layers, num_class):
    keys = iter(jax.random.split(key, 8 * num_gru_layers + 8))
    gru_layers = []
    for _ in range(num_gru_layers):
        E = hidden_dim
        gru_layers.append(dict(
            wir=_xavier(next(keys), (E, hidden_dim)),
            wiz=_xavier(next(keys), (E, hidden_dim)),
            win=_xavier(next(keys), (E, hidden_dim)),
            whr=_xavier(next(keys), (hidden_dim, hidden_dim)),
            whz=_xavier(next(keys), (hidden_dim, hidden_dim)),
            whn=_xavier(next(keys), (hidden_dim, hidden_dim)),
            # bias_ih filled with 1, bias_hh filled with 0 (as in the module)
            br=jnp.ones((1, hidden_dim), jnp.float32),    # b_ir + b_hr
            bz=jnp.ones((1, hidden_dim), jnp.float32),    # b_iz + b_hz
            bin=jnp.ones((1, hidden_dim), jnp.float32),   # b_in
            bhn=jnp.zeros((1, hidden_dim), jnp.float32),  # b_hn
        ))
    params = dict(
        gru_layers=gru_layers,
        wsup=_xavier(next(keys), (hidden_dim, hidden_dim)),
        bsup=jnp.zeros((1, hidden_dim), jnp.float32),
        w1=_xavier(next(keys), (hidden_dim, hidden_dim)),
        b1=0.01 * jax.random.normal(next(keys), (1, hidden_dim), jnp.float32),
        w2=_xavier(next(keys), (hidden_dim, num_class)),
        b2=0.01 * jax.random.normal(next(keys), (1, num_class), jnp.float32),
    )
    return params


# -----------------------------------------------------------------------------
# Pure-JAX reference (unfused, per-gate weights) for verification.
# -----------------------------------------------------------------------------
def reference(H, T, params, padding_value):
    x = jnp.transpose(H, (1, 0, 2)).astype(jnp.float32)  # (S, B, E)
    S, B, _ = x.shape
    for lp in params["gru_layers"]:
        Hd = lp["whr"].shape[0]

        def step(h, x_t, lp=lp):
            r = jax.nn.sigmoid(x_t @ lp["wir"] + h @ lp["whr"] + lp["br"])
            z = jax.nn.sigmoid(x_t @ lp["wiz"] + h @ lp["whz"] + lp["bz"])
            n = jnp.tanh(x_t @ lp["win"] + lp["bin"] + r * (h @ lp["whn"] + lp["bhn"]))
            h_new = (1.0 - z) * n + z * h
            return h_new, h_new

        _, x = lax.scan(step, jnp.zeros((B, Hd), jnp.float32), x)
    mask = (lax.broadcasted_iota(jnp.int32, (S, B), 0) < T[None, :].astype(jnp.int32))
    ho = jnp.where(mask[:, :, None], x, padding_value)
    hhat = ho @ params["wsup"] + params["bsup"]
    x1 = jax.nn.relu(hhat @ params["w1"] + params["b1"])
    x2 = x1 @ params["w2"] + params["b2"]
    return jnp.mean(x2, axis=0)


if __name__ == "__main__":
    # args: hidden_dim = hidden_size = 32, num_layers = 2 (-> 1 GRU layer),
    #       max_seq_len = 8, padding_value = -2.0, num_class = 8, add_history = 0
    B, S, HID, NUM_CLASS = 2, 8, 32, 8
    PADDING_VALUE = -2.0
    NUM_GRU_LAYERS = 1  # args.num_layers - 1

    key = jax.random.PRNGKey(0)
    k_param, k_h = jax.random.split(key)
    params = init_params(k_param, HID, NUM_GRU_LAYERS, NUM_CLASS)

    H_in = jax.random.normal(k_h, (B, S, HID), jnp.float32)
    T_in = jnp.array([S, 5], jnp.int32)  # per-sequence valid lengths

    out = condition_classification_rnn(H_in, T_in, params, PADDING_VALUE)
    out = jax.block_until_ready(out)

    ref = reference(H_in, T_in, params, PADDING_VALUE)
    assert out.shape == (B, NUM_CLASS)
    # 2e-3 tolerance: kernel fuses wsup@w1 host-side and applies the time-mean
    # before layer2 (same math, slightly different f32 rounding order).
    assert jnp.allclose(out, ref, atol=2e-3, rtol=2e-3), (out, ref)
    print("KERNEL_OK")
</pallas_src>

<mosaic_0001>
module attributes {stable_mosaic.version = 11 : i64} {
  func.func @fused_forward_kernel(%arg0: memref<16x32xf32, #tpu.memory_space<vmem>>, %arg1: memref<16x1xf32, #tpu.memory_space<vmem>>, %arg2: memref<2x16xf32, #tpu.memory_space<vmem>>, %arg3: memref<32x32xf32, #tpu.memory_space<vmem>>, %arg4: memref<32x32xf32, #tpu.memory_space<vmem>>, %arg5: memref<32x32xf32, #tpu.memory_space<vmem>>, %arg6: memref<32x32xf32, #tpu.memory_space<vmem>>, %arg7: memref<32x32xf32, #tpu.memory_space<vmem>>, %arg8: memref<32x32xf32, #tpu.memory_space<vmem>>, %arg9: memref<1x32xf32, #tpu.memory_space<vmem>>, %arg10: memref<1x32xf32, #tpu.memory_space<vmem>>, %arg11: memref<1x32xf32, #tpu.memory_space<vmem>>, %arg12: memref<1x32xf32, #tpu.memory_space<vmem>>, %arg13: memref<32x32xf32, #tpu.memory_space<vmem>>, %arg14: memref<1x32xf32, #tpu.memory_space<vmem>>, %arg15: memref<32x8xf32, #tpu.memory_space<vmem>>, %arg16: memref<1x8xf32, #tpu.memory_space<vmem>>, %arg17: memref<2x8xf32, #tpu.memory_space<vmem>>, %arg18: memref<16x32xf32, #tpu.memory_space<vmem>>, %arg19: memref<16x32xf32, #tpu.memory_space<vmem>>, %arg20: memref<16x32xf32, #tpu.memory_space<vmem>>, %arg21: memref<16x32xf32, #tpu.memory_space<vmem>>) attributes {dimension_semantics = [], scalar_prefetch = 0 : i64, scratch_operands = 4 : i64, tpu.core_type = #tpu.core_type<tc>} {
    %c0 = arith.constant 0 : index
    %c0_0 = arith.constant 0 : index
    %0 = vector.load %arg0[%c0, %c0_0] : memref<16x32xf32, #tpu.memory_space<vmem>>, vector<16x32xf32>
    %c0_1 = arith.constant 0 : index
    %c0_2 = arith.constant 0 : index
    %1 = vector.load %arg3[%c0_1, %c0_2] : memref<32x32xf32, #tpu.memory_space<vmem>>, vector<32x32xf32>
    %cst = arith.constant dense<0.000000e+00> : vector<16x32xf32>
    %2 = tpu.matmul %0, %1, %cst {dimension_numbers = #tpu.dot_dimension_numbers<[1], [0], [0], [1], [0, 0, 1, 1], [], []>} : vector<16x32xf32>, vector<32x32xf32>, vector<16x32xf32> -> vector<16x32xf32>
    %c0_3 = arith.constant 0 : index
    %c0_4 = arith.constant 0 : index
    %3 = vector.load %arg9[%c0_3, %c0_4] : memref<1x32xf32, #tpu.memory_space<vmem>>, vector<1x32xf32>
    %4 = vector.broadcast %3 : vector<1x32xf32> to vector<16x32xf32>
    %5 = arith.addf %2, %4 : vector<16x32xf32>
    %c0_5 = arith.constant 0 : index
    %c0_6 = arith.constant 0 : index
    %6 = vector.load %arg19[%c0_5, %c0_6] : memref<16x32xf32, #tpu.memory_space<vmem>>, vector<16x32xf32>
    tpu.vector_store %arg19[%c0_5, %c0_6], %5 {strides = array<i32>} : memref<16x32xf32, #tpu.memory_space<vmem>>, vector<16x32xf32>,
    %c0_7 = arith.constant 0 : index
    %c0_8 = arith.constant 0 : index
    %7 = vector.load %arg4[%c0_7, %c0_8] : memref<32x32xf32, #tpu.memory_space<vmem>>, vector<32x32xf32>
    %cst_9 = arith.constant dense<0.000000e+00> : vector<16x32xf32>
    %8 = tpu.matmul %0, %7, %cst_9 {dimension_numbers = #tpu.dot_dimension_numbers<[1], [0], [0], [1], [0, 0, 1, 1], [], []>} : vector<16x32xf32>, vector<32x32xf32>, vector<16x32xf32> -> vector<16x32xf32>
    %c0_10 = arith.constant 0 : index
    %c0_11 = arith.constant 0 : index
    %9 = vector.load %arg10[%c0_10, %c0_11] : memref<1x32xf32, #tpu.memory_space<vmem>>, vector<1x32xf32>
    %10 = vector.broadcast %9 : vector<1x32xf32> to vector<16x32xf32>
    %11 = arith.addf %8, %10 : vector<16x32xf32>
    %c0_12 = arith.constant 0 : index
    %c0_13 = arith.constant 0 : index
    %12 = vector.load %arg20[%c0_12, %c0_13] : memref<16x32xf32, #tpu.memory_space<vmem>>, vector<16x32xf32>
    tpu.vector_store %arg20[%c0_12, %c0_13], %11 {strides = array<i32>} : memref<16x32xf32, #tpu.memory_space<vmem>>, vector<16x32xf32>,
    %c0_14 = arith.constant 0 : index
    %c0_15 = arith.constant 0 : index
    %13 = vector.load %arg5[%c0_14, %c0_15] : memref<32x32xf32, #tpu.memory_space<vmem>>, vector<32x32xf32>
    %cst_16 = arith.constant dense<0.000000e+00> : vector<16x32xf32>
    %14 = tpu.matmul %0, %13, %cst_16 {dimension_numbers = #tpu.dot_dimension_numbers<[1], [0], [0], [1], [0, 0, 1, 1], [], []>} : vector<16x32xf32>, vector<32x32xf32>, vector<16x32xf32> -> vector<16x32xf32>
    %c0_17 = arith.constant 0 : index
    %c0_18 = arith.constant 0 : index
    %15 = vector.load %arg11[%c0_17, %c0_18] : memref<1x32xf32, #tpu.memory_space<vmem>>, vector<1x32xf32>
    %16 = vector.broadcast %15 : vector<1x32xf32> to vector<16x32xf32>
    %17 = arith.addf %14, %16 : vector<16x32xf32>
    %c0_19 = arith.constant 0 : index
    %c0_20 = arith.constant 0 : index
    %18 = vector.load %arg21[%c0_19, %c0_20] : memref<16x32xf32, #tpu.memory_space<vmem>>, vector<16x32xf32>
    tpu.vector_store %arg21[%c0_19, %c0_20], %17 {strides = array<i32>} : memref<16x32xf32, #tpu.memory_space<vmem>>, vector<16x32xf32>,
    %c0_21 = arith.constant 0 : index
    %c0_22 = arith.constant 0 : index
    %19 = vector.load %arg6[%c0_21, %c0_22] : memref<32x32xf32, #tpu.memory_space<vmem>>, vector<32x32xf32>
    %c0_23 = arith.constant 0 : index
    %c0_24 = arith.constant 0 : index
    %20 = vector.load %arg7[%c0_23, %c0_24] : memref<32x32xf32, #tpu.memory_space<vmem>>, vector<32x32xf32>
    %c0_25 = arith.constant 0 : index
    %c0_26 = arith.constant 0 : index
    %21 = vector.load %arg8[%c0_25, %c0_26] : memref<32x32xf32, #tpu.memory_space<vmem>>, vector<32x32xf32>
    %c0_27 = arith.constant 0 : index
    %c0_28 = arith.constant 0 : index
    %22 = vector.load %arg12[%c0_27, %c0_28] : memref<1x32xf32, #tpu.memory_space<vmem>>, vector<1x32xf32>
    %23 = vector.shape_cast %22 : vector<1x32xf32> to vector<1x32xf32>
    %24 = vector.broadcast %23 : vector<1x32xf32> to vector<2x32xf32>
    %cst_29 = arith.constant 0.000000e+00 : f32
    %25 = vector.broadcast %cst_29 : f32 to vector<2x32xf32>
    %c0_i32 = arith.constant 0 : i32
    %c2_i32 = arith.constant 2 : i32
    %26 = arith.muli %c0_i32, %c2_i32 : i32
    %27 = tpu.assume_multiple %26, 2 : i32
    %cst_30 = arith.constant dense<0.000000e+00> : vector<2x32xf32>
    %28 = tpu.matmul %25, %19, %cst_30 {dimension_numbers = #tpu.dot_dimension_numbers<[1], [0], [0], [1], [0, 0, 1, 1], [], []>} : vector<2x32xf32>, vector<32x32xf32>, vector<2x32xf32> -> vector<2x32xf32>
    %cst_31 = arith.constant dense<0.000000e+00> : vector<2x32xf32>
    %29 = tpu.matmul %25, %20, %cst_31 {dimension_numbers = #tpu.dot_dimension_numbers<[1], [0], [0], [1], [0, 0, 1, 1], [], []>} : vector<2x32xf32>, vector<32x32xf32>, vector<2x32xf32> -> vector<2x32xf32>
    %cst_32 = arith.constant dense<0.000000e+00> : vector<2x32xf32>
    %30 = tpu.matmul %25, %21, %cst_32 {dimension_numbers = #tpu.dot_dimension_numbers<[1], [0], [0], [1], [0, 0, 1, 1], [], []>} : vector<2x32xf32>, vector<32x32xf32>, vector<2x32xf32> -> vector<2x32xf32>
    %31 = arith.index_cast %27 : i32 to index
    %c0_33 = arith.constant 0 : index
    %32 = vector.load %arg19[%31, %c0_33] : memref<16x32xf32, #tpu.memory_space<vmem>>, vector<2x32xf32>
    %33 = arith.addf %32, %28 : vector<2x32xf32>
    %34 = arith.negf %33 : vector<2x32xf32>
    %35 = math.exp %34 : vector<2x32xf32>
    %cst_34 = arith.constant 1.000000e+00 : f32
    %36 = vector.broadcast %cst_34 : f32 to vector<2x32xf32>
    %37 = arith.addf %36, %35 : vector<2x32xf32>
    %38 = arith.divf %36, %37 : vector<2x32xf32>
    %39 = arith.index_cast %27 : i32 to index
    %c0_35 = arith.constant 0 : index
    %40 = vector.load %arg20[%39, %c0_35] : memref<16x32xf32, #tpu.memory_space<vmem>>, vector<2x32xf32>
    %41 = arith.addf %40, %29 : vector<2x32xf32>
    %42 = arith.negf %41 : vector<2x32xf32>
    %43 = math.exp %42 : vector<2x32xf32>
    %cst_36 = arith.constant 1.000000e+00 : f32
    %44 = vector.broadcast %cst_36 : f32 to vector<2x32xf32>
    %45 = arith.addf %44, %43 : vector<2x32xf32>
    %46 = arith.divf %44, %45 : vector<2x32xf32>
    %47 = arith.index_cast %27 : i32 to index
    %c0_37 = arith.constant 0 : index
    %48 = vector.load %arg21[%47, %c0_37] : memref<16x32xf32, #tpu.memory_space<vmem>>, vector<2x32xf32>
    %49 = arith.addf %30, %24 : vector<2x32xf32>
    %50 = arith.mulf %38, %49 : vector<2x32xf32>
    %51 = arith.addf %48, %50 : vector<2x32xf32>
    %52 = math.tanh %51 : vector<2x32xf32>
    %cst_38 = arith.constant 1.000000e+00 : f32
    %53 = vector.broadcast %cst_38 : f32 to vector<2x32xf32>
    %54 = arith.subf %53, %46 : vector<2x32xf32>
    %55 = arith.mulf %54, %52 : vector<2x32xf32>
    %56 = arith.mulf %46, %25 : vector<2x32xf32>
    %57 = arith.addf %55, %56 : vector<2x32xf32>
    %58 = arith.index_cast %27 : i32 to index
    %c0_39 = arith.constant 0 : index
    %59 = vector.load %arg18[%58, %c0_39] : memref<16x32xf32, #tpu.memory_space<vmem>>, vector<2x32xf32>
    tpu.vector_store %arg18[%58, %c0_39], %57 {strides = array<i32>} : memref<16x32xf32, #tpu.memory_space<vmem>>, vector<2x32xf32>,
    %c1_i32 = arith.constant 1 : i32
    %c2_i32_40 = arith.constant 2 : i32
    %60 = arith.muli %c1_i32, %c2_i32_40 : i32
    %61 = tpu.assume_multiple %60, 2 : i32
    %cst_41 = arith.constant dense<0.000000e+00> : vector<2x32xf32>
    %62 = tpu.matmul %57, %19, %cst_41 {dimension_numbers = #tpu.dot_dimension_numbers<[1], [0], [0], [1], [0, 0, 1, 1], [], []>} : vector<2x32xf32>, vector<32x32xf32>, vector<2x32xf32> -> vector<2x32xf32>
    %cst_42 = arith.constant dense<0.000000e+00> : vector<2x32xf32>
    %63 = tpu.matmul %57, %20, %cst_42 {dimension_numbers = #tpu.dot_dimension_numbers<[1], [0], [0], [1], [0, 0, 1, 1], [], []>} : vector<2x32xf32>, vector<32x32xf32>, vector<2x32xf32> -> vector<2x32xf32>
    %cst_43 = arith.constant dense<0.000000e+00> : vector<2x32xf32>
    %64 = tpu.matmul %57, %21, %cst_43 {dimension_numbers = #tpu.dot_dimension_numbers<[1], [0], [0], [1], [0, 0, 1, 1], [], []>} : vector<2x32xf32>, vector<32x32xf32>, vector<2x32xf32> -> vector<2x32xf32>
    %65 = arith.index_cast %61 : i32 to index
    %c0_44 = arith.constant 0 : index
    %66 = vector.load %arg19[%65, %c0_44] : memref<16x32xf32, #tpu.memory_space<vmem>>, vector<2x32xf32>
    %67 = arith.addf %66, %62 : vector<2x32xf32>
    %68 = arith.negf %67 : vector<2x32xf32>
    %69 = math.exp %68 : vector<2x32xf32>
    %cst_45 = arith.constant 1.000000e+00 : f32
    %70 = vector.broadcast %cst_45 : f32 to vector<2x32xf32>
    %71 = arith.addf %70, %69 : vector<2x32xf32>
    %72 = arith.divf %70, %71 : vector<2x32xf32>
    %73 = arith.index_cast %61 : i32 to index
    %c0_46 = arith.constant 0 : index
    %74 = vector.load %arg20[%73, %c0_46] : memref<16x32xf32, #tpu.memory_space<vmem>>, vector<2x32xf32>
    %75 = arith.addf %74, %63 : vector<2x32xf32>
    %76 = arith.negf %75 : vector<2x32xf32>
    %77 = math.exp %76 : vector<2x32xf32>
    %cst_47 = arith.constant 1.000000e+00 : f32
    %78 = vector.broadcast %cst_47 : f32 to vector<2x32xf32>
    %79 = arith.addf %78, %77 : vector<2x32xf32>
    %80 = arith.divf %78, %79 : vector<2x32xf32>
    %81 = arith.index_cast %61 : i32 to index
    %c0_48 = arith.constant 0 : index
    %82 = vector.load %arg21[%81, %c0_48] : memref<16x32xf32, #tpu.memory_space<vmem>>, vector<2x32xf32>
    %83 = arith.addf %64, %24 : vector<2x32xf32>
    %84 = arith.mulf %72, %83 : vector<2x32xf32>
    %85 = arith.addf %82, %84 : vector<2x32xf32>
    %86 = math.tanh %85 : vector<2x32xf32>
    %cst_49 = arith.constant 1.000000e+00 : f32
    %87 = vector.broadcast %cst_49 : f32 to vector<2x32xf32>
    %88 = arith.subf %87, %80 : vector<2x32xf32>
    %89 = arith.mulf %88, %86 : vector<2x32xf32>
    %90 = arith.mulf %80, %57 : vector<2x32xf32>
    %91 = arith.addf %89, %90 : vector<2x32xf32>
    %92 = arith.index_cast %61 : i32 to index
    %c0_50 = arith.constant 0 : index
    %93 = vector.load %arg18[%92, %c0_50] : memref<16x32xf32, #tpu.memory_space<vmem>>, vector<2x32xf32>
    tpu.vector_store %arg18[%92, %c0_50], %91 {strides = array<i32>} : memref<16x32xf32, #tpu.memory_space<vmem>>, vector<2x32xf32>,
    %c2_i32_51 = arith.constant 2 : i32
    %c2_i32_52 = arith.constant 2 : i32
    %94 = arith.muli %c2_i32_51, %c2_i32_52 : i32
    %95 = tpu.assume_multiple %94, 2 : i32
    %cst_53 = arith.constant dense<0.000000e+00> : vector<2x32xf32>
    %96 = tpu.matmul %91, %19, %cst_53 {dimension_numbers = #tpu.dot_dimension_numbers<[1], [0], [0], [1], [0, 0, 1, 1], [], []>} : vector<2x32xf32>, vector<32x32xf32>, vector<2x32xf32> -> vector<2x32xf32>
    %cst_54 = arith.constant dense<0.000000e+00> : vector<2x32xf32>
    %97 = tpu.matmul %91, %20, %cst_54 {dimension_numbers = #tpu.dot_dimension_numbers<[1], [0], [0], [1], [0, 0, 1, 1], [], []>} : vector<2x32xf32>, vector<32x32xf32>, vector<2x32xf32> -> vector<2x32xf32>
    %cst_55 = arith.constant dense<0.000000e+00> : vector<2x32xf32>
    %98 = tpu.matmul %91, %21, %cst_55 {dimension_numbers = #tpu.dot_dimension_numbers<[1], [0], [0], [1], [0, 0, 1, 1], [], []>} : vector<2x32xf32>, vector<32x32xf32>, vector<2x32xf32> -> vector<2x32xf32>
    %99 = arith.index_cast %95 : i32 to index
    %c0_56 = arith.constant 0 : index
    %100 = vector.load %arg19[%99, %c0_56] : memref<16x32xf32, #tpu.memory_space<vmem>>, vector<2x32xf32>
    %101 = arith.addf %100, %96 : vector<2x32xf32>
    %102 = arith.negf %101 : vector<2x32xf32>
    %103 = math.exp %102 : vector<2x32xf32>
    %cst_57 = arith.constant 1.000000e+00 : f32
    %104 = vector.broadcast %cst_57 : f32 to vector<2x32xf32>
    %105 = arith.addf %104, %103 : vector<2x32xf32>
    %106 = arith.divf %104, %105 : vector<2x32xf32>
    %107 = arith.index_cast %95 : i32 to index
    %c0_58 = arith.constant 0 : index
    %108 = vector.load %arg20[%107, %c0_58] : memref<16x32xf32, #tpu.memory_space<vmem>>, vector<2x32xf32>
    %109 = arith.addf %108, %97 : vector<2x32xf32>
    %110 = arith.negf %109 : vector<2x32xf32>
    %111 = math.exp %110 : vector<2x32xf32>
    %cst_59 = arith.constant 1.000000e+00 : f32
    %112 = vector.broadcast %cst_59 : f32 to vector<2x32xf32>
    %113 = arith.addf %112, %111 : vector<2x32xf32>
    %114 = arith.divf %112, %113 : vector<2x32xf32>
    %115 = arith.index_cast %95 : i32 to index
    %c0_60 = arith.constant 0 : index
    %116 = vector.load %arg21[%115, %c0_60] : memref<16x32xf32, #tpu.memory_space<vmem>>, vector<2x32xf32>
    %117 = arith.addf %98, %24 : vector<2x32xf32>
    %118 = arith.mulf %106, %117 : vector<2x32xf32>
    %119 = arith.addf %116, %118 : vector<2x32xf32>
    %120 = math.tanh %119 : vector<2x32xf32>
    %cst_61 = arith.constant 1.000000e+00 : f32
    %121 = vector.broadcast %cst_61 : f32 to vector<2x32xf32>
    %122 = arith.subf %121, %114 : vector<2x32xf32>
    %123 = arith.mulf %122, %120 : vector<2x32xf32>
    %124 = arith.mulf %114, %91 : vector<2x32xf32>
    %125 = arith.addf %123, %124 : vector<2x32xf32>
    %126 = arith.index_cast %95 : i32 to index
    %c0_62 = arith.constant 0 : index
    %127 = vector.load %arg18[%126, %c0_62] : memref<16x32xf32, #tpu.memory_space<vmem>>, vector<2x32xf32>
    tpu.vector_store %arg18[%126, %c0_62], %125 {strides = array<i32>} : memref<16x32xf32, #tpu.memory_space<vmem>>, vector<2x32xf32>,
    %c3_i32 = arith.constant 3 : i32
    %c2_i32_63 = arith.constant 2 : i32
    %128 = arith.muli %c3_i32, %c2_i32_63 : i32
    %129 = tpu.assume_multiple %128, 2 : i32
    %cst_64 = arith.constant dense<0.000000e+00> : vector<2x32xf32>
    %130 = tpu.matmul %125, %19, %cst_64 {dimension_numbers = #tpu.dot_dimension_numbers<[1], [0], [0], [1], [0, 0, 1, 1], [], []>} : vector<2x32xf32>, vector<32x32xf32>, vector<2x32xf32> -> vector<2x32xf32>
    %cst_65 = arith.constant dense<0.000000e+00> : vector<2x32xf32>
    %131 = tpu.matmul %125, %20, %cst_65 {dimension_numbers = #tpu.dot_dimension_numbers<[1], [0], [0], [1], [0, 0, 1, 1], [], []>} : vector<2x32xf32>, vector<32x32xf32>, vector<2x32xf32> -> vector<2x32xf32>
    %cst_66 = arith.constant dense<0.000000e+00> : vector<2x32xf32>
    %132 = tpu.matmul %125, %21, %cst_66 {dimension_numbers = #tpu.dot_dimension_numbers<[1], [0], [0], [1], [0, 0, 1, 1], [], []>} : vector<2x32xf32>, vector<32x32xf32>, vector<2x32xf32> -> vector<2x32xf32>
    %133 = arith.index_cast %129 : i32 to index
    %c0_67 = arith.constant 0 : index
    %134 = vector.load %arg19[%133, %c0_67] : memref<16x32xf32, #tpu.memory_space<vmem>>, vector<2x32xf32>
    %135 = arith.addf %134, %130 : vector<2x32xf32>
    %136 = arith.negf %135 : vector<2x32xf32>
    %137 = math.exp %136 : vector<2x32xf32>
    %cst_68 = arith.constant 1.000000e+00 : f32
    %138 = vector.broadcast %cst_68 : f32 to vector<2x32xf32>
    %139 = arith.addf %138, %137 : vector<2x32xf32>
    %140 = arith.divf %138, %139 : vector<2x32xf32>
    %141 = arith.index_cast %129 : i32 to index
    %c0_69 = arith.constant 0 : index
    %142 = vector.load %arg20[%141, %c0_69] : memref<16x32xf32, #tpu.memory_space<vmem>>, vector<2x32xf32>
    %143 = arith.addf %142, %131 : vector<2x32xf32>
    %144 = arith.negf %143 : vector<2x32xf32>
    %145 = math.exp %144 : vector<2x32xf32>
    %cst_70 = arith.constant 1.000000e+00 : f32
    %146 = vector.broadcast %cst_70 : f32 to vector<2x32xf32>
    %147 = arith.addf %146, %145 : vector<2x32xf32>
    %148 = arith.divf %146, %147 : vector<2x32xf32>
    %149 = arith.index_cast %129 : i32 to index
    %c0_71 = arith.constant 0 : index
    %150 = vector.load %arg21[%149, %c0_71] : memref<16x32xf32, #tpu.memory_space<vmem>>, vector<2x32xf32>
    %151 = arith.addf %132, %24 : vector<2x32xf32>
    %152 = arith.mulf %140, %151 : vector<2x32xf32>
    %153 = arith.addf %150, %152 : vector<2x32xf32>
    %154 = math.tanh %153 : vector<2x32xf32>
    %cst_72 = arith.constant 1.000000e+00 : f32
    %155 = vector.broadcast %cst_72 : f32 to vector<2x32xf32>
    %156 = arith.subf %155, %148 : vector<2x32xf32>
    %157 = arith.mulf %156, %154 : vector<2x32xf32>
    %158 = arith.mulf %148, %125 : vector<2x32xf32>
    %159 = arith.addf %157, %158 : vector<2x32xf32>
    %160 = arith.index_cast %129 : i32 to index
    %c0_73 = arith.constant 0 : index
    %161 = vector.load %arg18[%160, %c0_73] : memref<16x32xf32, #tpu.memory_space<vmem>>, vector<2x32xf32>
    tpu.vector_store %arg18[%160, %c0_73], %159 {strides = array<i32>} : memref<16x32xf32, #tpu.memory_space<vmem>>, vector<2x32xf32>,
    %c4_i32 = arith.constant 4 : i32
    %c2_i32_74 = arith.constant 2 : i32
    %162 = arith.muli %c4_i32, %c2_i32_74 : i32
    %163 = tpu.assume_multiple %162, 2 : i32
    %cst_75 = arith.constant dense<0.000000e+00> : vector<2x32xf32>
    %164 = tpu.matmul %159, %19, %cst_75 {dimension_numbers = #tpu.dot_dimension_numbers<[1], [0], [0], [1], [0, 0, 1, 1], [], []>} : vector<2x32xf32>, vector<32x32xf32>, vector<2x32xf32> -> vector<2x32xf32>
    %cst_76 = arith.constant dense<0.000000e+00> : vector<2x32xf32>
    %165 = tpu.matmul %159, %20, %cst_76 {dimension_numbers = #tpu.dot_dimension_numbers<[1], [0], [0], [1], [0, 0, 1, 1], [], []>} : vector<2x32xf32>, vector<32x32xf32>, vector<2x32xf32> -> vector<2x32xf32>
    %cst_77 = arith.constant dense<0.000000e+00> : vector<2x32xf32>
    %166 = tpu.matmul %159, %21, %cst_77 {dimension_numbers = #tpu.dot_dimension_numbers<[1], [0], [0], [1], [0, 0, 1, 1], [], []>} : vector<2x32xf32>, vector<32x32xf32>, vector<2x32xf32> -> vector<2x32xf32>
    %167 = arith.index_cast %163 : i32 to index
    %c0_78 = arith.constant 0 : index
    %168 = vector.load %arg19[%167, %c0_78] : memref<16x32xf32, #tpu.memory_space<vmem>>, vector<2x32xf32>
    %169 = arith.addf %168, %164 : vector<2x32xf32>
    %170 = arith.negf %169 : vector<2x32xf32>
    %171 = math.exp %170 : vector<2x32xf32>
    %cst_79 = arith.constant 1.000000e+00 : f32
    %172 = vector.broadcast %cst_79 : f32 to vector<2x32xf32>
    %173 = arith.addf %172, %171 : vector<2x32xf32>
    %174 = arith.divf %172, %173 : vector<2x32xf32>
    %175 = arith.index_cast %163 : i32 to index
    %c0_80 = arith.constant 0 : index
    %176 = vector.load %arg20[%175, %c0_80] : memref<16x32xf32, #tpu.memory_space<vmem>>, vector<2x32xf32>
    %177 = arith.addf %176, %165 : vector<2x32xf32>
    %178 = arith.negf %177 : vector<2x32xf32>
    %179 = math.exp %178 : vector<2x32xf32>
    %cst_81 = arith.constant 1.000000e+00 : f32
    %180 = vector.broadcast %cst_81 : f32 to vector<2x32xf32>
    %181 = arith.addf %180, %179 : vector<2x32xf32>
    %182 = arith.divf %180, %181 : vector<2x32xf32>
    %183 = arith.index_cast %163 : i32 to index
    %c0_82 = arith.constant 0 : index
    %184 = vector.load %arg21[%183, %c0_82] : memref<16x32xf32, #tpu.memory_space<vmem>>, vector<2x32xf32>
    %185 = arith.addf %166, %24 : vector<2x32xf32>
    %186 = arith.mulf %174, %185 : vector<2x32xf32>
    %187 = arith.addf %184, %186 : vector<2x32xf32>
    %188 = math.tanh %187 : vector<2x32xf32>
    %cst_83 = arith.constant 1.000000e+00 : f32
    %189 = vector.broadcast %cst_83 : f32 to vector<2x32xf32>
    %190 = arith.subf %189, %182 : vector<2x32xf32>
    %191 = arith.mulf %190, %188 : vector<2x32xf32>
    %192 = arith.mulf %182, %159 : vector<2x32xf32>
    %193 = arith.addf %191, %192 : vector<2x32xf32>
    %194 = arith.index_cast %163 : i32 to index
    %c0_84 = arith.constant 0 : index
    %195 = vector.load %arg18[%194, %c0_84] : memref<16x32xf32, #tpu.memory_space<vmem>>, vector<2x32xf32>
    tpu.vector_store %arg18[%194, %c0_84], %193 {strides = array<i32>} : memref<16x32xf32, #tpu.memory_space<vmem>>, vector<2x32xf32>,
    %c5_i32 = arith.constant 5 : i32
    %c2_i32_85 = arith.constant 2 : i32
    %196 = arith.muli %c5_i32, %c2_i32_85 : i32
    %197 = tpu.assume_multiple %196, 2 : i32
    %cst_86 = arith.constant dense<0.000000e+00> : vector<2x32xf32>
    %198 = tpu.matmul %193, %19, %cst_86 {dimension_numbers = #tpu.dot_dimension_numbers<[1], [0], [0], [1], [0, 0, 1, 1], [], []>} : vector<2x32xf32>, vector<32x32xf32>, vector<2x32xf32> -> vector<2x32xf32>
    %cst_87 = arith.constant dense<0.000000e+00> : vector<2x32xf32>
    %199 = tpu.matmul %193, %20, %cst_87 {dimension_numbers = #tpu.dot_dimension_numbers<[1], [0], [0], [1], [0, 0, 1, 1], [], []>} : vector<2x32xf32>, vector<32x32xf32>, vector<2x32xf32> -> vector<2x32xf32>
    %cst_88 = arith.constant dense<0.000000e+00> : vector<2x32xf32>
    %200 = tpu.matmul %193, %21, %cst_88 {dimension_numbers = #tpu.dot_dimension_numbers<[1], [0], [0], [1], [0, 0, 1, 1], [], []>} : vector<2x32xf32>, vector<32x32xf32>, vector<2x32xf32> -> vector<2x32xf32>
    %201 = arith.index_cast %197 : i32 to index
    %c0_89 = arith.constant 0 : index
    %202 = vector.load %arg19[%201, %c0_89] : memref<16x32xf32, #tpu.memory_space<vmem>>, vector<2x32xf32>
    %203 = arith.addf %202, %198 : vector<2x32xf32>
    %204 = arith.negf %203 : vector<2x32xf32>
    %205 = math.exp %204 : vector<2x32xf32>
    %cst_90 = arith.constant 1.000000e+00 : f32
    %206 = vector.broadcast %cst_90 : f32 to vector<2x32xf32>
    %207 = arith.addf %206, %205 : vector<2x32xf32>
    %208 = arith.divf %206, %207 : vector<2x32xf32>
    %209 = arith.index_cast %197 : i32 to index
    %c0_91 = arith.constant 0 : index
    %210 = vector.load %arg20[%209, %c0_91] : memref<16x32xf32, #tpu.memory_space<vmem>>, vector<2x32xf32>
    %211 = arith.addf %210, %199 : vector<2x32xf32>
    %212 = arith.negf %211 : vector<2x32xf32>
    %213 = math.exp %212 : vector<2x32xf32>
    %cst_92 = arith.constant 1.000000e+00 : f32
    %214 = vector.broadcast %cst_92 : f32 to vector<2x32xf32>
    %215 = arith.addf %214, %213 : vector<2x32xf32>
    %216 = arith.divf %214, %215 : vector<2x32xf32>
    %217 = arith.index_cast %197 : i32 to index
    %c0_93 = arith.constant 0 : index
    %218 = vector.load %arg21[%217, %c0_93] : memref<16x32xf32, #tpu.memory_space<vmem>>, vector<2x32xf32>
    %219 = arith.addf %200, %24 : vector<2x32xf32>
    %220 = arith.mulf %208, %219 : vector<2x32xf32>
    %221 = arith.addf %218, %220 : vector<2x32xf32>
    %222 = math.tanh %221 : vector<2x32xf32>
    %cst_94 = arith.constant 1.000000e+00 : f32
    %223 = vector.broadcast %cst_94 : f32 to vector<2x32xf32>
    %224 = arith.subf %223, %216 : vector<2x32xf32>
    %225 = arith.mulf %224, %222 : vector<2x32xf32>
    %226 = arith.mulf %216, %193 : vector<2x32xf32>
    %227 = arith.addf %225, %226 : vector<2x32xf32>
    %228 = arith.index_cast %197 : i32 to index
    %c0_95 = arith.constant 0 : index
    %229 = vector.load %arg18[%228, %c0_95] : memref<16x32xf32, #tpu.memory_space<vmem>>, vector<2x32xf32>
    tpu.vector_store %arg18[%228, %c0_95], %227 {strides = array<i32>} : memref<16x32xf32, #tpu.memory_space<vmem>>, vector<2x32xf32>,
    %c6_i32 = arith.constant 6 : i32
    %c2_i32_96 = arith.constant 2 : i32
    %230 = arith.muli %c6_i32, %c2_i32_96 : i32
    %231 = tpu.assume_multiple %230, 2 : i32
    %cst_97 = arith.constant dense<0.000000e+00> : vector<2x32xf32>
    %232 = tpu.matmul %227, %19, %cst_97 {dimension_numbers = #tpu.dot_dimension_numbers<[1], [0], [0], [1], [0, 0, 1, 1], [], []>} : vector<2x32xf32>, vector<32x32xf32>, vector<2x32xf32> -> vector<2x32xf32>
    %cst_98 = arith.constant dense<0.000000e+00> : vector<2x32xf32>
    %233 = tpu.matmul %227, %20, %cst_98 {dimension_numbers = #tpu.dot_dimension_numbers<[1], [0], [0], [1], [0, 0, 1, 1], [], []>} : vector<2x32xf32>, vector<32x32xf32>, vector<2x32xf32> -> vector<2x32xf32>
    %cst_99 = arith.constant dense<0.000000e+00> : vector<2x32xf32>
    %234 = tpu.matmul %227, %21, %cst_99 {dimension_numbers = #tpu.dot_dimension_numbers<[1], [0], [0], [1], [0, 0, 1, 1], [], []>} : vector<2x32xf32>, vector<32x32xf32>, vector<2x32xf32> -> vector<2x32xf32>
    %235 = arith.index_cast %231 : i32 to index
    %c0_100 = arith.constant 0 : index
    %236 = vector.load %arg19[%235, %c0_100] : memref<16x32xf32, #tpu.memory_space<vmem>>, vector<2x32xf32>
    %237 = arith.addf %236, %232 : vector<2x32xf32>
    %238 = arith.negf %237 : vector<2x32xf32>
    %239 = math.exp %238 : vector<2x32xf32>
    %cst_101 = arith.constant 1.000000e+00 : f32
    %240 = vector.broadcast %cst_101 : f32 to vector<2x32xf32>
    %241 = arith.addf %240, %239 : vector<2x32xf32>
    %242 = arith.divf %240, %241 : vector<2x32xf32>
    %243 = arith.index_cast %231 : i32 to index
    %c0_102 = arith.constant 0 : index
    %244 = vector.load %arg20[%243, %c0_102] : memref<16x32xf32, #tpu.memory_space<vmem>>, vector<2x32xf32>
    %245 = arith.addf %244, %233 : vector<2x32xf32>
    %246 = arith.negf %245 : vector<2x32xf32>
    %247 = math.exp %246 : vector<2x32xf32>
    %cst_103 = arith.constant 1.000000e+00 : f32
    %248 = vector.broadcast %cst_103 : f32 to vector<2x32xf32>
    %249 = arith.addf %248, %247 : vector<2x32xf32>
    %250 = arith.divf %248, %249 : vector<2x32xf32>
    %251 = arith.index_cast %231 : i32 to index
    %c0_104 = arith.constant 0 : index
    %252 = vector.load %arg21[%251, %c0_104] : memref<16x32xf32, #tpu.memory_space<vmem>>, vector<2x32xf32>
    %253 = arith.addf %234, %24 : vector<2x32xf32>
    %254 = arith.mulf %242, %253 : vector<2x32xf32>
    %255 = arith.addf %252, %254 : vector<2x32xf32>
    %256 = math.tanh %255 : vector<2x32xf32>
    %cst_105 = arith.constant 1.000000e+00 : f32
    %257 = vector.broadcast %cst_105 : f32 to vector<2x32xf32>
    %258 = arith.subf %257, %250 : vector<2x32xf32>
    %259 = arith.mulf %258, %256 : vector<2x32xf32>
    %260 = arith.mulf %250, %227 : vector<2x32xf32>
    %261 = arith.addf %259, %260 : vector<2x32xf32>
    %262 = arith.index_cast %231 : i32 to index
    %c0_106 = arith.constant 0 : index
    %263 = vector.load %arg18[%262, %c0_106] : memref<16x32xf32, #tpu.memory_space<vmem>>, vector<2x32xf32>
    tpu.vector_store %arg18[%262, %c0_106], %261 {strides = array<i32>} : memref<16x32xf32, #tpu.memory_space<vmem>>, vector<2x32xf32>,
    %c7_i32 = arith.constant 7 : i32
    %c2_i32_107 = arith.constant 2 : i32
    %264 = arith.muli %c7_i32, %c2_i32_107 : i32
    %265 = tpu.assume_multiple %264, 2 : i32
    %cst_108 = arith.constant dense<0.000000e+00> : vector<2x32xf32>
    %266 = tpu.matmul %261, %19, %cst_108 {dimension_numbers = #tpu.dot_dimension_numbers<[1], [0], [0], [1], [0, 0, 1, 1], [], []>} : vector<2x32xf32>, vector<32x32xf32>, vector<2x32xf32> -> vector<2x32xf32>
    %cst_109 = arith.constant dense<0.000000e+00> : vector<2x32xf32>
    %267 = tpu.matmul %261, %20, %cst_109 {dimension_numbers = #tpu.dot_dimension_numbers<[1], [0], [0], [1], [0, 0, 1, 1], [], []>} : vector<2x32xf32>, vector<32x32xf32>, vector<2x32xf32> -> vector<2x32xf32>
    %cst_110 = arith.constant dense<0.000000e+00> : vector<2x32xf32>
    %268 = tpu.matmul %261, %21, %cst_110 {dimension_numbers = #tpu.dot_dimension_numbers<[1], [0], [0], [1], [0, 0, 1, 1], [], []>} : vector<2x32xf32>, vector<32x32xf32>, vector<2x32xf32> -> vector<2x32xf32>
    %269 = arith.index_cast %265 : i32 to index
    %c0_111 = arith.constant 0 : index
    %270 = vector.load %arg19[%269, %c0_111] : memref<16x32xf32, #tpu.memory_space<vmem>>, vector<2x32xf32>
    %271 = arith.addf %270, %266 : vector<2x32xf32>
    %272 = arith.negf %271 : vector<2x32xf32>
    %273 = math.exp %272 : vector<2x32xf32>
    %cst_112 = arith.constant 1.000000e+00 : f32
    %274 = vector.broadcast %cst_112 : f32 to vector<2x32xf32>
    %275 = arith.addf %274, %273 : vector<2x32xf32>
    %276 = arith.divf %274, %275 : vector<2x32xf32>
    %277 = arith.index_cast %265 : i32 to index
    %c0_113 = arith.constant 0 : index
    %278 = vector.load %arg20[%277, %c0_113] : memref<16x32xf32, #tpu.memory_space<vmem>>, vector<2x32xf32>
    %279 = arith.addf %278, %267 : vector<2x32xf32>
    %280 = arith.negf %279 : vector<2x32xf32>
    %281 = math.exp %280 : vector<2x32xf32>
    %cst_114 = arith.constant 1.000000e+00 : f32
    %282 = vector.broadcast %cst_114 : f32 to vector<2x32xf32>
    %283 = arith.addf %282, %281 : vector<2x32xf32>
    %284 = arith.divf %282, %283 : vector<2x32xf32>
    %285 = arith.index_cast %265 : i32 to index
    %c0_115 = arith.constant 0 : index
    %286 = vector.load %arg21[%285, %c0_115] : memref<16x32xf32, #tpu.memory_space<vmem>>, vector<2x32xf32>
    %287 = arith.addf %268, %24 : vector<2x32xf32>
    %288 = arith.mulf %276, %287 : vector<2x32xf32>
    %289 = arith.addf %286, %288 : vector<2x32xf32>
    %290 = math.tanh %289 : vector<2x32xf32>
    %cst_116 = arith.constant 1.000000e+00 : f32
    %291 = vector.broadcast %cst_116 : f32 to vector<2x32xf32>
    %292 = arith.subf %291, %284 : vector<2x32xf32>
    %293 = arith.mulf %292, %290 : vector<2x32xf32>
    %294 = arith.mulf %284, %261 : vector<2x32xf32>
    %295 = arith.addf %293, %294 : vector<2x32xf32>
    %296 = arith.index_cast %265 : i32 to index
    %c0_117 = arith.constant 0 : index
    %297 = vector.load %arg18[%296, %c0_117] : memref<16x32xf32, #tpu.memory_space<vmem>>, vector<2x32xf32>
    tpu.vector_store %arg18[%296, %c0_117], %295 {strides = array<i32>} : memref<16x32xf32, #tpu.memory_space<vmem>>, vector<2x32xf32>,
    %c8_i32 = arith.constant 8 : i32
    %c0_118 = arith.constant 0 : index
    %c0_119 = arith.constant 0 : index
    %298 = vector.load %arg1[%c0_118, %c0_119] : memref<16x1xf32, #tpu.memory_space<vmem>>, vector<16x1xf32>
    %c0_120 = arith.constant 0 : index
    %c0_121 = arith.constant 0 : index
    %299 = vector.load %arg18[%c0_120, %c0_121] : memref<16x32xf32, #tpu.memory_space<vmem>>, vector<16x32xf32>
    %300 = vector.broadcast %298 : vector<16x1xf32> to vector<16x32xf32>
    %301 = arith.mulf %299, %300 : vector<16x32xf32>
    %cst_122 = arith.constant 1.000000e+00 : f32
    %302 = vector.broadcast %cst_122 : f32 to vector<16x1xf32>
    %303 = arith.subf %302, %298 : vector<16x1xf32>
    %cst_123 = arith.constant -2.000000e+00 : f32
    %304 = vector.broadcast %cst_123 : f32 to vector<16x1xf32>
    %305 = arith.mulf %304, %303 : vector<16x1xf32>
    %306 = vector.broadcast %305 : vector<16x1xf32> to vector<16x32xf32>
    %307 = arith.addf %301, %306 : vector<16x32xf32>
    %c0_124 = arith.constant 0 : index
    %c0_125 = arith.constant 0 : index
    %308 = vector.load %arg13[%c0_124, %c0_125] : memref<32x32xf32, #tpu.memory_space<vmem>>, vector<32x32xf32>
    %cst_126 = arith.constant dense<0.000000e+00> : vector<16x32xf32>
    %309 = tpu.matmul %307, %308, %cst_126 {dimension_numbers = #tpu.dot_dimension_numbers<[1], [0], [0], [1], [0, 0, 1, 1], [], []>} : vector<16x32xf32>, vector<32x32xf32>, vector<16x32xf32> -> vector<16x32xf32>
    %c0_127 = arith.constant 0 : index
    %c0_128 = arith.constant 0 : index
    %310 = vector.load %arg14[%c0_127, %c0_128] : memref<1x32xf32, #tpu.memory_space<vmem>>, vector<1x32xf32>
    %311 = vector.broadcast %310 : vector<1x32xf32> to vector<16x32xf32>
    %312 = arith.addf %309, %311 : vector<16x32xf32>
    %cst_129 = arith.constant 0.000000e+00 : f32
    %313 = vector.broadcast %cst_129 : f32 to vector<16x32xf32>
    %314 = arith.maximumf %312, %313 : vector<16x32xf32>
    %c0_130 = arith.constant 0 : index
    %c0_131 = arith.constant 0 : index
    %315 = vector.load %arg2[%c0_130, %c0_131] : memref<2x16xf32, #tpu.memory_space<vmem>>, vector<2x16xf32>
    %cst_132 = arith.constant dense<0.000000e+00> : vector<2x32xf32>
    %316 = tpu.matmul %315, %314, %cst_132 {dimension_numbers = #tpu.dot_dimension_numbers<[1], [0], [0], [1], [0, 0, 1, 1], [], []>} : vector<2x16xf32>, vector<16x32xf32>, vector<2x32xf32> -> vector<2x32xf32>
    %c0_133 = arith.constant 0 : index
    %c0_134 = arith.constant 0 : index
    %317 = vector.load %arg15[%c0_133, %c0_134] : memref<32x8xf32, #tpu.memory_space<vmem>>, vector<32x8xf32>
    %cst_135 = arith.constant dense<0.000000e+00> : vector<2x8xf32>
    %318 = tpu.matmul %316, %317, %cst_135 {dimension_numbers = #tpu.dot_dimension_numbers<[1], [0], [0], [1], [0, 0, 1, 1], [], []>} : vector<2x32xf32>, vector<32x8xf32>, vector<2x8xf32> -> vector<2x8xf32>
    %c0_136 = arith.constant 0 : index
    %c0_137 = arith.constant 0 : index
    %319 = vector.load %arg16[%c0_136, %c0_137] : memref<1x8xf32, #tpu.memory_space<vmem>>, vector<1x8xf32>
    %320 = vector.broadcast %319 : vector<1x8xf32> to vector<2x8xf32>
    %321 = arith.addf %318, %320 : vector<2x8xf32>
    %c0_138 = arith.constant 0 : index
    %c0_139 = arith.constant 0 : index
    %322 = vector.load %arg17[%c0_138, %c0_139] : memref<2x8xf32, #tpu.memory_space<vmem>>, vector<2x8xf32>
    tpu.vector_store %arg17[%c0_138, %c0_139], %321 {strides = array<i32>} : memref<2x8xf32, #tpu.memory_space<vmem>>, vector<2x8xf32>,
    return
  }
}

</mosaic_0001>

<llo_original>
// kernel: condition_classification_rnn.1
$region0: #{condition_classification_rnn.1}
  #allocation0 [shape = 'u32[]', space=smem, size = 0x4, offset = 0x4, fixed_abs, tag = 'smem constant byte address 0x4 - core index']
  #allocation1 [shape = 'u32[144,128]{1,0:T(1,128)}', space=vmem, size = 0x12000, scoped, tag = 'internal scratch']
  #allocation2 [shape = 'f32[16,32]{1,0:T(8,128)}', space=vmem, size = 0x2000, scoped, tag = 'scratch operand']
  #allocation3 [shape = 'f32[16,32]{1,0:T(8,128)}', space=vmem, size = 0x2000, scoped, tag = 'scratch operand']
  #allocation4 [shape = 'f32[16,32]{1,0:T(8,128)}', space=vmem, size = 0x2000, scoped, tag = 'scratch operand']
  #allocation5 [shape = 'f32[16,32]{1,0:T(8,128)}', space=vmem, size = 0x2000, scoped, tag = 'scratch operand']
  %s0 = inlined_call_operand.vmem [shape: f32[16,32], index: 0, kind: input, shape index: {}]
  %s1 = inlined_call_operand.vmem [shape: f32[16,1], index: 1, kind: input, shape index: {}]
  %s2 = inlined_call_operand.vmem [shape: f32[2,16], index: 2, kind: input, shape index: {}]
  %s3 = inlined_call_operand.vmem [shape: f32[32,32], index: 3, kind: input, shape index: {}]
  %s4 = inlined_call_operand.vmem [shape: f32[32,32], index: 4, kind: input, shape index: {}]
  %s5 = inlined_call_operand.vmem [shape: f32[32,32], index: 5, kind: input, shape index: {}]
  %s6 = inlined_call_operand.vmem [shape: f32[32,32], index: 6, kind: input, shape index: {}]
  %s7 = inlined_call_operand.vmem [shape: f32[32,32], index: 7, kind: input, shape index: {}]
  %s8 = inlined_call_operand.vmem [shape: f32[32,32], index: 8, kind: input, shape index: {}]
  %s9 = inlined_call_operand.vmem [shape: f32[1,32], index: 9, kind: input, shape index: {}]
  %s10 = inlined_call_operand.vmem [shape: f32[1,32], index: 10, kind: input, shape index: {}]
  %s11 = inlined_call_operand.vmem [shape: f32[1,32], index: 11, kind: input, shape index: {}]
  %s12 = inlined_call_operand.vmem [shape: f32[1,32], index: 12, kind: input, shape index: {}]
  %s13 = inlined_call_operand.vmem [shape: f32[32,32], index: 13, kind: input, shape index: {}]
  %s14 = inlined_call_operand.vmem [shape: f32[1,32], index: 14, kind: input, shape index: {}]
  %s15 = inlined_call_operand.vmem [shape: f32[32,8], index: 15, kind: input, shape index: {}]
  %s16 = inlined_call_operand.vmem [shape: f32[1,8], index: 16, kind: input, shape index: {}]
  %s17 = inlined_call_operand.hbm [shape: f32[2,8], index: 17, kind: output, shape index: {}]
  %s18 = sld [smem:[#allocation0]]
  $region78: #{condition_classification_rnn.1} parent=0
    _
  %s20 = ssub.s32 1, %s18
  %s21 = scalar_select 0, %s20, %s18
  $region1: #{condition_classification_rnn.1} parent=0
    #allocation6 [shape = 'u8[1024]{0}', space=vmem, size = 0x400, scoped, tag = 'output window, operand 0, single buffered']
    #allocation7 [shape = 's32[1]{0}', space=sflag, size = 0x4, scoped, tag = 'scoped memory for condition_classification_rnn.1']
    %22 = vsyncpa [#allocation7], 0
    // Predicated region
    $region2: #{condition_classification_rnn.1} parent=1 // pred_check
      _
    $region3: #{condition_classification_rnn.1} parent=1 // pred_check_branch
      %24 = sbr.rel (0) target = $region5
    $region4: #{condition_classification_rnn.1} parent=1 // pred_region
      _
    $region5: #{condition_classification_rnn.1} parent=1 // pred_fallthru
      _
    // Predicated region
    $region6: #{condition_classification_rnn.1} parent=1 // pred_check
      _
    $region7: #{condition_classification_rnn.1} parent=1 // pred_check_branch
      %26 = sbr.rel (0) target = $region9
    $region8: #{condition_classification_rnn.1} parent=1 // pred_region
      _
    $region9: #{condition_classification_rnn.1} parent=1 // pred_fallthru
      _
    // Predicated region
    $region10: #{condition_classification_rnn.1} parent=1 // pred_check
      _
    $region11: #{condition_classification_rnn.1} parent=1 // pred_check_branch
      %28 = sbr.rel (0) target = $region13
    $region12: #{condition_classification_rnn.1} parent=1 // pred_region
      _
    $region13: #{condition_classification_rnn.1} parent=1 // pred_fallthru
      _
    // Predicated region
    $region14: #{condition_classification_rnn.1} parent=1 // pred_check
      _
    $region15: #{condition_classification_rnn.1} parent=1 // pred_check_branch
      %30 = sbr.rel (0) target = $region17
    $region16: #{condition_classification_rnn.1} parent=1 // pred_region
      _
    $region17: #{condition_classification_rnn.1} parent=1 // pred_fallthru
      _
    // Predicated region
    $region18: #{condition_classification_rnn.1} parent=1 // pred_check
      _
    $region19: #{condition_classification_rnn.1} parent=1 // pred_check_branch
      %32 = sbr.rel (0) target = $region21
    $region20: #{condition_classification_rnn.1} parent=1 // pred_region
      _
    $region21: #{condition_classification_rnn.1} parent=1 // pred_fallthru
      _
    // Predicated region
    $region22: #{condition_classification_rnn.1} parent=1 // pred_check
      _
    $region23: #{condition_classification_rnn.1} parent=1 // pred_check_branch
      %34 = sbr.rel (0) target = $region25
    $region24: #{condition_classification_rnn.1} parent=1 // pred_region
      _
    $region25: #{condition_classification_rnn.1} parent=1 // pred_fallthru
      _
    // Predicated region
    $region26: #{condition_classification_rnn.1} parent=1 // pred_check
      _
    $region27: #{condition_classification_rnn.1} parent=1 // pred_check_branch
      %36 = sbr.rel (0) target = $region29
    $region28: #{condition_classification_rnn.1} parent=1 // pred_region
      _
    $region29: #{condition_classification_rnn.1} parent=1 // pred_fallthru
      _
    // Predicated region
    $region30: #{condition_classification_rnn.1} parent=1 // pred_check
      _
    $region31: #{condition_classification_rnn.1} parent=1 // pred_check_branch
      %38 = sbr.rel (0) target = $region33
    $region32: #{condition_classification_rnn.1} parent=1 // pred_region
      _
    $region33: #{condition_classification_rnn.1} parent=1 // pred_fallthru
      _
    // Predicated region
    $region34: #{condition_classification_rnn.1} parent=1 // pred_check
      _
    $region35: #{condition_classification_rnn.1} parent=1 // pred_check_branch
      %40 = sbr.rel (0) target = $region37
    $region36: #{condition_classification_rnn.1} parent=1 // pred_region
      _
    $region37: #{condition_classification_rnn.1} parent=1 // pred_fallthru
      _
    // Predicated region
    $region38: #{condition_classification_rnn.1} parent=1 // pred_check
      _
    $region39: #{condition_classification_rnn.1} parent=1 // pred_check_branch
      %42 = sbr.rel (0) target = $region41
    $region40: #{condition_classification_rnn.1} parent=1 // pred_region
      _
    $region41: #{condition_classification_rnn.1} parent=1 // pred_fallthru
      _
    // Predicated region
    $region42: #{condition_classification_rnn.1} parent=1 // pred_check
      _
    $region43: #{condition_classification_rnn.1} parent=1 // pred_check_branch
      %44 = sbr.rel (0) target = $region45
    $region44: #{condition_classification_rnn.1} parent=1 // pred_region
      _
    $region45: #{condition_classification_rnn.1} parent=1 // pred_fallthru
      _
    // Predicated region
    $region46: #{condition_classification_rnn.1} parent=1 // pred_check
      _
    $region47: #{condition_classification_rnn.1} parent=1 // pred_check_branch
      %46 = sbr.rel (0) target = $region49
    $region48: #{condition_classification_rnn.1} parent=1 // pred_region
      _
    $region49: #{condition_classification_rnn.1} parent=1 // pred_fallthru
      _
    // Predicated region
    $region50: #{condition_classification_rnn.1} parent=1 // pred_check
      _
    $region51: #{condition_classification_rnn.1} parent=1 // pred_check_branch
      %48 = sbr.rel (0) target = $region53
    $region52: #{condition_classification_rnn.1} parent=1 // pred_region
      _
    $region53: #{condition_classification_rnn.1} parent=1 // pred_fallthru
      _
    // Predicated region
    $region54: #{condition_classification_rnn.1} parent=1 // pred_check
      _
    $region55: #{condition_classification_rnn.1} parent=1 // pred_check_branch
      %50 = sbr.rel (0) target = $region57
    $region56: #{condition_classification_rnn.1} parent=1 // pred_region
      _
    $region57: #{condition_classification_rnn.1} parent=1 // pred_fallthru
      _
    // Predicated region
    $region58: #{condition_classification_rnn.1} parent=1 // pred_check
      _
    $region59: #{condition_classification_rnn.1} parent=1 // pred_check_branch
      %52 = sbr.rel (0) target = $region61
    $region60: #{condition_classification_rnn.1} parent=1 // pred_region
      _
    $region61: #{condition_classification_rnn.1} parent=1 // pred_fallthru
      _
    // Predicated region
    $region62: #{condition_classification_rnn.1} parent=1 // pred_check
      _
    $region63: #{condition_classification_rnn.1} parent=1 // pred_check_branch
      %54 = sbr.rel (0) target = $region65
    $region64: #{condition_classification_rnn.1} parent=1 // pred_region
      _
    $region65: #{condition_classification_rnn.1} parent=1 // pred_fallthru
      _
    // Predicated region
    $region66: #{condition_classification_rnn.1} parent=1 // pred_check
      _
    $region67: #{condition_classification_rnn.1} parent=1 // pred_check_branch
      %56 = sbr.rel (0) target = $region69
    $region68: #{condition_classification_rnn.1} parent=1 // pred_region
      _
    $region69: #{condition_classification_rnn.1} parent=1 // pred_fallthru
      _
    %v57 = vld [vmem:[%s0] sm:$0xff]
    %v58 = vld [vmem:[%s0 + $0x8] sm:$0xff]
    %v59 = vld [vmem:[%s3] sm:$0xff]
    %v60 = vld [vmem:[%s3 + $0x8] sm:$0xff]
    %v61 = vld [vmem:[%s3 + $0x10] sm:$0xff]
    %v62 = vld [vmem:[%s3 + $0x18] sm:$0xff]
    %v63 = vld [vmem:[%s9] sm:$0x1]
    %v65 = vlaneseq
    %v66 = vshrl.u32 %v65, 7
    %v67 = vsub.s32 0, %v66
    %v68 = vrot.slane %v63, %v67
    %vm70 = vcmask 261120
    %v72 = vsel %vm70, %v57, 0
    %v75 = vsel %vm70, %v58, 0
    %77 = vmatprep.subr.mxu0 0.0
    %78 = vmatpush1.msra.mxu0 0.0
    %79 = vmatprep.subr.mxu0 0.0
    %80 = vmatpush1.msra.mxu0 0.0
    %81 = vmatprep.subr.mxu0 0.0
    %82 = vmatpush1.msra.mxu0 0.0
    %83 = vmatprep.subr.mxu0 0.0
    %84 = vmatpush1.msra.mxu0 0.0
    %85 = vmatprep.subr.mxu0 0.0
    %86 = vmatpush1.msra.mxu0 0.0
    %87 = vmatprep.subr.mxu0 0.0
    %88 = vmatpush1.msra.mxu0 0.0
    %89 = vmatprep.subr.mxu0 0.0
    %90 = vmatpush1.msra.mxu0 0.0
    %91 = vmatprep.subr.mxu0 0.0
    %92 = vmatpush1.msra.mxu0 0.0
    %93 = vmatprep.subr.mxu0 0.0
    %94 = vmatpush1.msra.mxu0 0.0
    %95 = vmatprep.subr.mxu0 0.0
    %96 = vmatpush1.msra.mxu0 0.0
    %97 = vmatprep.subr.mxu0 0.0
    %98 = vmatpush1.msra.mxu0 0.0
    %99 = vmatprep.subr.mxu0 0.0
    %100 = vmatpush1.msra.mxu0 0.0
    %101 = vmatprep.subr.mxu0 0.0
    %102 = vmatpush1.msra.mxu0 %v62
    %103 = vmatprep.subr.mxu0 0.0
    %104 = vmatpush1.msra.mxu0 %v61
    %105 = vmatprep.subr.mxu0 0.0
    %106 = vmatpush1.msra.mxu0 %v60
    %107 = vmatprep.subr.mxu0 0.0
    %108 = vmatpush1.msra.mxu0 %v59
    %109 = vmatprep.subr.mxu0 0.0
    %110 = vmatpush2.msra.mxu0 0.0
    %111 = vmatprep.subr.mxu0 0.0
    %112 = vmatpush2.msra.mxu0 0.0
    %113 = vmatprep.subr.mxu0 0.0
    %114 = vmatpush2.msra.mxu0 0.0
    %115 = vmatprep.subr.mxu0 0.0
    %116 = vmatpush2.msra.mxu0 0.0
    %117 = vmatprep.subr.mxu0 0.0
    %118 = vmatpush2.msra.mxu0 0.0
    %119 = vmatprep.subr.mxu0 0.0
    %120 = vmatpush2.msra.mxu0 0.0
    %121 = vmatprep.subr.mxu0 0.0
    %122 = vmatpush2.msra.mxu0 0.0
    %123 = vmatprep.subr.mxu0 0.0
    %124 = vmatpush2.msra.mxu0 0.0
    %125 = vmatprep.subr.mxu0 0.0
    %126 = vmatpush2.msra.mxu0 0.0
    %127 = vmatprep.subr.mxu0 0.0
    %128 = vmatpush2.msra.mxu0 0.0
    %129 = vmatprep.subr.mxu0 0.0
    %130 = vmatpush2.msra.mxu0 0.0
    %131 = vmatprep.subr.mxu0 0.0
    %132 = vmatpush2.msra.mxu0 0.0
    %133 = vmatprep.subr.mxu0 0.0
    %134 = vmatpush2.msra.mxu0 0.0
    %135 = vmatprep.subr.mxu0 0.0
    %136 = vmatpush2.msra.mxu0 0.0
    %137 = vmatprep.subr.mxu0 0.0
    %138 = vmatpush2.msra.mxu0 0.0
    %139 = vmatprep.subr.mxu0 0.0
    %140 = vmatpush2.msra.mxu0 0.0
    %141 = vmatprep.mubr.f32.mxu0 0.0
    %142 = vmatmul.mubr.f32.gmra.mxu0 %v72
    %v143 = vpop.f32.mrf.mxu0
    %v144 = vadd.f32 %v68, %v143
    %v145 = vpop.f32.mrf.mxu0
    %146 = vmatprep.mubr.f32.mxu0 0.0
    %147 = vmatmul.mubr.f32.gmra.mxu0 %v75
    %v148 = vpop.f32.mrf.mxu0
    %v149 = vadd.f32 %v68, %v148
    %v150 = vpop.f32.mrf.mxu0
    %151 = vdwg.mxu0
    %152 = vst.msk [vmem:[#allocation3] sm:$0xff] %vm70, %v144
    %153 = vst.msk [vmem:[#allocation3 + $0x8] sm:$0xff] %vm70, %v149
    %v154 = vld [vmem:[%s4] sm:$0xff]
    %v155 = vld [vmem:[%s4 + $0x8] sm:$0xff]
    %v156 = vld [vmem:[%s4 + $0x10] sm:$0xff]
    %v157 = vld [vmem:[%s4 + $0x18] sm:$0xff]
    %v158 = vld [vmem:[%s10] sm:$0x1]
    %v160 = vlaneseq
    %v161 = vshrl.u32 %v160, 7
    %v162 = vsub.s32 0, %v161
    %v163 = vrot.slane %v158, %v162
    %165 = vmatprep.subr.mxu0 0.0
    %166 = vmatpush1.msra.mxu0 0.0
    %167 = vmatprep.subr.mxu0 0.0
    %168 = vmatpush1.msra.mxu0 0.0
    %169 = vmatprep.subr.mxu0 0.0
    %170 = vmatpush1.msra.mxu0 0.0
    %171 = vmatprep.subr.mxu0 0.0
    %172 = vmatpush1.msra.mxu0 0.0
    %173 = vmatprep.subr.mxu0 0.0
    %174 = vmatpush1.msra.mxu0 0.0
    %175 = vmatprep.subr.mxu0 0.0
    %176 = vmatpush1.msra.mxu0 0.0
    %177 = vmatprep.subr.mxu0 0.0
    %178 = vmatpush1.msra.mxu0 0.0
    %179 = vmatprep.subr.mxu0 0.0
    %180 = vmatpush1.msra.mxu0 0.0
    %181 = vmatprep.subr.mxu0 0.0
    %182 = vmatpush1.msra.mxu0 0.0
    %183 = vmatprep.subr.mxu0 0.0
    %184 = vmatpush1.msra.mxu0 0.0
    %185 = vmatprep.subr.mxu0 0.0
    %186 = vmatpush1.msra.mxu0 0.0
    %187 = vmatprep.subr.mxu0 0.0
    %188 = vmatpush1.msra.mxu0 0.0
    %189 = vmatprep.subr.mxu0 0.0
    %190 = vmatpush1.msra.mxu0 %v157
    %191 = vmatprep.subr.mxu0 0.0
    %192 = vmatpush1.msra.mxu0 %v156
    %193 = vmatprep.subr.mxu0 0.0
    %194 = vmatpush1.msra.mxu0 %v155
    %195 = vmatprep.subr.mxu0 0.0
    %196 = vmatpush1.msra.mxu0 %v154
    %197 = vmatprep.subr.mxu0 0.0
    %198 = vmatpush2.msra.mxu0 0.0
    %199 = vmatprep.subr.mxu0 0.0
    %200 = vmatpush2.msra.mxu0 0.0
    %201 = vmatprep.subr.mxu0 0.0
    %202 = vmatpush2.msra.mxu0 0.0
    %203 = vmatprep.subr.mxu0 0.0
    %204 = vmatpush2.msra.mxu0 0.0
    %205 = vmatprep.subr.mxu0 0.0
    %206 = vmatpush2.msra.mxu0 0.0
    %207 = vmatprep.subr.mxu0 0.0
    %208 = vmatpush2.msra.mxu0 0.0
    %209 = vmatprep.subr.mxu0 0.0
    %210 = vmatpush2.msra.mxu0 0.0
    %211 = vmatprep.subr.mxu0 0.0
    %212 = vmatpush2.msra.mxu0 0.0
    %213 = vmatprep.subr.mxu0 0.0
    %214 = vmatpush2.msra.mxu0 0.0
    %215 = vmatprep.subr.mxu0 0.0
    %216 = vmatpush2.msra.mxu0 0.0
    %217 = vmatprep.subr.mxu0 0.0
    %218 = vmatpush2.msra.mxu0 0.0
    %219 = vmatprep.subr.mxu0 0.0
    %220 = vmatpush2.msra.mxu0 0.0
    %221 = vmatprep.subr.mxu0 0.0
    %222 = vmatpush2.msra.mxu0 0.0
    %223 = vmatprep.subr.mxu0 0.0
    %224 = vmatpush2.msra.mxu0 0.0
    %225 = vmatprep.subr.mxu0 0.0
    %226 = vmatpush2.msra.mxu0 0.0
    %227 = vmatprep.subr.mxu0 0.0
    %228 = vmatpush2.msra.mxu0 0.0
    %229 = vmatprep.mubr.f32.mxu0 0.0
    %230 = vmatmul.mubr.f32.gmra.mxu0 %v72
    %v231 = vpop.f32.mrf.mxu0
    %v232 = vadd.f32 %v163, %v231
    %v233 = vpop.f32.mrf.mxu0
    %234 = vmatprep.mubr.f32.mxu0 0.0
    %235 = vmatmul.mubr.f32.gmra.mxu0 %v75
    %v236 = vpop.f32.mrf.mxu0
    %v237 = vadd.f32 %v163, %v236
    %v238 = vpop.f32.mrf.mxu0
    %239 = vdwg.mxu0
    %240 = vst.msk [vmem:[#allocation4] sm:$0xff] %vm70, %v232
    %241 = vst.msk [vmem:[#allocation4 + $0x8] sm:$0xff] %vm70, %v237
    %v242 = vld [vmem:[%s5] sm:$0xff]
    %v243 = vld [vmem:[%s5 + $0x8] sm:$0xff]
    %v244 = vld [vmem:[%s5 + $0x10] sm:$0xff]
    %v245 = vld [vmem:[%s5 + $0x18] sm:$0xff]
    %v246 = vld [vmem:[%s11] sm:$0x1]
    %v248 = vlaneseq
    %v249 = vshrl.u32 %v248, 7
    %v250 = vsub.s32 0, %v249
    %v251 = vrot.slane %v246, %v250
    %253 = vmatprep.subr.mxu0 0.0
    %254 = vmatpush1.msra.mxu0 0.0
    %255 = vmatprep.subr.mxu0 0.0
    %256 = vmatpush1.msra.mxu0 0.0
    %257 = vmatprep.subr.mxu0 0.0
    %258 = vmatpush1.msra.mxu0 0.0
    %259 = vmatprep.subr.mxu0 0.0
    %260 = vmatpush1.msra.mxu0 0.0
    %261 = vmatprep.subr.mxu0 0.0
    %262 = vmatpush1.msra.mxu0 0.0
    %263 = vmatprep.subr.mxu0 0.0
    %264 = vmatpush1.msra.mxu0 0.0
    %265 = vmatprep.subr.mxu0 0.0
    %266 = vmatpush1.msra.mxu0 0.0
    %267 = vmatprep.subr.mxu0 0.0
    %268 = vmatpush1.msra.mxu0 0.0
    %269 = vmatprep.subr.mxu0 0.0
    %270 = vmatpush1.msra.mxu0 0.0
    %271 = vmatprep.subr.mxu0 0.0
    %272 = vmatpush1.msra.mxu0 0.0
    %273 = vmatprep.subr.mxu0 0.0
    %274 = vmatpush1.msra.mxu0 0.0
    %275 = vmatprep.subr.mxu0 0.0
    %276 = vmatpush1.msra.mxu0 0.0
    %277 = vmatprep.subr.mxu0 0.0
    %278 = vmatpush1.msra.mxu0 %v245
    %279 = vmatprep.subr.mxu0 0.0
    %280 = vmatpush1.msra.mxu0 %v244
    %281 = vmatprep.subr.mxu0 0.0
    %282 = vmatpush1.msra.mxu0 %v243
    %283 = vmatprep.subr.mxu0 0.0
    %284 = vmatpush1.msra.mxu0 %v242
    %285 = vmatprep.subr.mxu0 0.0
    %286 = vmatpush2.msra.mxu0 0.0
    %287 = vmatprep.subr.mxu0 0.0
    %288 = vmatpush2.msra.mxu0 0.0
    %289 = vmatprep.subr.mxu0 0.0
    %290 = vmatpush2.msra.mxu0 0.0
    %291 = vmatprep.subr.mxu0 0.0
    %292 = vmatpush2.msra.mxu0 0.0
    %293 = vmatprep.subr.mxu0 0.0
    %294 = vmatpush2.msra.mxu0 0.0
    %295 = vmatprep.subr.mxu0 0.0
    %296 = vmatpush2.msra.mxu0 0.0
    %297 = vmatprep.subr.mxu0 0.0
    %298 = vmatpush2.msra.mxu0 0.0
    %299 = vmatprep.subr.mxu0 0.0
    %300 = vmatpush2.msra.mxu0 0.0
    %301 = vmatprep.subr.mxu0 0.0
    %302 = vmatpush2.msra.mxu0 0.0
    %303 = vmatprep.subr.mxu0 0.0
    %304 = vmatpush2.msra.mxu0 0.0
    %305 = vmatprep.subr.mxu0 0.0
    %306 = vmatpush2.msra.mxu0 0.0
    %307 = vmatprep.subr.mxu0 0.0
    %308 = vmatpush2.msra.mxu0 0.0
    %309 = vmatprep.subr.mxu0 0.0
    %310 = vmatpush2.msra.mxu0 0.0
    %311 = vmatprep.subr.mxu0 0.0
    %312 = vmatpush2.msra.mxu0 0.0
    %313 = vmatprep.subr.mxu0 0.0
    %314 = vmatpush2.msra.mxu0 0.0
    %315 = vmatprep.subr.mxu0 0.0
    %316 = vmatpush2.msra.mxu0 0.0
    %317 = vmatprep.mubr.f32.mxu0 0.0
    %318 = vmatmul.mubr.f32.gmra.mxu0 %v72
    %v319 = vpop.f32.mrf.mxu0
    %v320 = vadd.f32 %v251, %v319
    %v321 = vpop.f32.mrf.mxu0
    %322 = vmatprep.mubr.f32.mxu0 0.0
    %323 = vmatmul.mubr.f32.gmra.mxu0 %v75
    %v324 = vpop.f32.mrf.mxu0
    %v325 = vadd.f32 %v251, %v324
    %v326 = vpop.f32.mrf.mxu0
    %327 = vdwg.mxu0
    %328 = vst.msk [vmem:[#allocation5] sm:$0xff] %vm70, %v320
    %329 = vst.msk [vmem:[#allocation5 + $0x8] sm:$0xff] %vm70, %v325
    %v330 = vld [vmem:[%s6] sm:$0xff]
    %v331 = vld [vmem:[%s6 + $0x8] sm:$0xff]
    %v332 = vld [vmem:[%s6 + $0x10] sm:$0xff]
    %v333 = vld [vmem:[%s6 + $0x18] sm:$0xff]
    %v334 = vld [vmem:[%s7] sm:$0xff]
    %v335 = vld [vmem:[%s7 + $0x8] sm:$0xff]
    %v336 = vld [vmem:[%s7 + $0x10] sm:$0xff]
    %v337 = vld [vmem:[%s7 + $0x18] sm:$0xff]
    %v338 = vld [vmem:[%s8] sm:$0xff]
    %v339 = vld [vmem:[%s8 + $0x8] sm:$0xff]
    %v340 = vld [vmem:[%s8 + $0x10] sm:$0xff]
    %v341 = vld [vmem:[%s8 + $0x18] sm:$0xff]
    %v342 = vld [vmem:[%s12] sm:$0x1]
    %v344 = vlaneseq
    %v345 = vshrl.u32 %v344, 7
    %v346 = vsub.s32 0, %v345
    %v347 = vrot.slane %v342, %v346
    %v350 = vsel %vm70, 0.0, 0
    %352 = vmatprep.subr.mxu0 0.0
    %353 = vmatpush1.msra.mxu0 0.0
    %354 = vmatprep.subr.mxu0 0.0
    %355 = vmatpush1.msra.mxu0 0.0
    %356 = vmatprep.subr.mxu0 0.0
    %357 = vmatpush1.msra.mxu0 0.0
    %358 = vmatprep.subr.mxu0 0.0
    %359 = vmatpush1.msra.mxu0 0.0
    %360 = vmatprep.subr.mxu0 0.0
    %361 = vmatpush1.msra.mxu0 0.0
    %362 = vmatprep.subr.mxu0 0.0
    %363 = vmatpush1.msra.mxu0 0.0
    %364 = vmatprep.subr.mxu0 0.0
    %365 = vmatpush1.msra.mxu0 0.0
    %366 = vmatprep.subr.mxu0 0.0
    %367 = vmatpush1.msra.mxu0 0.0
    %368 = vmatprep.subr.mxu0 0.0
    %369 = vmatpush1.msra.mxu0 0.0
    %370 = vmatprep.subr.mxu0 0.0
    %371 = vmatpush1.msra.mxu0 0.0
    %372 = vmatprep.subr.mxu0 0.0
    %373 = vmatpush1.msra.mxu0 0.0
    %374 = vmatprep.subr.mxu0 0.0
    %375 = vmatpush1.msra.mxu0 0.0
    %376 = vmatprep.subr.mxu0 0.0
    %377 = vmatpush1.msra.mxu0 %v333
    %378 = vmatprep.subr.mxu0 0.0
    %379 = vmatpush1.msra.mxu0 %v332
    %380 = vmatprep.subr.mxu0 0.0
    %381 = vmatpush1.msra.mxu0 %v331
    %382 = vmatprep.subr.mxu0 0.0
    %383 = vmatpush1.msra.mxu0 %v330
    %384 = vmatprep.subr.mxu0 0.0
    %385 = vmatpush2.msra.mxu0 0.0
    %386 = vmatprep.subr.mxu0 0.0
    %387 = vmatpush2.msra.mxu0 0.0
    %388 = vmatprep.subr.mxu0 0.0
    %389 = vmatpush2.msra.mxu0 0.0
    %390 = vmatprep.subr.mxu0 0.0
    %391 = vmatpush2.msra.mxu0 0.0
    %392 = vmatprep.subr.mxu0 0.0
    %393 = vmatpush2.msra.mxu0 0.0
    %394 = vmatprep.subr.mxu0 0.0
    %395 = vmatpush2.msra.mxu0 0.0
    %396 = vmatprep.subr.mxu0 0.0
    %397 = vmatpush2.msra.mxu0 0.0
    %398 = vmatprep.subr.mxu0 0.0
    %399 = vmatpush2.msra.mxu0 0.0
    %400 = vmatprep.subr.mxu0 0.0
    %401 = vmatpush2.msra.mxu0 0.0
    %402 = vmatprep.subr.mxu0 0.0
    %403 = vmatpush2.msra.mxu0 0.0
    %404 = vmatprep.subr.mxu0 0.0
    %405 = vmatpush2.msra.mxu0 0.0
    %406 = vmatprep.subr.mxu0 0.0
    %407 = vmatpush2.msra.mxu0 0.0
    %408 = vmatprep.subr.mxu0 0.0
    %409 = vmatpush2.msra.mxu0 0.0
    %410 = vmatprep.subr.mxu0 0.0
    %411 = vmatpush2.msra.mxu0 0.0
    %412 = vmatprep.subr.mxu0 0.0
    %413 = vmatpush2.msra.mxu0 0.0
    %414 = vmatprep.subr.mxu0 0.0
    %415 = vmatpush2.msra.mxu0 0.0
    %416 = vmatprep.mubr.f32.mxu0 0.0
    %417 = vmatmul.mubr.f32.gmra.mxu0 %v350
    %v418 = vpop.f32.mrf.mxu0
    %v419 = vadd.f32 0.0, %v418
    %v420 = vpop.f32.mrf.mxu0
    %421 = vdwg.mxu0
    %422 = vmatprep.subr.mxu0 0.0
    %423 = vmatpush1.msra.mxu0 0.0
    %424 = vmatprep.subr.mxu0 0.0
    %425 = vmatpush1.msra.mxu0 0.0
    %426 = vmatprep.subr.mxu0 0.0
    %427 = vmatpush1.msra.mxu0 0.0
    %428 = vmatprep.subr.mxu0 0.0
    %429 = vmatpush1.msra.mxu0 0.0
    %430 = vmatprep.subr.mxu0 0.0
    %431 = vmatpush1.msra.mxu0 0.0
    %432 = vmatprep.subr.mxu0 0.0
    %433 = vmatpush1.msra.mxu0 0.0
    %434 = vmatprep.subr.mxu0 0.0
    %435 = vmatpush1.msra.mxu0 0.0
    %436 = vmatprep.subr.mxu0 0.0
    %437 = vmatpush1.msra.mxu0 0.0
    %438 = vmatprep.subr.mxu0 0.0
    %439 = vmatpush1.msra.mxu0 0.0
    %440 = vmatprep.subr.mxu0 0.0
    %441 = vmatpush1.msra.mxu0 0.0
    %442 = vmatprep.subr.mxu0 0.0
    %443 = vmatpush1.msra.mxu0 0.0
    %444 = vmatprep.subr.mxu0 0.0
    %445 = vmatpush1.msra.mxu0 0.0
    %446 = vmatprep.subr.mxu0 0.0
    %447 = vmatpush1.msra.mxu0 %v337
    %448 = vmatprep.subr.mxu0 0.0
    %449 = vmatpush1.msra.mxu0 %v336
    %450 = vmatprep.subr.mxu0 0.0
    %451 = vmatpush1.msra.mxu0 %v335
    %452 = vmatprep.subr.mxu0 0.0
    %453 = vmatpush1.msra.mxu0 %v334
    %454 = vmatprep.subr.mxu0 0.0
    %455 = vmatpush2.msra.mxu0 0.0
    %456 = vmatprep.subr.mxu0 0.0
    %457 = vmatpush2.msra.mxu0 0.0
    %458 = vmatprep.subr.mxu0 0.0
    %459 = vmatpush2.msra.mxu0 0.0
    %460 = vmatprep.subr.mxu0 0.0
    %461 = vmatpush2.msra.mxu0 0.0
    %462 = vmatprep.subr.mxu0 0.0
    %463 = vmatpush2.msra.mxu0 0.0
    %464 = vmatprep.subr.mxu0 0.0
    %465 = vmatpush2.msra.mxu0 0.0
    %466 = vmatprep.subr.mxu0 0.0
    %467 = vmatpush2.msra.mxu0 0.0
    %468 = vmatprep.subr.mxu0 0.0
    %469 = vmatpush2.msra.mxu0 0.0
    %470 = vmatprep.subr.mxu0 0.0
    %471 = vmatpush2.msra.mxu0 0.0
    %472 = vmatprep.subr.mxu0 0.0
    %473 = vmatpush2.msra.mxu0 0.0
    %474 = vmatprep.subr.mxu0 0.0
    %475 = vmatpush2.msra.mxu0 0.0
    %476 = vmatprep.subr.mxu0 0.0
    %477 = vmatpush2.msra.mxu0 0.0
    %478 = vmatprep.subr.mxu0 0.0
    %479 = vmatpush2.msra.mxu0 0.0
    %480 = vmatprep.subr.mxu0 0.0
    %481 = vmatpush2.msra.mxu0 0.0
    %482 = vmatprep.subr.mxu0 0.0
    %483 = vmatpush2.msra.mxu0 0.0
    %484 = vmatprep.subr.mxu0 0.0
    %485 = vmatpush2.msra.mxu0 0.0
    %486 = vmatprep.mubr.f32.mxu0 0.0
    %487 = vmatmul.mubr.f32.gmra.mxu0 %v350
    %v488 = vpop.f32.mrf.mxu0
    %v489 = vadd.f32 0.0, %v488
    %v490 = vpop.f32.mrf.mxu0
    %491 = vdwg.mxu0
    %v492 = vld [vmem:[#allocation3] sm:$0x3]
    %v493 = vadd.f32 %v492, %v419
    %v494 = vxor.u32 %v493, 2147483648
    %v495 = vmul.f32 %v494, 1.442695
    %v496 = vpow.pop %v495
    %v497 = vadd.f32 %v496, 1.0
    %v498 = vrcp.pop %v497
    %v499 = vmul.f32 1.0, %v498
    %v500 = vld [vmem:[#allocation4] sm:$0x3]
    %v501 = vadd.f32 %v500, %v489
    %v502 = vxor.u32 %v501, 2147483648
    %v503 = vmul.f32 %v502, 1.442695
    %v504 = vpow.pop %v503
    %v505 = vadd.f32 %v504, 1.0
    %v506 = vrcp.pop %v505
    %v507 = vmul.f32 1.0, %v506
    %v508 = vld [vmem:[#allocation5] sm:$0x3]
    %509 = vmatprep.subr.mxu0 0.0
    %510 = vmatpush1.msra.mxu0 0.0
    %511 = vmatprep.subr.mxu0 0.0
    %512 = vmatpush1.msra.mxu0 0.0
    %513 = vmatprep.subr.mxu0 0.0
    %514 = vmatpush1.msra.mxu0 0.0
    %515 = vmatprep.subr.mxu0 0.0
    %516 = vmatpush1.msra.mxu0 0.0
    %517 = vmatprep.subr.mxu0 0.0
    %518 = vmatpush1.msra.mxu0 0.0
    %519 = vmatprep.subr.mxu0 0.0
    %520 = vmatpush1.msra.mxu0 0.0
    %521 = vmatprep.subr.mxu0 0.0
    %522 = vmatpush1.msra.mxu0 0.0
    %523 = vmatprep.subr.mxu0 0.0
    %524 = vmatpush1.msra.mxu0 0.0
    %525 = vmatprep.subr.mxu0 0.0
    %526 = vmatpush1.msra.mxu0 0.0
    %527 = vmatprep.subr.mxu0 0.0
    %528 = vmatpush1.msra.mxu0 0.0
    %529 = vmatprep.subr.mxu0 0.0
    %530 = vmatpush1.msra.mxu0 0.0
    %531 = vmatprep.subr.mxu0 0.0
    %532 = vmatpush1.msra.mxu0 0.0
    %533 = vmatprep.subr.mxu0 0.0
    %534 = vmatpush1.msra.mxu0 %v341
    %535 = vmatprep.subr.mxu0 0.0
    %536 = vmatpush1.msra.mxu0 %v340
    %537 = vmatprep.subr.mxu0 0.0
    %538 = vmatpush1.msra.mxu0 %v339
    %539 = vmatprep.subr.mxu0 0.0
    %540 = vmatpush1.msra.mxu0 %v338
    %541 = vmatprep.subr.mxu0 0.0
    %542 = vmatpush2.msra.mxu0 0.0
    %543 = vmatprep.subr.mxu0 0.0
    %544 = vmatpush2.msra.mxu0 0.0
    %545 = vmatprep.subr.mxu0 0.0
    %546 = vmatpush2.msra.mxu0 0.0
    %547 = vmatprep.subr.mxu0 0.0
    %548 = vmatpush2.msra.mxu0 0.0
    %549 = vmatprep.subr.mxu0 0.0
    %550 = vmatpush2.msra.mxu0 0.0
    %551 = vmatprep.subr.mxu0 0.0
    %552 = vmatpush2.msra.mxu0 0.0
    %553 = vmatprep.subr.mxu0 0.0
    %554 = vmatpush2.msra.mxu0 0.0
    %555 = vmatprep.subr.mxu0 0.0
    %556 = vmatpush2.msra.mxu0 0.0
    %557 = vmatprep.subr.mxu0 0.0
    %558 = vmatpush2.msra.mxu0 0.0
    %559 = vmatprep.subr.mxu0 0.0
    %560 = vmatpush2.msra.mxu0 0.0
    %561 = vmatprep.subr.mxu0 0.0
    %562 = vmatpush2.msra.mxu0 0.0
    %563 = vmatprep.subr.mxu0 0.0
    %564 = vmatpush2.msra.mxu0 0.0
    %565 = vmatprep.subr.mxu0 0.0
    %566 = vmatpush2.msra.mxu0 0.0
    %567 = vmatprep.subr.mxu0 0.0
    %568 = vmatpush2.msra.mxu0 0.0
    %569 = vmatprep.subr.mxu0 0.0
    %570 = vmatpush2.msra.mxu0 0.0
    %571 = vmatprep.subr.mxu0 0.0
    %572 = vmatpush2.msra.mxu0 0.0
    %573 = vmatprep.mubr.f32.mxu0 0.0
    %574 = vmatmul.mubr.f32.gmra.mxu0 %v350
    %v575 = vpop.f32.mrf.mxu0
    %v576 = vadd.f32 %v347, %v575
    %v577 = vpop.f32.mrf.mxu0
    %578 = vdwg.mxu0
    %v579 = vmul.f32 %v499, %v576
    %v580 = vadd.f32 %v508, %v579
    %v581 = vtanh.pop %v580
    %v582 = vsub.f32 1.0, %v507
    %v583 = vmul.f32 %v582, %v581
    %v584 = vmul.f32 %v507, 0.0
    %v585 = vadd.f32 %v583, %v584
    %vm586 = vcmask 254976
    %587 = vst.msk [vmem:[#allocation2] sm:$0x3] %vm586, %v585
    %v589 = vsel %vm70, %v585, 0
    %591 = vmatprep.subr.mxu0 0.0
    %592 = vmatpush1.msra.mxu0 0.0
    %593 = vmatprep.subr.mxu0 0.0
    %594 = vmatpush1.msra.mxu0 0.0
    %595 = vmatprep.subr.mxu0 0.0
    %596 = vmatpush1.msra.mxu0 0.0
    %597 = vmatprep.subr.mxu0 0.0
    %598 = vmatpush1.msra.mxu0 0.0
    %599 = vmatprep.subr.mxu0 0.0
    %600 = vmatpush1.msra.mxu0 0.0
    %601 = vmatprep.subr.mxu0 0.0
    %602 = vmatpush1.msra.mxu0 0.0
    %603 = vmatprep.subr.mxu0 0.0
    %604 = vmatpush1.msra.mxu0 0.0
    %605 = vmatprep.subr.mxu0 0.0
    %606 = vmatpush1.msra.mxu0 0.0
    %607 = vmatprep.subr.mxu0 0.0
    %608 = vmatpush1.msra.mxu0 0.0
    %609 = vmatprep.subr.mxu0 0.0
    %610 = vmatpush1.msra.mxu0 0.0
    %611 = vmatprep.subr.mxu0 0.0
    %612 = vmatpush1.msra.mxu0 0.0
    %613 = vmatprep.subr.mxu0 0.0
    %614 = vmatpush1.msra.mxu0 0.0
    %615 = vmatprep.subr.mxu0 0.0
    %616 = vmatpush1.msra.mxu0 %v333
    %617 = vmatprep.subr.mxu0 0.0
    %618 = vmatpush1.msra.mxu0 %v332
    %619 = vmatprep.subr.mxu0 0.0
    %620 = vmatpush1.msra.mxu0 %v331
    %621 = vmatprep.subr.mxu0 0.0
    %622 = vmatpush1.msra.mxu0 %v330
    %623 = vmatprep.subr.mxu0 0.0
    %624 = vmatpush2.msra.mxu0 0.0
    %625 = vmatprep.subr.mxu0 0.0
    %626 = vmatpush2.msra.mxu0 0.0
    %627 = vmatprep.subr.mxu0 0.0
    %628 = vmatpush2.msra.mxu0 0.0
    %629 = vmatprep.subr.mxu0 0.0
    %630 = vmatpush2.msra.mxu0 0.0
    %631 = vmatprep.subr.mxu0 0.0
    %632 = vmatpush2.msra.mxu0 0.0
    %633 = vmatprep.subr.mxu0 0.0
    %634 = vmatpush2.msra.mxu0 0.0
    %635 = vmatprep.subr.mxu0 0.0
    %636 = vmatpush2.msra.mxu0 0.0
    %637 = vmatprep.subr.mxu0 0.0
    %638 = vmatpush2.msra.mxu0 0.0
    %639 = vmatprep.subr.mxu0 0.0
    %640 = vmatpush2.msra.mxu0 0.0
    %641 = vmatprep.subr.mxu0 0.0
    %642 = vmatpush2.msra.mxu0 0.0
    %643 = vmatprep.subr.mxu0 0.0
    %644 = vmatpush2.msra.mxu0 0.0
    %645 = vmatprep.subr.mxu0 0.0
    %646 = vmatpush2.msra.mxu0 0.0
    %647 = vmatprep.subr.mxu0 0.0
    %648 = vmatpush2.msra.mxu0 0.0
    %649 = vmatprep.subr.mxu0 0.0
    %650 = vmatpush2.msra.mxu0 0.0
    %651 = vmatprep.subr.mxu0 0.0
    %652 = vmatpush2.msra.mxu0 0.0
    %653 = vmatprep.subr.mxu0 0.0
    %654 = vmatpush2.msra.mxu0 0.0
    %655 = vmatprep.mubr.f32.mxu0 0.0
    %656 = vmatmul.mubr.f32.gmra.mxu0 %v589
    %v657 = vpop.f32.mrf.mxu0
    %v658 = vadd.f32 0.0, %v657
    %v659 = vpop.f32.mrf.mxu0
    %660 = vdwg.mxu0
    %661 = vmatprep.subr.mxu0 0.0
    %662 = vmatpush1.msra.mxu0 0.0
    %663 = vmatprep.subr.mxu0 0.0
    %664 = vmatpush1.msra.mxu0 0.0
    %665 = vmatprep.subr.mxu0 0.0
    %666 = vmatpush1.msra.mxu0 0.0
    %667 = vmatprep.subr.mxu0 0.0
    %668 = vmatpush1.msra.mxu0 0.0
    %669 = vmatprep.subr.mxu0 0.0
    %670 = vmatpush1.msra.mxu0 0.0
    %671 = vmatprep.subr.mxu0 0.0
    %672 = vmatpush1.msra.mxu0 0.0
    %673 = vmatprep.subr.mxu0 0.0
    %674 = vmatpush1.msra.mxu0 0.0
    %675 = vmatprep.subr.mxu0 0.0
    %676 = vmatpush1.msra.mxu0 0.0
    %677 = vmatprep.subr.mxu0 0.0
    %678 = vmatpush1.msra.mxu0 0.0
    %679 = vmatprep.subr.mxu0 0.0
    %680 = vmatpush1.msra.mxu0 0.0
    %681 = vmatprep.subr.mxu0 0.0
    %682 = vmatpush1.msra.mxu0 0.0
    %683 = vmatprep.subr.mxu0 0.0
    %684 = vmatpush1.msra.mxu0 0.0
    %685 = vmatprep.subr.mxu0 0.0
    %686 = vmatpush1.msra.mxu0 %v337
    %687 = vmatprep.subr.mxu0 0.0
    %688 = vmatpush1.msra.mxu0 %v336
    %689 = vmatprep.subr.mxu0 0.0
    %690 = vmatpush1.msra.mxu0 %v335
    %691 = vmatprep.subr.mxu0 0.0
    %692 = vmatpush1.msra.mxu0 %v334
    %693 = vmatprep.subr.mxu0 0.0
    %694 = vmatpush2.msra.mxu0 0.0
    %695 = vmatprep.subr.mxu0 0.0
    %696 = vmatpush2.msra.mxu0 0.0
    %697 = vmatprep.subr.mxu0 0.0
    %698 = vmatpush2.msra.mxu0 0.0
    %699 = vmatprep.subr.mxu0 0.0
    %700 = vmatpush2.msra.mxu0 0.0
    %701 = vmatprep.subr.mxu0 0.0
    %702 = vmatpush2.msra.mxu0 0.0
    %703 = vmatprep.subr.mxu0 0.0
    %704 = vmatpush2.msra.mxu0 0.0
    %705 = vmatprep.subr.mxu0 0.0
    %706 = vmatpush2.msra.mxu0 0.0
    %707 = vmatprep.subr.mxu0 0.0
    %708 = vmatpush2.msra.mxu0 0.0
    %709 = vmatprep.subr.mxu0 0.0
    %710 = vmatpush2.msra.mxu0 0.0
    %711 = vmatprep.subr.mxu0 0.0
    %712 = vmatpush2.msra.mxu0 0.0
    %713 = vmatprep.subr.mxu0 0.0
    %714 = vmatpush2.msra.mxu0 0.0
    %715 = vmatprep.subr.mxu0 0.0
    %716 = vmatpush2.msra.mxu0 0.0
    %717 = vmatprep.subr.mxu0 0.0
    %718 = vmatpush2.msra.mxu0 0.0
    %719 = vmatprep.subr.mxu0 0.0
    %720 = vmatpush2.msra.mxu0 0.0
    %721 = vmatprep.subr.mxu0 0.0
    %722 = vmatpush2.msra.mxu0 0.0
    %723 = vmatprep.subr.mxu0 0.0
    %724 = vmatpush2.msra.mxu0 0.0
    %725 = vmatprep.mubr.f32.mxu0 0.0
    %726 = vmatmul.mubr.f32.gmra.mxu0 %v589
    %v727 = vpop.f32.mrf.mxu0
    %v728 = vadd.f32 0.0, %v727
    %v729 = vpop.f32.mrf.mxu0
    %730 = vdwg.mxu0
    %s731 = scalar_lea.vmem [#allocation3], 2
    %v732 = vld [vmem:[%s731] sm:$0x3]
    %v733 = vadd.f32 %v732, %v658
    %v734 = vxor.u32 %v733, 2147483648
    %v735 = vmul.f32 %v734, 1.442695
    %v736 = vpow.pop %v735
    %v737 = vadd.f32 %v736, 1.0
    %v738 = vrcp.pop %v737
    %v739 = vmul.f32 1.0, %v738
    %s740 = scalar_lea.vmem [#allocation4], 2
    %v741 = vld [vmem:[%s740] sm:$0x3]
    %v742 = vadd.f32 %v741, %v728
    %v743 = vxor.u32 %v742, 2147483648
    %v744 = vmul.f32 %v743, 1.442695
    %v745 = vpow.pop %v744
    %v746 = vadd.f32 %v745, 1.0
    %v747 = vrcp.pop %v746
    %v748 = vmul.f32 1.0, %v747
    %s749 = scalar_lea.vmem [#allocation5], 2
    %v750 = vld [vmem:[%s749] sm:$0x3]
    %751 = vmatprep.subr.mxu0 0.0
    %752 = vmatpush1.msra.mxu0 0.0
    %753 = vmatprep.subr.mxu0 0.0
    %754 = vmatpush1.msra.mxu0 0.0
    %755 = vmatprep.subr.mxu0 0.0
    %756 = vmatpush1.msra.mxu0 0.0
    %757 = vmatprep.subr.mxu0 0.0
    %758 = vmatpush1.msra.mxu0 0.0
    %759 = vmatprep.subr.mxu0 0.0
    %760 = vmatpush1.msra.mxu0 0.0
    %761 = vmatprep.subr.mxu0 0.0
    %762 = vmatpush1.msra.mxu0 0.0
    %763 = vmatprep.subr.mxu0 0.0
    %764 = vmatpush1.msra.mxu0 0.0
    %765 = vmatprep.subr.mxu0 0.0
    %766 = vmatpush1.msra.mxu0 0.0
    %767 = vmatprep.subr.mxu0 0.0
    %768 = vmatpush1.msra.mxu0 0.0
    %769 = vmatprep.subr.mxu0 0.0
    %770 = vmatpush1.msra.mxu0 0.0
    %771 = vmatprep.subr.mxu0 0.0
    %772 = vmatpush1.msra.mxu0 0.0
    %773 = vmatprep.subr.mxu0 0.0
    %774 = vmatpush1.msra.mxu0 0.0
    %775 = vmatprep.subr.mxu0 0.0
    %776 = vmatpush1.msra.mxu0 %v341
    %777 = vmatprep.subr.mxu0 0.0
    %778 = vmatpush1.msra.mxu0 %v340
    %779 = vmatprep.subr.mxu0 0.0
    %780 = vmatpush1.msra.mxu0 %v339
    %781 = vmatprep.subr.mxu0 0.0
    %782 = vmatpush1.msra.mxu0 %v338
    %783 = vmatprep.subr.mxu0 0.0
    %784 = vmatpush2.msra.mxu0 0.0
    %785 = vmatprep.subr.mxu0 0.0
    %786 = vmatpush2.msra.mxu0 0.0
    %787 = vmatprep.subr.mxu0 0.0
    %788 = vmatpush2.msra.mxu0 0.0
    %789 = vmatprep.subr.mxu0 0.0
    %790 = vmatpush2.msra.mxu0 0.0
    %791 = vmatprep.subr.mxu0 0.0
    %792 = vmatpush2.msra.mxu0 0.0
    %793 = vmatprep.subr.mxu0 0.0
    %794 = vmatpush2.msra.mxu0 0.0
    %795 = vmatprep.subr.mxu0 0.0
    %796 = vmatpush2.msra.mxu0 0.0
    %797 = vmatprep.subr.mxu0 0.0
    %798 = vmatpush2.msra.mxu0 0.0
    %799 = vmatprep.subr.mxu0 0.0
    %800 = vmatpush2.msra.mxu0 0.0
    %801 = vmatprep.subr.mxu0 0.0
    %802 = vmatpush2.msra.mxu0 0.0
    %803 = vmatprep.subr.mxu0 0.0
    %804 = vmatpush2.msra.mxu0 0.0
    %805 = vmatprep.subr.mxu0 0.0
    %806 = vmatpush2.msra.mxu0 0.0
    %807 = vmatprep.subr.mxu0 0.0
    %808 = vmatpush2.msra.mxu0 0.0
    %809 = vmatprep.subr.mxu0 0.0
    %810 = vmatpush2.msra.mxu0 0.0
    %811 = vmatprep.subr.mxu0 0.0
    %812 = vmatpush2.msra.mxu0 0.0
    %813 = vmatprep.subr.mxu0 0.0
    %814 = vmatpush2.msra.mxu0 0.0
    %815 = vmatprep.mubr.f32.mxu0 0.0
    %816 = vmatmul.mubr.f32.gmra.mxu0 %v589
    %v817 = vpop.f32.mrf.mxu0
    %v818 = vadd.f32 %v347, %v817
    %v819 = vpop.f32.mrf.mxu0
    %820 = vdwg.mxu0
    %v821 = vmul.f32 %v739, %v818
    %v822 = vadd.f32 %v750, %v821
    %v823 = vtanh.pop %v822
    %v824 = vsub.f32 1.0, %v748
    %v825 = vmul.f32 %v824, %v823
    %v826 = vmul.f32 %v748, %v585
    %v827 = vadd.f32 %v825, %v826
    %s828 = scalar_lea.vmem [#allocation2], 2
    %829 = vst.msk [vmem:[%s828] sm:$0x3] %vm586, %v827
    %v831 = vsel %vm70, %v827, 0
    %833 = vmatprep.subr.mxu0 0.0
    %834 = vmatpush1.msra.mxu0 0.0
    %835 = vmatprep.subr.mxu0 0.0
    %836 = vmatpush1.msra.mxu0 0.0
    %837 = vmatprep.subr.mxu0 0.0
    %838 = vmatpush1.msra.mxu0 0.0
    %839 = vmatprep.subr.mxu0 0.0
    %840 = vmatpush1.msra.mxu0 0.0
    %841 = vmatprep.subr.mxu0 0.0
    %842 = vmatpush1.msra.mxu0 0.0
    %843 = vmatprep.subr.mxu0 0.0
    %844 = vmatpush1.msra.mxu0 0.0
    %845 = vmatprep.subr.mxu0 0.0
    %846 = vmatpush1.msra.mxu0 0.0
    %847 = vmatprep.subr.mxu0 0.0
    %848 = vmatpush1.msra.mxu0 0.0
    %849 = vmatprep.subr.mxu0 0.0
    %850 = vmatpush1.msra.mxu0 0.0
    %851 = vmatprep.subr.mxu0 0.0
    %852 = vmatpush1.msra.mxu0 0.0
    %853 = vmatprep.subr.mxu0 0.0
    %854 = vmatpush1.msra.mxu0 0.0
    %855 = vmatprep.subr.mxu0 0.0
    %856 = vmatpush1.msra.mxu0 0.0
    %857 = vmatprep.subr.mxu0 0.0
    %858 = vmatpush1.msra.mxu0 %v333
    %859 = vmatprep.subr.mxu0 0.0
    %860 = vmatpush1.msra.mxu0 %v332
    %861 = vmatprep.subr.mxu0 0.0
    %862 = vmatpush1.msra.mxu0 %v331
    %863 = vmatprep.subr.mxu0 0.0
    %864 = vmatpush1.msra.mxu0 %v330
    %865 = vmatprep.subr.mxu0 0.0
    %866 = vmatpush2.msra.mxu0 0.0
    %867 = vmatprep.subr.mxu0 0.0
    %868 = vmatpush2.msra.mxu0 0.0
    %869 = vmatprep.subr.mxu0 0.0
    %870 = vmatpush2.msra.mxu0 0.0
    %871 = vmatprep.subr.mxu0 0.0
    %872 = vmatpush2.msra.mxu0 0.0
    %873 = vmatprep.subr.mxu0 0.0
    %874 = vmatpush2.msra.mxu0 0.0
    %875 = vmatprep.subr.mxu0 0.0
    %876 = vmatpush2.msra.mxu0 0.0
    %877 = vmatprep.subr.mxu0 0.0
    %878 = vmatpush2.msra.mxu0 0.0
    %879 = vmatprep.subr.mxu0 0.0
    %880 = vmatpush2.msra.mxu0 0.0
    %881 = vmatprep.subr.mxu0 0.0
    %882 = vmatpush2.msra.mxu0 0.0
    %883 = vmatprep.subr.mxu0 0.0
    %884 = vmatpush2.msra.mxu0 0.0
    %885 = vmatprep.subr.mxu0 0.0
    %886 = vmatpush2.msra.mxu0 0.0
    %887 = vmatprep.subr.mxu0 0.0
    %888 = vmatpush2.msra.mxu0 0.0
    %889 = vmatprep.subr.mxu0 0.0
    %890 = vmatpush2.msra.mxu0 0.0
    %891 = vmatprep.subr.mxu0 0.0
    %892 = vmatpush2.msra.mxu0 0.0
    %893 = vmatprep.subr.mxu0 0.0
    %894 = vmatpush2.msra.mxu0 0.0
    %895 = vmatprep.subr.mxu0 0.0
    %896 = vmatpush2.msra.mxu0 0.0
    %897 = vmatprep.mubr.f32.mxu0 0.0
    %898 = vmatmul.mubr.f32.gmra.mxu0 %v831
    %v899 = vpop.f32.mrf.mxu0
    %v900 = vadd.f32 0.0, %v899
    %v901 = vpop.f32.mrf.mxu0
    %902 = vdwg.mxu0
    %903 = vmatprep.subr.mxu0 0.0
    %904 = vmatpush1.msra.mxu0 0.0
    %905 = vmatprep.subr.mxu0 0.0
    %906 = vmatpush1.msra.mxu0 0.0
    %907 = vmatprep.subr.mxu0 0.0
    %908 = vmatpush1.msra.mxu0 0.0
    %909 = vmatprep.subr.mxu0 0.0
    %910 = vmatpush1.msra.mxu0 0.0
    %911 = vmatprep.subr.mxu0 0.0
    %912 = vmatpush1.msra.mxu0 0.0
    %913 = vmatprep.subr.mxu0 0.0
    %914 = vmatpush1.msra.mxu0 0.0
    %915 = vmatprep.subr.mxu0 0.0
    %916 = vmatpush1.msra.mxu0 0.0
    %917 = vmatprep.subr.mxu0 0.0
    %918 = vmatpush1.msra.mxu0 0.0
    %919 = vmatprep.subr.mxu0 0.0
    %920 = vmatpush1.msra.mxu0 0.0
    %921 = vmatprep.subr.mxu0 0.0
    %922 = vmatpush1.msra.mxu0 0.0
    %923 = vmatprep.subr.mxu0 0.0
    %924 = vmatpush1.msra.mxu0 0.0
    %925 = vmatprep.subr.mxu0 0.0
    %926 = vmatpush1.msra.mxu0 0.0
    %927 = vmatprep.subr.mxu0 0.0
    %928 = vmatpush1.msra.mxu0 %v337
    %929 = vmatprep.subr.mxu0 0.0
    %930 = vmatpush1.msra.mxu0 %v336
    %931 = vmatprep.subr.mxu0 0.0
    %932 = vmatpush1.msra.mxu0 %v335
    %933 = vmatprep.subr.mxu0 0.0
    %934 = vmatpush1.msra.mxu0 %v334
    %935 = vmatprep.subr.mxu0 0.0
    %936 = vmatpush2.msra.mxu0 0.0
    %937 = vmatprep.subr.mxu0 0.0
    %938 = vmatpush2.msra.mxu0 0.0
    %939 = vmatprep.subr.mxu0 0.0
    %940 = vmatpush2.msra.mxu0 0.0
    %941 = vmatprep.subr.mxu0 0.0
    %942 = vmatpush2.msra.mxu0 0.0
    %943 = vmatprep.subr.mxu0 0.0
    %944 = vmatpush2.msra.mxu0 0.0
    %945 = vmatprep.subr.mxu0 0.0
    %946 = vmatpush2.msra.mxu0 0.0
    %947 = vmatprep.subr.mxu0 0.0
    %948 = vmatpush2.msra.mxu0 0.0
    %949 = vmatprep.subr.mxu0 0.0
    %950 = vmatpush2.msra.mxu0 0.0
    %951 = vmatprep.subr.mxu0 0.0
    %952 = vmatpush2.msra.mxu0 0.0
    %953 = vmatprep.subr.mxu0 0.0
    %954 = vmatpush2.msra.mxu0 0.0
    %955 = vmatprep.subr.mxu0 0.0
    %956 = vmatpush2.msra.mxu0 0.0
    %957 = vmatprep.subr.mxu0 0.0
    %958 = vmatpush2.msra.mxu0 0.0
    %959 = vmatprep.subr.mxu0 0.0
    %960 = vmatpush2.msra.mxu0 0.0
    %961 = vmatprep.subr.mxu0 0.0
    %962 = vmatpush2.msra.mxu0 0.0
    %963 = vmatprep.subr.mxu0 0.0
    %964 = vmatpush2.msra.mxu0 0.0
    %965 = vmatprep.subr.mxu0 0.0
    %966 = vmatpush2.msra.mxu0 0.0
    %967 = vmatprep.mubr.f32.mxu0 0.0
    %968 = vmatmul.mubr.f32.gmra.mxu0 %v831
    %v969 = vpop.f32.mrf.mxu0
    %v970 = vadd.f32 0.0, %v969
    %v971 = vpop.f32.mrf.mxu0
    %972 = vdwg.mxu0
    %s973 = scalar_lea.vmem [#allocation3], 4
    %v974 = vld [vmem:[%s973] sm:$0x3]
    %v975 = vadd.f32 %v974, %v900
    %v976 = vxor.u32 %v975, 2147483648
    %v977 = vmul.f32 %v976, 1.442695
    %v978 = vpow.pop %v977
    %v979 = vadd.f32 %v978, 1.0
    %v980 = vrcp.pop %v979
    %v981 = vmul.f32 1.0, %v980
    %s982 = scalar_lea.vmem [#allocation4], 4
    %v983 = vld [vmem:[%s982] sm:$0x3]
    %v984 = vadd.f32 %v983, %v970
    %v985 = vxor.u32 %v984, 2147483648
    %v986 = vmul.f32 %v985, 1.442695
    %v987 = vpow.pop %v986
    %v988 = vadd.f32 %v987, 1.0
    %v989 = vrcp.pop %v988
    %v990 = vmul.f32 1.0, %v989
    %s991 = scalar_lea.vmem [#allocation5], 4
    %v992 = vld [vmem:[%s991] sm:$0x3]
    %993 = vmatprep.subr.mxu0 0.0
    %994 = vmatpush1.msra.mxu0 0.0
    %995 = vmatprep.subr.mxu0 0.0
    %996 = vmatpush1.msra.mxu0 0.0
    %997 = vmatprep.subr.mxu0 0.0
    %998 = vmatpush1.msra.mxu0 0.0
    %999 = vmatprep.subr.mxu0 0.0
    %1000 = vmatpush1.msra.mxu0 0.0
    %1001 = vmatprep.subr.mxu0 0.0
    %1002 = vmatpush1.msra.mxu0 0.0
    %1003 = vmatprep.subr.mxu0 0.0
    %1004 = vmatpush1.msra.mxu0 0.0
    %1005 = vmatprep.subr.mxu0 0.0
    %1006 = vmatpush1.msra.mxu0 0.0
    %1007 = vmatprep.subr.mxu0 0.0
    %1008 = vmatpush1.msra.mxu0 0.0
    %1009 = vmatprep.subr.mxu0 0.0
    %1010 = vmatpush1.msra.mxu0 0.0
    %1011 = vmatprep.subr.mxu0 0.0
    %1012 = vmatpush1.msra.mxu0 0.0
    %1013 = vmatprep.subr.mxu0 0.0
    %1014 = vmatpush1.msra.mxu0 0.0
    %1015 = vmatprep.subr.mxu0 0.0
    %1016 = vmatpush1.msra.mxu0 0.0
    %1017 = vmatprep.subr.mxu0 0.0
    %1018 = vmatpush1.msra.mxu0 %v341
    %1019 = vmatprep.subr.mxu0 0.0
    %1020 = vmatpush1.msra.mxu0 %v340
    %1021 = vmatprep.subr.mxu0 0.0
    %1022 = vmatpush1.msra.mxu0 %v339
    %1023 = vmatprep.subr.mxu0 0.0
    %1024 = vmatpush1.msra.mxu0 %v338
    %1025 = vmatprep.subr.mxu0 0.0
    %1026 = vmatpush2.msra.mxu0 0.0
    %1027 = vmatprep.subr.mxu0 0.0
    %1028 = vmatpush2.msra.mxu0 0.0
    %1029 = vmatprep.subr.mxu0 0.0
    %1030 = vmatpush2.msra.mxu0 0.0
    %1031 = vmatprep.subr.mxu0 0.0
    %1032 = vmatpush2.msra.mxu0 0.0
    %1033 = vmatprep.subr.mxu0 0.0
    %1034 = vmatpush2.msra.mxu0 0.0
    %1035 = vmatprep.subr.mxu0 0.0
    %1036 = vmatpush2.msra.mxu0 0.0
    %1037 = vmatprep.subr.mxu0 0.0
    %1038 = vmatpush2.msra.mxu0 0.0
    %1039 = vmatprep.subr.mxu0 0.0
    %1040 = vmatpush2.msra.mxu0 0.0
    %1041 = vmatprep.subr.mxu0 0.0
    %1042 = vmatpush2.msra.mxu0 0.0
    %1043 = vmatprep.subr.mxu0 0.0
    %1044 = vmatpush2.msra.mxu0 0.0
    %1045 = vmatprep.subr.mxu0 0.0
    %1046 = vmatpush2.msra.mxu0 0.0
    %1047 = vmatprep.subr.mxu0 0.0
    %1048 = vmatpush2.msra.mxu0 0.0
    %1049 = vmatprep.subr.mxu0 0.0
    %1050 = vmatpush2.msra.mxu0 0.0
    %1051 = vmatprep.subr.mxu0 0.0
    %1052 = vmatpush2.msra.mxu0 0.0
    %1053 = vmatprep.subr.mxu0 0.0
    %1054 = vmatpush2.msra.mxu0 0.0
    %1055 = vmatprep.subr.mxu0 0.0
    %1056 = vmatpush2.msra.mxu0 0.0
    %1057 = vmatprep.mubr.f32.mxu0 0.0
    %1058 = vmatmul.mubr.f32.gmra.mxu0 %v831
    %v1059 = vpop.f32.mrf.mxu0
    %v1060 = vadd.f32 %v347, %v1059
    %v1061 = vpop.f32.mrf.mxu0
    %1062 = vdwg.mxu0
    %v1063 = vmul.f32 %v981, %v1060
    %v1064 = vadd.f32 %v992, %v1063
    %v1065 = vtanh.pop %v1064
    %v1066 = vsub.f32 1.0, %v990
    %v1067 = vmul.f32 %v1066, %v1065
    %v1068 = vmul.f32 %v990, %v827
    %v1069 = vadd.f32 %v1067, %v1068
    %s1070 = scalar_lea.vmem [#allocation2], 4
    %1071 = vst.msk [vmem:[%s1070] sm:$0x3] %vm586, %v1069
    %v1073 = vsel %vm70, %v1069, 0
    %1075 = vmatprep.subr.mxu0 0.0
    %1076 = vmatpush1.msra.mxu0 0.0
    %1077 = vmatprep.subr.mxu0 0.0
    %1078 = vmatpush1.msra.mxu0 0.0
    %1079 = vmatprep.subr.mxu0 0.0
    %1080 = vmatpush1.msra.mxu0 0.0
    %1081 = vmatprep.subr.mxu0 0.0
    %1082 = vmatpush1.msra.mxu0 0.0
    %1083 = vmatprep.subr.mxu0 0.0
    %1084 = vmatpush1.msra.mxu0 0.0
    %1085 = vmatprep.subr.mxu0 0.0
    %1086 = vmatpush1.msra.mxu0 0.0
    %1087 = vmatprep.subr.mxu0 0.0
    %1088 = vmatpush1.msra.mxu0 0.0
    %1089 = vmatprep.subr.mxu0 0.0
    %1090 = vmatpush1.msra.mxu0 0.0
    %1091 = vmatprep.subr.mxu0 0.0
    %1092 = vmatpush1.msra.mxu0 0.0
    %1093 = vmatprep.subr.mxu0 0.0
    %1094 = vmatpush1.msra.mxu0 0.0
    %1095 = vmatprep.subr.mxu0 0.0
    %1096 = vmatpush1.msra.mxu0 0.0
    %1097 = vmatprep.subr.mxu0 0.0
    %1098 = vmatpush1.msra.mxu0 0.0
    %1099 = vmatprep.subr.mxu0 0.0
    %1100 = vmatpush1.msra.mxu0 %v333
    %1101 = vmatprep.subr.mxu0 0.0
    %1102 = vmatpush1.msra.mxu0 %v332
    %1103 = vmatprep.subr.mxu0 0.0
    %1104 = vmatpush1.msra.mxu0 %v331
    %1105 = vmatprep.subr.mxu0 0.0
    %1106 = vmatpush1.msra.mxu0 %v330
    %1107 = vmatprep.subr.mxu0 0.0
    %1108 = vmatpush2.msra.mxu0 0.0
    %1109 = vmatprep.subr.mxu0 0.0
    %1110 = vmatpush2.msra.mxu0 0.0
    %1111 = vmatprep.subr.mxu0 0.0
    %1112 = vmatpush2.msra.mxu0 0.0
    %1113 = vmatprep.subr.mxu0 0.0
    %1114 = vmatpush2.msra.mxu0 0.0
    %1115 = vmatprep.subr.mxu0 0.0
    %1116 = vmatpush2.msra.mxu0 0.0
    %1117 = vmatprep.subr.mxu0 0.0
    %1118 = vmatpush2.msra.mxu0 0.0
    %1119 = vmatprep.subr.mxu0 0.0
    %1120 = vmatpush2.msra.mxu0 0.0
    %1121 = vmatprep.subr.mxu0 0.0
    %1122 = vmatpush2.msra.mxu0 0.0
    %1123 = vmatprep.subr.mxu0 0.0
    %1124 = vmatpush2.msra.mxu0 0.0
    %1125 = vmatprep.subr.mxu0 0.0
    %1126 = vmatpush2.msra.mxu0 0.0
    %1127 = vmatprep.subr.mxu0 0.0
    %1128 = vmatpush2.msra.mxu0 0.0
    %1129 = vmatprep.subr.mxu0 0.0
    %1130 = vmatpush2.msra.mxu0 0.0
    %1131 = vmatprep.subr.mxu0 0.0
    %1132 = vmatpush2.msra.mxu0 0.0
    %1133 = vmatprep.subr.mxu0 0.0
    %1134 = vmatpush2.msra.mxu0 0.0
    %1135 = vmatprep.subr.mxu0 0.0
    %1136 = vmatpush2.msra.mxu0 0.0
    %1137 = vmatprep.subr.mxu0 0.0
    %1138 = vmatpush2.msra.mxu0 0.0
    %1139 = vmatprep.mubr.f32.mxu0 0.0
    %1140 = vmatmul.mubr.f32.gmra.mxu0 %v1073
    %v1141 = vpop.f32.mrf.mxu0
    %v1142 = vadd.f32 0.0, %v1141
    %v1143 = vpop.f32.mrf.mxu0
    %1144 = vdwg.mxu0
    %1145 = vmatprep.subr.mxu0 0.0
    %1146 = vmatpush1.msra.mxu0 0.0
    %1147 = vmatprep.subr.mxu0 0.0
    %1148 = vmatpush1.msra.mxu0 0.0
    %1149 = vmatprep.subr.mxu0 0.0
    %1150 = vmatpush1.msra.mxu0 0.0
    %1151 = vmatprep.subr.mxu0 0.0
    %1152 = vmatpush1.msra.mxu0 0.0
    %1153 = vmatprep.subr.mxu0 0.0
    %1154 = vmatpush1.msra.mxu0 0.0
    %1155 = vmatprep.subr.mxu0 0.0
    %1156 = vmatpush1.msra.mxu0 0.0
    %1157 = vmatprep.subr.mxu0 0.0
    %1158 = vmatpush1.msra.mxu0 0.0
    %1159 = vmatprep.subr.mxu0 0.0
    %1160 = vmatpush1.msra.mxu0 0.0
    %1161 = vmatprep.subr.mxu0 0.0
    %1162 = vmatpush1.msra.mxu0 0.0
    %1163 = vmatprep.subr.mxu0 0.0
    %1164 = vmatpush1.msra.mxu0 0.0
    %1165 = vmatprep.subr.mxu0 0.0
    %1166 = vmatpush1.msra.mxu0 0.0
    %1167 = vmatprep.subr.mxu0 0.0
    %1168 = vmatpush1.msra.mxu0 0.0
    %1169 = vmatprep.subr.mxu0 0.0
    %1170 = vmatpush1.msra.mxu0 %v337
    %1171 = vmatprep.subr.mxu0 0.0
    %1172 = vmatpush1.msra.mxu0 %v336
    %1173 = vmatprep.subr.mxu0 0.0
    %1174 = vmatpush1.msra.mxu0 %v335
    %1175 = vmatprep.subr.mxu0 0.0
    %1176 = vmatpush1.msra.mxu0 %v334
    %1177 = vmatprep.subr.mxu0 0.0
    %1178 = vmatpush2.msra.mxu0 0.0
    %1179 = vmatprep.subr.mxu0 0.0
    %1180 = vmatpush2.msra.mxu0 0.0
    %1181 = vmatprep.subr.mxu0 0.0
    %1182 = vmatpush2.msra.mxu0 0.0
    %1183 = vmatprep.subr.mxu0 0.0
    %1184 = vmatpush2.msra.mxu0 0.0
    %1185 = vmatprep.subr.mxu0 0.0
    %1186 = vmatpush2.msra.mxu0 0.0
    %1187 = vmatprep.subr.mxu0 0.0
    %1188 = vmatpush2.msra.mxu0 0.0
    %1189 = vmatprep.subr.mxu0 0.0
    %1190 = vmatpush2.msra.mxu0 0.0
    %1191 = vmatprep.subr.mxu0 0.0
    %1192 = vmatpush2.msra.mxu0 0.0
    %1193 = vmatprep.subr.mxu0 0.0
    %1194 = vmatpush2.msra.mxu0 0.0
    %1195 = vmatprep.subr.mxu0 0.0
    %1196 = vmatpush2.msra.mxu0 0.0
    %1197 = vmatprep.subr.mxu0 0.0
    %1198 = vmatpush2.msra.mxu0 0.0
    %1199 = vmatprep.subr.mxu0 0.0
    %1200 = vmatpush2.msra.mxu0 0.0
    %1201 = vmatprep.subr.mxu0 0.0
    %1202 = vmatpush2.msra.mxu0 0.0
    %1203 = vmatprep.subr.mxu0 0.0
    %1204 = vmatpush2.msra.mxu0 0.0
    %1205 = vmatprep.subr.mxu0 0.0
    %1206 = vmatpush2.msra.mxu0 0.0
    %1207 = vmatprep.subr.mxu0 0.0
    %1208 = vmatpush2.msra.mxu0 0.0
    %1209 = vmatprep.mubr.f32.mxu0 0.0
    %1210 = vmatmul.mubr.f32.gmra.mxu0 %v1073
    %v1211 = vpop.f32.mrf.mxu0
    %v1212 = vadd.f32 0.0, %v1211
    %v1213 = vpop.f32.mrf.mxu0
    %1214 = vdwg.mxu0
    %s1215 = scalar_lea.vmem [#allocation3], 6
    %v1216 = vld [vmem:[%s1215] sm:$0x3]
    %v1217 = vadd.f32 %v1216, %v1142
    %v1218 = vxor.u32 %v1217, 2147483648
    %v1219 = vmul.f32 %v1218, 1.442695
    %v1220 = vpow.pop %v1219
    %v1221 = vadd.f32 %v1220, 1.0
    %v1222 = vrcp.pop %v1221
    %v1223 = vmul.f32 1.0, %v1222
    %s1224 = scalar_lea.vmem [#allocation4], 6
    %v1225 = vld [vmem:[%s1224] sm:$0x3]
    %v1226 = vadd.f32 %v1225, %v1212
    %v1227 = vxor.u32 %v1226, 2147483648
    %v1228 = vmul.f32 %v1227, 1.442695
    %v1229 = vpow.pop %v1228
    %v1230 = vadd.f32 %v1229, 1.0
    %v1231 = vrcp.pop %v1230
    %v1232 = vmul.f32 1.0, %v1231
    %s1233 = scalar_lea.vmem [#allocation5], 6
    %v1234 = vld [vmem:[%s1233] sm:$0x3]
    %1235 = vmatprep.subr.mxu0 0.0
    %1236 = vmatpush1.msra.mxu0 0.0
    %1237 = vmatprep.subr.mxu0 0.0
    %1238 = vmatpush1.msra.mxu0 0.0
    %1239 = vmatprep.subr.mxu0 0.0
    %1240 = vmatpush1.msra.mxu0 0.0
    %1241 = vmatprep.subr.mxu0 0.0
    %1242 = vmatpush1.msra.mxu0 0.0
    %1243 = vmatprep.subr.mxu0 0.0
    %1244 = vmatpush1.msra.mxu0 0.0
    %1245 = vmatprep.subr.mxu0 0.0
    %1246 = vmatpush1.msra.mxu0 0.0
    %1247 = vmatprep.subr.mxu0 0.0
    %1248 = vmatpush1.msra.mxu0 0.0
    %1249 = vmatprep.subr.mxu0 0.0
    %1250 = vmatpush1.msra.mxu0 0.0
    %1251 = vmatprep.subr.mxu0 0.0
    %1252 = vmatpush1.msra.mxu0 0.0
    %1253 = vmatprep.subr.mxu0 0.0
    %1254 = vmatpush1.msra.mxu0 0.0
    %1255 = vmatprep.subr.mxu0 0.0
    %1256 = vmatpush1.msra.mxu0 0.0
    %1257 = vmatprep.subr.mxu0 0.0
    %1258 = vmatpush1.msra.mxu0 0.0
    %1259 = vmatprep.subr.mxu0 0.0
    %1260 = vmatpush1.msra.mxu0 %v341
    %1261 = vmatprep.subr.mxu0 0.0
    %1262 = vmatpush1.msra.mxu0 %v340
    %1263 = vmatprep.subr.mxu0 0.0
    %1264 = vmatpush1.msra.mxu0 %v339
    %1265 = vmatprep.subr.mxu0 0.0
    %1266 = vmatpush1.msra.mxu0 %v338
    %1267 = vmatprep.subr.mxu0 0.0
    %1268 = vmatpush2.msra.mxu0 0.0
    %1269 = vmatprep.subr.mxu0 0.0
    %1270 = vmatpush2.msra.mxu0 0.0
    %1271 = vmatprep.subr.mxu0 0.0
    %1272 = vmatpush2.msra.mxu0 0.0
    %1273 = vmatprep.subr.mxu0 0.0
    %1274 = vmatpush2.msra.mxu0 0.0
    %1275 = vmatprep.subr.mxu0 0.0
    %1276 = vmatpush2.msra.mxu0 0.0
    %1277 = vmatprep.subr.mxu0 0.0
    %1278 = vmatpush2.msra.mxu0 0.0
    %1279 = vmatprep.subr.mxu0 0.0
    %1280 = vmatpush2.msra.mxu0 0.0
    %1281 = vmatprep.subr.mxu0 0.0
    %1282 = vmatpush2.msra.mxu0 0.0
    %1283 = vmatprep.subr.mxu0 0.0
    %1284 = vmatpush2.msra.mxu0 0.0
    %1285 = vmatprep.subr.mxu0 0.0
    %1286 = vmatpush2.msra.mxu0 0.0
    %1287 = vmatprep.subr.mxu0 0.0
    %1288 = vmatpush2.msra.mxu0 0.0
    %1289 = vmatprep.subr.mxu0 0.0
    %1290 = vmatpush2.msra.mxu0 0.0
    %1291 = vmatprep.subr.mxu0 0.0
    %1292 = vmatpush2.msra.mxu0 0.0
    %1293 = vmatprep.subr.mxu0 0.0
    %1294 = vmatpush2.msra.mxu0 0.0
    %1295 = vmatprep.subr.mxu0 0.0
    %1296 = vmatpush2.msra.mxu0 0.0
    %1297 = vmatprep.subr.mxu0 0.0
    %1298 = vmatpush2.msra.mxu0 0.0
    %1299 = vmatprep.mubr.f32.mxu0 0.0
    %1300 = vmatmul.mubr.f32.gmra.mxu0 %v1073
    %v1301 = vpop.f32.mrf.mxu0
    %v1302 = vadd.f32 %v347, %v1301
    %v1303 = vpop.f32.mrf.mxu0
    %1304 = vdwg.mxu0
    %v1305 = vmul.f32 %v1223, %v1302
    %v1306 = vadd.f32 %v1234, %v1305
    %v1307 = vtanh.pop %v1306
    %v1308 = vsub.f32 1.0, %v1232
    %v1309 = vmul.f32 %v1308, %v1307
    %v1310 = vmul.f32 %v1232, %v1069
    %v1311 = vadd.f32 %v1309, %v1310
    %s1312 = scalar_lea.vmem [#allocation2], 6
    %1313 = vst.msk [vmem:[%s1312] sm:$0x3] %vm586, %v1311
    %v1315 = vsel %vm70, %v1311, 0
    %1317 = vmatprep.subr.mxu0 0.0
    %1318 = vmatpush1.msra.mxu0 0.0
    %1319 = vmatprep.subr.mxu0 0.0
    %1320 = vmatpush1.msra.mxu0 0.0
    %1321 = vmatprep.subr.mxu0 0.0
    %1322 = vmatpush1.msra.mxu0 0.0
    %1323 = vmatprep.subr.mxu0 0.0
    %1324 = vmatpush1.msra.mxu0 0.0
    %1325 = vmatprep.subr.mxu0 0.0
    %1326 = vmatpush1.msra.mxu0 0.0
    %1327 = vmatprep.subr.mxu0 0.0
    %1328 = vmatpush1.msra.mxu0 0.0
    %1329 = vmatprep.subr.mxu0 0.0
    %1330 = vmatpush1.msra.mxu0 0.0
    %1331 = vmatprep.subr.mxu0 0.0
    %1332 = vmatpush1.msra.mxu0 0.0
    %1333 = vmatprep.subr.mxu0 0.0
    %1334 = vmatpush1.msra.mxu0 0.0
    %1335 = vmatprep.subr.mxu0 0.0
    %1336 = vmatpush1.msra.mxu0 0.0
    %1337 = vmatprep.subr.mxu0 0.0
    %1338 = vmatpush1.msra.mxu0 0.0
    %1339 = vmatprep.subr.mxu0 0.0
    %1340 = vmatpush1.msra.mxu0 0.0
    %1341 = vmatprep.subr.mxu0 0.0
    %1342 = vmatpush1.msra.mxu0 %v333
    %1343 = vmatprep.subr.mxu0 0.0
    %1344 = vmatpush1.msra.mxu0 %v332
    %1345 = vmatprep.subr.mxu0 0.0
    %1346 = vmatpush1.msra.mxu0 %v331
    %1347 = vmatprep.subr.mxu0 0.0
    %1348 = vmatpush1.msra.mxu0 %v330
    %1349 = vmatprep.subr.mxu0 0.0
    %1350 = vmatpush2.msra.mxu0 0.0
    %1351 = vmatprep.subr.mxu0 0.0
    %1352 = vmatpush2.msra.mxu0 0.0
    %1353 = vmatprep.subr.mxu0 0.0
    %1354 = vmatpush2.msra.mxu0 0.0
    %1355 = vmatprep.subr.mxu0 0.0
    %1356 = vmatpush2.msra.mxu0 0.0
    %1357 = vmatprep.subr.mxu0 0.0
    %1358 = vmatpush2.msra.mxu0 0.0
    %1359 = vmatprep.subr.mxu0 0.0
    %1360 = vmatpush2.msra.mxu0 0.0
    %1361 = vmatprep.subr.mxu0 0.0
    %1362 = vmatpush2.msra.mxu0 0.0
    %1363 = vmatprep.subr.mxu0 0.0
    %1364 = vmatpush2.msra.mxu0 0.0
    %1365 = vmatprep.subr.mxu0 0.0
    %1366 = vmatpush2.msra.mxu0 0.0
    %1367 = vmatprep.subr.mxu0 0.0
    %1368 = vmatpush2.msra.mxu0 0.0
    %1369 = vmatprep.subr.mxu0 0.0
    %1370 = vmatpush2.msra.mxu0 0.0
    %1371 = vmatprep.subr.mxu0 0.0
    %1372 = vmatpush2.msra.mxu0 0.0
    %1373 = vmatprep.subr.mxu0 0.0
    %1374 = vmatpush2.msra.mxu0 0.0
    %1375 = vmatprep.subr.mxu0 0.0
    %1376 = vmatpush2.msra.mxu0 0.0
    %1377 = vmatprep.subr.mxu0 0.0
    %1378 = vmatpush2.msra.mxu0 0.0
    %1379 = vmatprep.subr.mxu0 0.0
    %1380 = vmatpush2.msra.mxu0 0.0
    %1381 = vmatprep.mubr.f32.mxu0 0.0
    %1382 = vmatmul.mubr.f32.gmra.mxu0 %v1315
    %v1383 = vpop.f32.mrf.mxu0
    %v1384 = vadd.f32 0.0, %v1383
    %v1385 = vpop.f32.mrf.mxu0
    %1386 = vdwg.mxu0
    %1387 = vmatprep.subr.mxu0 0.0
    %1388 = vmatpush1.msra.mxu0 0.0
    %1389 = vmatprep.subr.mxu0 0.0
    %1390 = vmatpush1.msra.mxu0 0.0
    %1391 = vmatprep.subr.mxu0 0.0
    %1392 = vmatpush1.msra.mxu0 0.0
    %1393 = vmatprep.subr.mxu0 0.0
    %1394 = vmatpush1.msra.mxu0 0.0
    %1395 = vmatprep.subr.mxu0 0.0
    %1396 = vmatpush1.msra.mxu0 0.0
    %1397 = vmatprep.subr.mxu0 0.0
    %1398 = vmatpush1.msra.mxu0 0.0
    %1399 = vmatprep.subr.mxu0 0.0
    %1400 = vmatpush1.msra.mxu0 0.0
    %1401 = vmatprep.subr.mxu0 0.0
    %1402 = vmatpush1.msra.mxu0 0.0
    %1403 = vmatprep.subr.mxu0 0.0
    %1404 = vmatpush1.msra.mxu0 0.0
    %1405 = vmatprep.subr.mxu0 0.0
    %1406 = vmatpush1.msra.mxu0 0.0
    %1407 = vmatprep.subr.mxu0 0.0
    %1408 = vmatpush1.msra.mxu0 0.0
    %1409 = vmatprep.subr.mxu0 0.0
    %1410 = vmatpush1.msra.mxu0 0.0
    %1411 = vmatprep.subr.mxu0 0.0
    %1412 = vmatpush1.msra.mxu0 %v337
    %1413 = vmatprep.subr.mxu0 0.0
    %1414 = vmatpush1.msra.mxu0 %v336
    %1415 = vmatprep.subr.mxu0 0.0
    %1416 = vmatpush1.msra.mxu0 %v335
    %1417 = vmatprep.subr.mxu0 0.0
    %1418 = vmatpush1.msra.mxu0 %v334
    %1419 = vmatprep.subr.mxu0 0.0
    %1420 = vmatpush2.msra.mxu0 0.0
    %1421 = vmatprep.subr.mxu0 0.0
    %1422 = vmatpush2.msra.mxu0 0.0
    %1423 = vmatprep.subr.mxu0 0.0
    %1424 = vmatpush2.msra.mxu0 0.0
    %1425 = vmatprep.subr.mxu0 0.0
    %1426 = vmatpush2.msra.mxu0 0.0
    %1427 = vmatprep.subr.mxu0 0.0
    %1428 = vmatpush2.msra.mxu0 0.0
    %1429 = vmatprep.subr.mxu0 0.0
    %1430 = vmatpush2.msra.mxu0 0.0
    %1431 = vmatprep.subr.mxu0 0.0
    %1432 = vmatpush2.msra.mxu0 0.0
    %1433 = vmatprep.subr.mxu0 0.0
    %1434 = vmatpush2.msra.mxu0 0.0
    %1435 = vmatprep.subr.mxu0 0.0
    %1436 = vmatpush2.msra.mxu0 0.0
    %1437 = vmatprep.subr.mxu0 0.0
    %1438 = vmatpush2.msra.mxu0 0.0
    %1439 = vmatprep.subr.mxu0 0.0
    %1440 = vmatpush2.msra.mxu0 0.0
    %1441 = vmatprep.subr.mxu0 0.0
    %1442 = vmatpush2.msra.mxu0 0.0
    %1443 = vmatprep.subr.mxu0 0.0
    %1444 = vmatpush2.msra.mxu0 0.0
    %1445 = vmatprep.subr.mxu0 0.0
    %1446 = vmatpush2.msra.mxu0 0.0
    %1447 = vmatprep.subr.mxu0 0.0
    %1448 = vmatpush2.msra.mxu0 0.0
    %1449 = vmatprep.subr.mxu0 0.0
    %1450 = vmatpush2.msra.mxu0 0.0
    %1451 = vmatprep.mubr.f32.mxu0 0.0
    %1452 = vmatmul.mubr.f32.gmra.mxu0 %v1315
    %v1453 = vpop.f32.mrf.mxu0
    %v1454 = vadd.f32 0.0, %v1453
    %v1455 = vpop.f32.mrf.mxu0
    %1456 = vdwg.mxu0
    %s1457 = scalar_lea.vmem [#allocation3], 8
    %v1458 = vld [vmem:[%s1457] sm:$0x3]
    %v1459 = vadd.f32 %v1458, %v1384
    %v1460 = vxor.u32 %v1459, 2147483648
    %v1461 = vmul.f32 %v1460, 1.442695
    %v1462 = vpow.pop %v1461
    %v1463 = vadd.f32 %v1462, 1.0
    %v1464 = vrcp.pop %v1463
    %v1465 = vmul.f32 1.0, %v1464
    %s1466 = scalar_lea.vmem [#allocation4], 8
    %v1467 = vld [vmem:[%s1466] sm:$0x3]
    %v1468 = vadd.f32 %v1467, %v1454
    %v1469 = vxor.u32 %v1468, 2147483648
    %v1470 = vmul.f32 %v1469, 1.442695
    %v1471 = vpow.pop %v1470
    %v1472 = vadd.f32 %v1471, 1.0
    %v1473 = vrcp.pop %v1472
    %v1474 = vmul.f32 1.0, %v1473
    %s1475 = scalar_lea.vmem [#allocation5], 8
    %v1476 = vld [vmem:[%s1475] sm:$0x3]
    %1477 = vmatprep.subr.mxu0 0.0
    %1478 = vmatpush1.msra.mxu0 0.0
    %1479 = vmatprep.subr.mxu0 0.0
    %1480 = vmatpush1.msra.mxu0 0.0
    %1481 = vmatprep.subr.mxu0 0.0
    %1482 = vmatpush1.msra.mxu0 0.0
    %1483 = vmatprep.subr.mxu0 0.0
    %1484 = vmatpush1.msra.mxu0 0.0
    %1485 = vmatprep.subr.mxu0 0.0
    %1486 = vmatpush1.msra.mxu0 0.0
    %1487 = vmatprep.subr.mxu0 0.0
    %1488 = vmatpush1.msra.mxu0 0.0
    %1489 = vmatprep.subr.mxu0 0.0
    %1490 = vmatpush1.msra.mxu0 0.0
    %1491 = vmatprep.subr.mxu0 0.0
    %1492 = vmatpush1.msra.mxu0 0.0
    %1493 = vmatprep.subr.mxu0 0.0
    %1494 = vmatpush1.msra.mxu0 0.0
    %1495 = vmatprep.subr.mxu0 0.0
    %1496 = vmatpush1.msra.mxu0 0.0
    %1497 = vmatprep.subr.mxu0 0.0
    %1498 = vmatpush1.msra.mxu0 0.0
    %1499 = vmatprep.subr.mxu0 0.0
    %1500 = vmatpush1.msra.mxu0 0.0
    %1501 = vmatprep.subr.mxu0 0.0
    %1502 = vmatpush1.msra.mxu0 %v341
    %1503 = vmatprep.subr.mxu0 0.0
    %1504 = vmatpush1.msra.mxu0 %v340
    %1505 = vmatprep.subr.mxu0 0.0
    %1506 = vmatpush1.msra.mxu0 %v339
    %1507 = vmatprep.subr.mxu0 0.0
    %1508 = vmatpush1.msra.mxu0 %v338
    %1509 = vmatprep.subr.mxu0 0.0
    %1510 = vmatpush2.msra.mxu0 0.0
    %1511 = vmatprep.subr.mxu0 0.0
    %1512 = vmatpush2.msra.mxu0 0.0
    %1513 = vmatprep.subr.mxu0 0.0
    %1514 = vmatpush2.msra.mxu0 0.0
    %1515 = vmatprep.subr.mxu0 0.0
    %1516 = vmatpush2.msra.mxu0 0.0
    %1517 = vmatprep.subr.mxu0 0.0
    %1518 = vmatpush2.msra.mxu0 0.0
    %1519 = vmatprep.subr.mxu0 0.0
    %1520 = vmatpush2.msra.mxu0 0.0
    %1521 = vmatprep.subr.mxu0 0.0
    %1522 = vmatpush2.msra.mxu0 0.0
    %1523 = vmatprep.subr.mxu0 0.0
    %1524 = vmatpush2.msra.mxu0 0.0
    %1525 = vmatprep.subr.mxu0 0.0
    %1526 = vmatpush2.msra.mxu0 0.0
    %1527 = vmatprep.subr.mxu0 0.0
    %1528 = vmatpush2.msra.mxu0 0.0
    %1529 = vmatprep.subr.mxu0 0.0
    %1530 = vmatpush2.msra.mxu0 0.0
    %1531 = vmatprep.subr.mxu0 0.0
    %1532 = vmatpush2.msra.mxu0 0.0
    %1533 = vmatprep.subr.mxu0 0.0
    %1534 = vmatpush2.msra.mxu0 0.0
    %1535 = vmatprep.subr.mxu0 0.0
    %1536 = vmatpush2.msra.mxu0 0.0
    %1537 = vmatprep.subr.mxu0 0.0
    %1538 = vmatpush2.msra.mxu0 0.0
    %1539 = vmatprep.subr.mxu0 0.0
    %1540 = vmatpush2.msra.mxu0 0.0
    %1541 = vmatprep.mubr.f32.mxu0 0.0
    %1542 = vmatmul.mubr.f32.gmra.mxu0 %v1315
    %v1543 = vpop.f32.mrf.mxu0
    %v1544 = vadd.f32 %v347, %v1543
    %v1545 = vpop.f32.mrf.mxu0
    %1546 = vdwg.mxu0
    %v1547 = vmul.f32 %v1465, %v1544
    %v1548 = vadd.f32 %v1476, %v1547
    %v1549 = vtanh.pop %v1548
    %v1550 = vsub.f32 1.0, %v1474
    %v1551 = vmul.f32 %v1550, %v1549
    %v1552 = vmul.f32 %v1474, %v1311
    %v1553 = vadd.f32 %v1551, %v1552
    %s1554 = scalar_lea.vmem [#allocation2], 8
    %1555 = vst.msk [vmem:[%s1554] sm:$0x3] %vm586, %v1553
    %v1557 = vsel %vm70, %v1553, 0
    %1559 = vmatprep.subr.mxu0 0.0
    %1560 = vmatpush1.msra.mxu0 0.0
    %1561 = vmatprep.subr.mxu0 0.0
    %1562 = vmatpush1.msra.mxu0 0.0
    %1563 = vmatprep.subr.mxu0 0.0
    %1564 = vmatpush1.msra.mxu0 0.0
    %1565 = vmatprep.subr.mxu0 0.0
    %1566 = vmatpush1.msra.mxu0 0.0
    %1567 = vmatprep.subr.mxu0 0.0
    %1568 = vmatpush1.msra.mxu0 0.0
    %1569 = vmatprep.subr.mxu0 0.0
    %1570 = vmatpush1.msra.mxu0 0.0
    %1571 = vmatprep.subr.mxu0 0.0
    %1572 = vmatpush1.msra.mxu0 0.0
    %1573 = vmatprep.subr.mxu0 0.0
    %1574 = vmatpush1.msra.mxu0 0.0
    %1575 = vmatprep.subr.mxu0 0.0
    %1576 = vmatpush1.msra.mxu0 0.0
    %1577 = vmatprep.subr.mxu0 0.0
    %1578 = vmatpush1.msra.mxu0 0.0
    %1579 = vmatprep.subr.mxu0 0.0
    %1580 = vmatpush1.msra.mxu0 0.0
    %1581 = vmatprep.subr.mxu0 0.0
    %1582 = vmatpush1.msra.mxu0 0.0
    %1583 = vmatprep.subr.mxu0 0.0
    %1584 = vmatpush1.msra.mxu0 %v333
    %1585 = vmatprep.subr.mxu0 0.0
    %1586 = vmatpush1.msra.mxu0 %v332
    %1587 = vmatprep.subr.mxu0 0.0
    %1588 = vmatpush1.msra.mxu0 %v331
    %1589 = vmatprep.subr.mxu0 0.0
    %1590 = vmatpush1.msra.mxu0 %v330
    %1591 = vmatprep.subr.mxu0 0.0
    %1592 = vmatpush2.msra.mxu0 0.0
    %1593 = vmatprep.subr.mxu0 0.0
    %1594 = vmatpush2.msra.mxu0 0.0
    %1595 = vmatprep.subr.mxu0 0.0
    %1596 = vmatpush2.msra.mxu0 0.0
    %1597 = vmatprep.subr.mxu0 0.0
    %1598 = vmatpush2.msra.mxu0 0.0
    %1599 = vmatprep.subr.mxu0 0.0
    %1600 = vmatpush2.msra.mxu0 0.0
    %1601 = vmatprep.subr.mxu0 0.0
    %1602 = vmatpush2.msra.mxu0 0.0
    %1603 = vmatprep.subr.mxu0 0.0
    %1604 = vmatpush2.msra.mxu0 0.0
    %1605 = vmatprep.subr.mxu0 0.0
    %1606 = vmatpush2.msra.mxu0 0.0
    %1607 = vmatprep.subr.mxu0 0.0
    %1608 = vmatpush2.msra.mxu0 0.0
    %1609 = vmatprep.subr.mxu0 0.0
    %1610 = vmatpush2.msra.mxu0 0.0
    %1611 = vmatprep.subr.mxu0 0.0
    %1612 = vmatpush2.msra.mxu0 0.0
    %1613 = vmatprep.subr.mxu0 0.0
    %1614 = vmatpush2.msra.mxu0 0.0
    %1615 = vmatprep.subr.mxu0 0.0
    %1616 = vmatpush2.msra.mxu0 0.0
    %1617 = vmatprep.subr.mxu0 0.0
    %1618 = vmatpush2.msra.mxu0 0.0
    %1619 = vmatprep.subr.mxu0 0.0
    %1620 = vmatpush2.msra.mxu0 0.0
    %1621 = vmatprep.subr.mxu0 0.0
    %1622 = vmatpush2.msra.mxu0 0.0
    %1623 = vmatprep.mubr.f32.mxu0 0.0
    %1624 = vmatmul.mubr.f32.gmra.mxu0 %v1557
    %v1625 = vpop.f32.mrf.mxu0
    %v1626 = vadd.f32 0.0, %v1625
    %v1627 = vpop.f32.mrf.mxu0
    %1628 = vdwg.mxu0
    %1629 = vmatprep.subr.mxu0 0.0
    %1630 = vmatpush1.msra.mxu0 0.0
    %1631 = vmatprep.subr.mxu0 0.0
    %1632 = vmatpush1.msra.mxu0 0.0
    %1633 = vmatprep.subr.mxu0 0.0
    %1634 = vmatpush1.msra.mxu0 0.0
    %1635 = vmatprep.subr.mxu0 0.0
    %1636 = vmatpush1.msra.mxu0 0.0
    %1637 = vmatprep.subr.mxu0 0.0
    %1638 = vmatpush1.msra.mxu0 0.0
    %1639 = vmatprep.subr.mxu0 0.0
    %1640 = vmatpush1.msra.mxu0 0.0
    %1641 = vmatprep.subr.mxu0 0.0
    %1642 = vmatpush1.msra.mxu0 0.0
    %1643 = vmatprep.subr.mxu0 0.0
    %1644 = vmatpush1.msra.mxu0 0.0
    %1645 = vmatprep.subr.mxu0 0.0
    %1646 = vmatpush1.msra.mxu0 0.0
    %1647 = vmatprep.subr.mxu0 0.0
    %1648 = vmatpush1.msra.mxu0 0.0
    %1649 = vmatprep.subr.mxu0 0.0
    %1650 = vmatpush1.msra.mxu0 0.0
    %1651 = vmatprep.subr.mxu0 0.0
    %1652 = vmatpush1.msra.mxu0 0.0
    %1653 = vmatprep.subr.mxu0 0.0
    %1654 = vmatpush1.msra.mxu0 %v337
    %1655 = vmatprep.subr.mxu0 0.0
    %1656 = vmatpush1.msra.mxu0 %v336
    %1657 = vmatprep.subr.mxu0 0.0
    %1658 = vmatpush1.msra.mxu0 %v335
    %1659 = vmatprep.subr.mxu0 0.0
    %1660 = vmatpush1.msra.mxu0 %v334
    %1661 = vmatprep.subr.mxu0 0.0
    %1662 = vmatpush2.msra.mxu0 0.0
    %1663 = vmatprep.subr.mxu0 0.0
    %1664 = vmatpush2.msra.mxu0 0.0
    %1665 = vmatprep.subr.mxu0 0.0
    %1666 = vmatpush2.msra.mxu0 0.0
    %1667 = vmatprep.subr.mxu0 0.0
    %1668 = vmatpush2.msra.mxu0 0.0
    %1669 = vmatprep.subr.mxu0 0.0
    %1670 = vmatpush2.msra.mxu0 0.0
    %1671 = vmatprep.subr.mxu0 0.0
    %1672 = vmatpush2.msra.mxu0 0.0
    %1673 = vmatprep.subr.mxu0 0.0
    %1674 = vmatpush2.msra.mxu0 0.0
    %1675 = vmatprep.subr.mxu0 0.0
    %1676 = vmatpush2.msra.mxu0 0.0
    %1677 = vmatprep.subr.mxu0 0.0
    %1678 = vmatpush2.msra.mxu0 0.0
    %1679 = vmatprep.subr.mxu0 0.0
    %1680 = vmatpush2.msra.mxu0 0.0
    %1681 = vmatprep.subr.mxu0 0.0
    %1682 = vmatpush2.msra.mxu0 0.0
    %1683 = vmatprep.subr.mxu0 0.0
    %1684 = vmatpush2.msra.mxu0 0.0
    %1685 = vmatprep.subr.mxu0 0.0
    %1686 = vmatpush2.msra.mxu0 0.0
    %1687 = vmatprep.subr.mxu0 0.0
    %1688 = vmatpush2.msra.mxu0 0.0
    %1689 = vmatprep.subr.mxu0 0.0
    %1690 = vmatpush2.msra.mxu0 0.0
    %1691 = vmatprep.subr.mxu0 0.0
    %1692 = vmatpush2.msra.mxu0 0.0
    %1693 = vmatprep.mubr.f32.mxu0 0.0
    %1694 = vmatmul.mubr.f32.gmra.mxu0 %v1557
    %v1695 = vpop.f32.mrf.mxu0
    %v1696 = vadd.f32 0.0, %v1695
    %v1697 = vpop.f32.mrf.mxu0
    %1698 = vdwg.mxu0
    %s1699 = scalar_lea.vmem [#allocation3], 10
    %v1700 = vld [vmem:[%s1699] sm:$0x3]
    %v1701 = vadd.f32 %v1700, %v1626
    %v1702 = vxor.u32 %v1701, 2147483648
    %v1703 = vmul.f32 %v1702, 1.442695
    %v1704 = vpow.pop %v1703
    %v1705 = vadd.f32 %v1704, 1.0
    %v1706 = vrcp.pop %v1705
    %v1707 = vmul.f32 1.0, %v1706
    %s1708 = scalar_lea.vmem [#allocation4], 10
    %v1709 = vld [vmem:[%s1708] sm:$0x3]
    %v1710 = vadd.f32 %v1709, %v1696
    %v1711 = vxor.u32 %v1710, 2147483648
    %v1712 = vmul.f32 %v1711, 1.442695
    %v1713 = vpow.pop %v1712
    %v1714 = vadd.f32 %v1713, 1.0
    %v1715 = vrcp.pop %v1714
    %v1716 = vmul.f32 1.0, %v1715
    %s1717 = scalar_lea.vmem [#allocation5], 10
    %v1718 = vld [vmem:[%s1717] sm:$0x3]
    %1719 = vmatprep.subr.mxu0 0.0
    %1720 = vmatpush1.msra.mxu0 0.0
    %1721 = vmatprep.subr.mxu0 0.0
    %1722 = vmatpush1.msra.mxu0 0.0
    %1723 = vmatprep.subr.mxu0 0.0
    %1724 = vmatpush1.msra.mxu0 0.0
    %1725 = vmatprep.subr.mxu0 0.0
    %1726 = vmatpush1.msra.mxu0 0.0
    %1727 = vmatprep.subr.mxu0 0.0
    %1728 = vmatpush1.msra.mxu0 0.0
    %1729 = vmatprep.subr.mxu0 0.0
    %1730 = vmatpush1.msra.mxu0 0.0
    %1731 = vmatprep.subr.mxu0 0.0
    %1732 = vmatpush1.msra.mxu0 0.0
    %1733 = vmatprep.subr.mxu0 0.0
    %1734 = vmatpush1.msra.mxu0 0.0
    %1735 = vmatprep.subr.mxu0 0.0
    %1736 = vmatpush1.msra.mxu0 0.0
    %1737 = vmatprep.subr.mxu0 0.0
    %1738 = vmatpush1.msra.mxu0 0.0
    %1739 = vmatprep.subr.mxu0 0.0
    %1740 = vmatpush1.msra.mxu0 0.0
    %1741 = vmatprep.subr.mxu0 0.0
    %1742 = vmatpush1.msra.mxu0 0.0
    %1743 = vmatprep.subr.mxu0 0.0
    %1744 = vmatpush1.msra.mxu0 %v341
    %1745 = vmatprep.subr.mxu0 0.0
    %1746 = vmatpush1.msra.mxu0 %v340
    %1747 = vmatprep.subr.mxu0 0.0
    %1748 = vmatpush1.msra.mxu0 %v339
    %1749 = vmatprep.subr.mxu0 0.0
    %1750 = vmatpush1.msra.mxu0 %v338
    %1751 = vmatprep.subr.mxu0 0.0
    %1752 = vmatpush2.msra.mxu0 0.0
    %1753 = vmatprep.subr.mxu0 0.0
    %1754 = vmatpush2.msra.mxu0 0.0
    %1755 = vmatprep.subr.mxu0 0.0
    %1756 = vmatpush2.msra.mxu0 0.0
    %1757 = vmatprep.subr.mxu0 0.0
    %1758 = vmatpush2.msra.mxu0 0.0
    %1759 = vmatprep.subr.mxu0 0.0
    %1760 = vmatpush2.msra.mxu0 0.0
    %1761 = vmatprep.subr.mxu0 0.0
    %1762 = vmatpush2.msra.mxu0 0.0
    %1763 = vmatprep.subr.mxu0 0.0
    %1764 = vmatpush2.msra.mxu0 0.0
    %1765 = vmatprep.subr.mxu0 0.0
    %1766 = vmatpush2.msra.mxu0 0.0
    %1767 = vmatprep.subr.mxu0 0.0
    %1768 = vmatpush2.msra.mxu0 0.0
    %1769 = vmatprep.subr.mxu0 0.0
    %1770 = vmatpush2.msra.mxu0 0.0
    %1771 = vmatprep.subr.mxu0 0.0
    %1772 = vmatpush2.msra.mxu0 0.0
    %1773 = vmatprep.subr.mxu0 0.0
    %1774 = vmatpush2.msra.mxu0 0.0
    %1775 = vmatprep.subr.mxu0 0.0
    %1776 = vmatpush2.msra.mxu0 0.0
    %1777 = vmatprep.subr.mxu0 0.0
    %1778 = vmatpush2.msra.mxu0 0.0
    %1779 = vmatprep.subr.mxu0 0.0
    %1780 = vmatpush2.msra.mxu0 0.0
    %1781 = vmatprep.subr.mxu0 0.0
    %1782 = vmatpush2.msra.mxu0 0.0
    %1783 = vmatprep.mubr.f32.mxu0 0.0
    %1784 = vmatmul.mubr.f32.gmra.mxu0 %v1557
    %v1785 = vpop.f32.mrf.mxu0
    %v1786 = vadd.f32 %v347, %v1785
    %v1787 = vpop.f32.mrf.mxu0
    %1788 = vdwg.mxu0
    %v1789 = vmul.f32 %v1707, %v1786
    %v1790 = vadd.f32 %v1718, %v1789
    %v1791 = vtanh.pop %v1790
    %v1792 = vsub.f32 1.0, %v1716
    %v1793 = vmul.f32 %v1792, %v1791
    %v1794 = vmul.f32 %v1716, %v1553
    %v1795 = vadd.f32 %v1793, %v1794
    %s1796 = scalar_lea.vmem [#allocation2], 10
    %1797 = vst.msk [vmem:[%s1796] sm:$0x3] %vm586, %v1795
    %v1799 = vsel %vm70, %v1795, 0
    %1801 = vmatprep.subr.mxu0 0.0
    %1802 = vmatpush1.msra.mxu0 0.0
    %1803 = vmatprep.subr.mxu0 0.0
    %1804 = vmatpush1.msra.mxu0 0.0
    %1805 = vmatprep.subr.mxu0 0.0
    %1806 = vmatpush1.msra.mxu0 0.0
    %1807 = vmatprep.subr.mxu0 0.0
    %1808 = vmatpush1.msra.mxu0 0.0
    %1809 = vmatprep.subr.mxu0 0.0
    %1810 = vmatpush1.msra.mxu0 0.0
    %1811 = vmatprep.subr.mxu0 0.0
    %1812 = vmatpush1.msra.mxu0 0.0
    %1813 = vmatprep.subr.mxu0 0.0
    %1814 = vmatpush1.msra.mxu0 0.0
    %1815 = vmatprep.subr.mxu0 0.0
    %1816 = vmatpush1.msra.mxu0 0.0
    %1817 = vmatprep.subr.mxu0 0.0
    %1818 = vmatpush1.msra.mxu0 0.0
    %1819 = vmatprep.subr.mxu0 0.0
    %1820 = vmatpush1.msra.mxu0 0.0
    %1821 = vmatprep.subr.mxu0 0.0
    %1822 = vmatpush1.msra.mxu0 0.0
    %1823 = vmatprep.subr.mxu0 0.0
    %1824 = vmatpush1.msra.mxu0 0.0
    %1825 = vmatprep.subr.mxu0 0.0
    %1826 = vmatpush1.msra.mxu0 %v333
    %1827 = vmatprep.subr.mxu0 0.0
    %1828 = vmatpush1.msra.mxu0 %v332
    %1829 = vmatprep.subr.mxu0 0.0
    %1830 = vmatpush1.msra.mxu0 %v331
    %1831 = vmatprep.subr.mxu0 0.0
    %1832 = vmatpush1.msra.mxu0 %v330
    %1833 = vmatprep.subr.mxu0 0.0
    %1834 = vmatpush2.msra.mxu0 0.0
    %1835 = vmatprep.subr.mxu0 0.0
    %1836 = vmatpush2.msra.mxu0 0.0
    %1837 = vmatprep.subr.mxu0 0.0
    %1838 = vmatpush2.msra.mxu0 0.0
    %1839 = vmatprep.subr.mxu0 0.0
    %1840 = vmatpush2.msra.mxu0 0.0
    %1841 = vmatprep.subr.mxu0 0.0
    %1842 = vmatpush2.msra.mxu0 0.0
    %1843 = vmatprep.subr.mxu0 0.0
    %1844 = vmatpush2.msra.mxu0 0.0
    %1845 = vmatprep.subr.mxu0 0.0
    %1846 = vmatpush2.msra.mxu0 0.0
    %1847 = vmatprep.subr.mxu0 0.0
    %1848 = vmatpush2.msra.mxu0 0.0
    %1849 = vmatprep.subr.mxu0 0.0
    %1850 = vmatpush2.msra.mxu0 0.0
    %1851 = vmatprep.subr.mxu0 0.0
    %1852 = vmatpush2.msra.mxu0 0.0
    %1853 = vmatprep.subr.mxu0 0.0
    %1854 = vmatpush2.msra.mxu0 0.0
    %1855 = vmatprep.subr.mxu0 0.0
    %1856 = vmatpush2.msra.mxu0 0.0
    %1857 = vmatprep.subr.mxu0 0.0
    %1858 = vmatpush2.msra.mxu0 0.0
    %1859 = vmatprep.subr.mxu0 0.0
    %1860 = vmatpush2.msra.mxu0 0.0
    %1861 = vmatprep.subr.mxu0 0.0
    %1862 = vmatpush2.msra.mxu0 0.0
    %1863 = vmatprep.subr.mxu0 0.0
    %1864 = vmatpush2.msra.mxu0 0.0
    %1865 = vmatprep.mubr.f32.mxu0 0.0
    %1866 = vmatmul.mubr.f32.gmra.mxu0 %v1799
    %v1867 = vpop.f32.mrf.mxu0
    %v1868 = vadd.f32 0.0, %v1867
    %v1869 = vpop.f32.mrf.mxu0
    %1870 = vdwg.mxu0
    %1871 = vmatprep.subr.mxu0 0.0
    %1872 = vmatpush1.msra.mxu0 0.0
    %1873 = vmatprep.subr.mxu0 0.0
    %1874 = vmatpush1.msra.mxu0 0.0
    %1875 = vmatprep.subr.mxu0 0.0
    %1876 = vmatpush1.msra.mxu0 0.0
    %1877 = vmatprep.subr.mxu0 0.0
    %1878 = vmatpush1.msra.mxu0 0.0
    %1879 = vmatprep.subr.mxu0 0.0
    %1880 = vmatpush1.msra.mxu0 0.0
    %1881 = vmatprep.subr.mxu0 0.0
    %1882 = vmatpush1.msra.mxu0 0.0
    %1883 = vmatprep.subr.mxu0 0.0
    %1884 = vmatpush1.msra.mxu0 0.0
    %1885 = vmatprep.subr.mxu0 0.0
    %1886 = vmatpush1.msra.mxu0 0.0
    %1887 = vmatprep.subr.mxu0 0.0
    %1888 = vmatpush1.msra.mxu0 0.0
    %1889 = vmatprep.subr.mxu0 0.0
    %1890 = vmatpush1.msra.mxu0 0.0
    %1891 = vmatprep.subr.mxu0 0.0
    %1892 = vmatpush1.msra.mxu0 0.0
    %1893 = vmatprep.subr.mxu0 0.0
    %1894 = vmatpush1.msra.mxu0 0.0
    %1895 = vmatprep.subr.mxu0 0.0
    %1896 = vmatpush1.msra.mxu0 %v337
    %1897 = vmatprep.subr.mxu0 0.0
    %1898 = vmatpush1.msra.mxu0 %v336
    %1899 = vmatprep.subr.mxu0 0.0
    %1900 = vmatpush1.msra.mxu0 %v335
    %1901 = vmatprep.subr.mxu0 0.0
    %1902 = vmatpush1.msra.mxu0 %v334
    %1903 = vmatprep.subr.mxu0 0.0
    %1904 = vmatpush2.msra.mxu0 0.0
    %1905 = vmatprep.subr.mxu0 0.0
    %1906 = vmatpush2.msra.mxu0 0.0
    %1907 = vmatprep.subr.mxu0 0.0
    %1908 = vmatpush2.msra.mxu0 0.0
    %1909 = vmatprep.subr.mxu0 0.0
    %1910 = vmatpush2.msra.mxu0 0.0
    %1911 = vmatprep.subr.mxu0 0.0
    %1912 = vmatpush2.msra.mxu0 0.0
    %1913 = vmatprep.subr.mxu0 0.0
    %1914 = vmatpush2.msra.mxu0 0.0
    %1915 = vmatprep.subr.mxu0 0.0
    %1916 = vmatpush2.msra.mxu0 0.0
    %1917 = vmatprep.subr.mxu0 0.0
    %1918 = vmatpush2.msra.mxu0 0.0
    %1919 = vmatprep.subr.mxu0 0.0
    %1920 = vmatpush2.msra.mxu0 0.0
    %1921 = vmatprep.subr.mxu0 0.0
    %1922 = vmatpush2.msra.mxu0 0.0
    %1923 = vmatprep.subr.mxu0 0.0
    %1924 = vmatpush2.msra.mxu0 0.0
    %1925 = vmatprep.subr.mxu0 0.0
    %1926 = vmatpush2.msra.mxu0 0.0
    %1927 = vmatprep.subr.mxu0 0.0
    %1928 = vmatpush2.msra.mxu0 0.0
    %1929 = vmatprep.subr.mxu0 0.0
    %1930 = vmatpush2.msra.mxu0 0.0
    %1931 = vmatprep.subr.mxu0 0.0
    %1932 = vmatpush2.msra.mxu0 0.0
    %1933 = vmatprep.subr.mxu0 0.0
    %1934 = vmatpush2.msra.mxu0 0.0
    %1935 = vmatprep.mubr.f32.mxu0 0.0
    %1936 = vmatmul.mubr.f32.gmra.mxu0 %v1799
    %v1937 = vpop.f32.mrf.mxu0
    %v1938 = vadd.f32 0.0, %v1937
    %v1939 = vpop.f32.mrf.mxu0
    %1940 = vdwg.mxu0
    %s1941 = scalar_lea.vmem [#allocation3], 12
    %v1942 = vld [vmem:[%s1941] sm:$0x3]
    %v1943 = vadd.f32 %v1942, %v1868
    %v1944 = vxor.u32 %v1943, 2147483648
    %v1945 = vmul.f32 %v1944, 1.442695
    %v1946 = vpow.pop %v1945
    %v1947 = vadd.f32 %v1946, 1.0
    %v1948 = vrcp.pop %v1947
    %v1949 = vmul.f32 1.0, %v1948
    %s1950 = scalar_lea.vmem [#allocation4], 12
    %v1951 = vld [vmem:[%s1950] sm:$0x3]
    %v1952 = vadd.f32 %v1951, %v1938
    %v1953 = vxor.u32 %v1952, 2147483648
    %v1954 = vmul.f32 %v1953, 1.442695
    %v1955 = vpow.pop %v1954
    %v1956 = vadd.f32 %v1955, 1.0
    %v1957 = vrcp.pop %v1956
    %v1958 = vmul.f32 1.0, %v1957
    %s1959 = scalar_lea.vmem [#allocation5], 12
    %v1960 = vld [vmem:[%s1959] sm:$0x3]
    %1961 = vmatprep.subr.mxu0 0.0
    %1962 = vmatpush1.msra.mxu0 0.0
    %1963 = vmatprep.subr.mxu0 0.0
    %1964 = vmatpush1.msra.mxu0 0.0
    %1965 = vmatprep.subr.mxu0 0.0
    %1966 = vmatpush1.msra.mxu0 0.0
    %1967 = vmatprep.subr.mxu0 0.0
    %1968 = vmatpush1.msra.mxu0 0.0
    %1969 = vmatprep.subr.mxu0 0.0
    %1970 = vmatpush1.msra.mxu0 0.0
    %1971 = vmatprep.subr.mxu0 0.0
    %1972 = vmatpush1.msra.mxu0 0.0
    %1973 = vmatprep.subr.mxu0 0.0
    %1974 = vmatpush1.msra.mxu0 0.0
    %1975 = vmatprep.subr.mxu0 0.0
    %1976 = vmatpush1.msra.mxu0 0.0
    %1977 = vmatprep.subr.mxu0 0.0
    %1978 = vmatpush1.msra.mxu0 0.0
    %1979 = vmatprep.subr.mxu0 0.0
    %1980 = vmatpush1.msra.mxu0 0.0
    %1981 = vmatprep.subr.mxu0 0.0
    %1982 = vmatpush1.msra.mxu0 0.0
    %1983 = vmatprep.subr.mxu0 0.0
    %1984 = vmatpush1.msra.mxu0 0.0
    %1985 = vmatprep.subr.mxu0 0.0
    %1986 = vmatpush1.msra.mxu0 %v341
    %1987 = vmatprep.subr.mxu0 0.0
    %1988 = vmatpush1.msra.mxu0 %v340
    %1989 = vmatprep.subr.mxu0 0.0
    %1990 = vmatpush1.msra.mxu0 %v339
    %1991 = vmatprep.subr.mxu0 0.0
    %1992 = vmatpush1.msra.mxu0 %v338
    %1993 = vmatprep.subr.mxu0 0.0
    %1994 = vmatpush2.msra.mxu0 0.0
    %1995 = vmatprep.subr.mxu0 0.0
    %1996 = vmatpush2.msra.mxu0 0.0
    %1997 = vmatprep.subr.mxu0 0.0
    %1998 = vmatpush2.msra.mxu0 0.0
    %1999 = vmatprep.subr.mxu0 0.0
    %2000 = vmatpush2.msra.mxu0 0.0
    %2001 = vmatprep.subr.mxu0 0.0
    %2002 = vmatpush2.msra.mxu0 0.0
    %2003 = vmatprep.subr.mxu0 0.0
    %2004 = vmatpush2.msra.mxu0 0.0
    %2005 = vmatprep.subr.mxu0 0.0
    %2006 = vmatpush2.msra.mxu0 0.0
    %2007 = vmatprep.subr.mxu0 0.0
    %2008 = vmatpush2.msra.mxu0 0.0
    %2009 = vmatprep.subr.mxu0 0.0
    %2010 = vmatpush2.msra.mxu0 0.0
    %2011 = vmatprep.subr.mxu0 0.0
    %2012 = vmatpush2.msra.mxu0 0.0
    %2013 = vmatprep.subr.mxu0 0.0
    %2014 = vmatpush2.msra.mxu0 0.0
    %2015 = vmatprep.subr.mxu0 0.0
    %2016 = vmatpush2.msra.mxu0 0.0
    %2017 = vmatprep.subr.mxu0 0.0
    %2018 = vmatpush2.msra.mxu0 0.0
    %2019 = vmatprep.subr.mxu0 0.0
    %2020 = vmatpush2.msra.mxu0 0.0
    %2021 = vmatprep.subr.mxu0 0.0
    %2022 = vmatpush2.msra.mxu0 0.0
    %2023 = vmatprep.subr.mxu0 0.0
    %2024 = vmatpush2.msra.mxu0 0.0
    %2025 = vmatprep.mubr.f32.mxu0 0.0
    %2026 = vmatmul.mubr.f32.gmra.mxu0 %v1799
    %v2027 = vpop.f32.mrf.mxu0
    %v2028 = vadd.f32 %v347, %v2027
    %v2029 = vpop.f32.mrf.mxu0
    %2030 = vdwg.mxu0
    %v2031 = vmul.f32 %v1949, %v2028
    %v2032 = vadd.f32 %v1960, %v2031
    %v2033 = vtanh.pop %v2032
    %v2034 = vsub.f32 1.0, %v1958
    %v2035 = vmul.f32 %v2034, %v2033
    %v2036 = vmul.f32 %v1958, %v1795
    %v2037 = vadd.f32 %v2035, %v2036
    %s2038 = scalar_lea.vmem [#allocation2], 12
    %2039 = vst.msk [vmem:[%s2038] sm:$0x3] %vm586, %v2037
    %v2041 = vsel %vm70, %v2037, 0
    %2043 = vmatprep.subr.mxu0 0.0
    %2044 = vmatpush1.msra.mxu0 0.0
    %2045 = vmatprep.subr.mxu0 0.0
    %2046 = vmatpush1.msra.mxu0 0.0
    %2047 = vmatprep.subr.mxu0 0.0
    %2048 = vmatpush1.msra.mxu0 0.0
    %2049 = vmatprep.subr.mxu0 0.0
    %2050 = vmatpush1.msra.mxu0 0.0
    %2051 = vmatprep.subr.mxu0 0.0
    %2052 = vmatpush1.msra.mxu0 0.0
    %2053 = vmatprep.subr.mxu0 0.0
    %2054 = vmatpush1.msra.mxu0 0.0
    %2055 = vmatprep.subr.mxu0 0.0
    %2056 = vmatpush1.msra.mxu0 0.0
    %2057 = vmatprep.subr.mxu0 0.0
    %2058 = vmatpush1.msra.mxu0 0.0
    %2059 = vmatprep.subr.mxu0 0.0
    %2060 = vmatpush1.msra.mxu0 0.0
    %2061 = vmatprep.subr.mxu0 0.0
    %2062 = vmatpush1.msra.mxu0 0.0
    %2063 = vmatprep.subr.mxu0 0.0
    %2064 = vmatpush1.msra.mxu0 0.0
    %2065 = vmatprep.subr.mxu0 0.0
    %2066 = vmatpush1.msra.mxu0 0.0
    %2067 = vmatprep.subr.mxu0 0.0
    %2068 = vmatpush1.msra.mxu0 %v333
    %2069 = vmatprep.subr.mxu0 0.0
    %2070 = vmatpush1.msra.mxu0 %v332
    %2071 = vmatprep.subr.mxu0 0.0
    %2072 = vmatpush1.msra.mxu0 %v331
    %2073 = vmatprep.subr.mxu0 0.0
    %2074 = vmatpush1.msra.mxu0 %v330
    %2075 = vmatprep.subr.mxu0 0.0
    %2076 = vmatpush2.msra.mxu0 0.0
    %2077 = vmatprep.subr.mxu0 0.0
    %2078 = vmatpush2.msra.mxu0 0.0
    %2079 = vmatprep.subr.mxu0 0.0
    %2080 = vmatpush2.msra.mxu0 0.0
    %2081 = vmatprep.subr.mxu0 0.0
    %2082 = vmatpush2.msra.mxu0 0.0
    %2083 = vmatprep.subr.mxu0 0.0
    %2084 = vmatpush2.msra.mxu0 0.0
    %2085 = vmatprep.subr.mxu0 0.0
    %2086 = vmatpush2.msra.mxu0 0.0
    %2087 = vmatprep.subr.mxu0 0.0
    %2088 = vmatpush2.msra.mxu0 0.0
    %2089 = vmatprep.subr.mxu0 0.0
    %2090 = vmatpush2.msra.mxu0 0.0
    %2091 = vmatprep.subr.mxu0 0.0
    %2092 = vmatpush2.msra.mxu0 0.0
    %2093 = vmatprep.subr.mxu0 0.0
    %2094 = vmatpush2.msra.mxu0 0.0
    %2095 = vmatprep.subr.mxu0 0.0
    %2096 = vmatpush2.msra.mxu0 0.0
    %2097 = vmatprep.subr.mxu0 0.0
    %2098 = vmatpush2.msra.mxu0 0.0
    %2099 = vmatprep.subr.mxu0 0.0
    %2100 = vmatpush2.msra.mxu0 0.0
    %2101 = vmatprep.subr.mxu0 0.0
    %2102 = vmatpush2.msra.mxu0 0.0
    %2103 = vmatprep.subr.mxu0 0.0
    %2104 = vmatpush2.msra.mxu0 0.0
    %2105 = vmatprep.subr.mxu0 0.0
    %2106 = vmatpush2.msra.mxu0 0.0
    %2107 = vmatprep.mubr.f32.mxu0 0.0
    %2108 = vmatmul.mubr.f32.gmra.mxu0 %v2041
    %v2109 = vpop.f32.mrf.mxu0
    %v2110 = vadd.f32 0.0, %v2109
    %v2111 = vpop.f32.mrf.mxu0
    %2112 = vdwg.mxu0
    %2113 = vmatprep.subr.mxu0 0.0
    %2114 = vmatpush1.msra.mxu0 0.0
    %2115 = vmatprep.subr.mxu0 0.0
    %2116 = vmatpush1.msra.mxu0 0.0
    %2117 = vmatprep.subr.mxu0 0.0
    %2118 = vmatpush1.msra.mxu0 0.0
    %2119 = vmatprep.subr.mxu0 0.0
    %2120 = vmatpush1.msra.mxu0 0.0
    %2121 = vmatprep.subr.mxu0 0.0
    %2122 = vmatpush1.msra.mxu0 0.0
    %2123 = vmatprep.subr.mxu0 0.0
    %2124 = vmatpush1.msra.mxu0 0.0
    %2125 = vmatprep.subr.mxu0 0.0
    %2126 = vmatpush1.msra.mxu0 0.0
    %2127 = vmatprep.subr.mxu0 0.0
    %2128 = vmatpush1.msra.mxu0 0.0
    %2129 = vmatprep.subr.mxu0 0.0
    %2130 = vmatpush1.msra.mxu0 0.0
    %2131 = vmatprep.subr.mxu0 0.0
    %2132 = vmatpush1.msra.mxu0 0.0
    %2133 = vmatprep.subr.mxu0 0.0
    %2134 = vmatpush1.msra.mxu0 0.0
    %2135 = vmatprep.subr.mxu0 0.0
    %2136 = vmatpush1.msra.mxu0 0.0
    %2137 = vmatprep.subr.mxu0 0.0
    %2138 = vmatpush1.msra.mxu0 %v337
    %2139 = vmatprep.subr.mxu0 0.0
    %2140 = vmatpush1.msra.mxu0 %v336
    %2141 = vmatprep.subr.mxu0 0.0
    %2142 = vmatpush1.msra.mxu0 %v335
    %2143 = vmatprep.subr.mxu0 0.0
    %2144 = vmatpush1.msra.mxu0 %v334
    %2145 = vmatprep.subr.mxu0 0.0
    %2146 = vmatpush2.msra.mxu0 0.0
    %2147 = vmatprep.subr.mxu0 0.0
    %2148 = vmatpush2.msra.mxu0 0.0
    %2149 = vmatprep.subr.mxu0 0.0
    %2150 = vmatpush2.msra.mxu0 0.0
    %2151 = vmatprep.subr.mxu0 0.0
    %2152 = vmatpush2.msra.mxu0 0.0
    %2153 = vmatprep.subr.mxu0 0.0
    %2154 = vmatpush2.msra.mxu0 0.0
    %2155 = vmatprep.subr.mxu0 0.0
    %2156 = vmatpush2.msra.mxu0 0.0
    %2157 = vmatprep.subr.mxu0 0.0
    %2158 = vmatpush2.msra.mxu0 0.0
    %2159 = vmatprep.subr.mxu0 0.0
    %2160 = vmatpush2.msra.mxu0 0.0
    %2161 = vmatprep.subr.mxu0 0.0
    %2162 = vmatpush2.msra.mxu0 0.0
    %2163 = vmatprep.subr.mxu0 0.0
    %2164 = vmatpush2.msra.mxu0 0.0
    %2165 = vmatprep.subr.mxu0 0.0
    %2166 = vmatpush2.msra.mxu0 0.0
    %2167 = vmatprep.subr.mxu0 0.0
    %2168 = vmatpush2.msra.mxu0 0.0
    %2169 = vmatprep.subr.mxu0 0.0
    %2170 = vmatpush2.msra.mxu0 0.0
    %2171 = vmatprep.subr.mxu0 0.0
    %2172 = vmatpush2.msra.mxu0 0.0
    %2173 = vmatprep.subr.mxu0 0.0
    %2174 = vmatpush2.msra.mxu0 0.0
    %2175 = vmatprep.subr.mxu0 0.0
    %2176 = vmatpush2.msra.mxu0 0.0
    %2177 = vmatprep.mubr.f32.mxu0 0.0
    %2178 = vmatmul.mubr.f32.gmra.mxu0 %v2041
    %v2179 = vpop.f32.mrf.mxu0
    %v2180 = vadd.f32 0.0, %v2179
    %v2181 = vpop.f32.mrf.mxu0
    %2182 = vdwg.mxu0
    %s2183 = scalar_lea.vmem [#allocation3], 14
    %v2184 = vld [vmem:[%s2183] sm:$0x3]
    %v2185 = vadd.f32 %v2184, %v2110
    %v2186 = vxor.u32 %v2185, 2147483648
    %v2187 = vmul.f32 %v2186, 1.442695
    %v2188 = vpow.pop %v2187
    %v2189 = vadd.f32 %v2188, 1.0
    %v2190 = vrcp.pop %v2189
    %v2191 = vmul.f32 1.0, %v2190
    %s2192 = scalar_lea.vmem [#allocation4], 14
    %v2193 = vld [vmem:[%s2192] sm:$0x3]
    %v2194 = vadd.f32 %v2193, %v2180
    %v2195 = vxor.u32 %v2194, 2147483648
    %v2196 = vmul.f32 %v2195, 1.442695
    %v2197 = vpow.pop %v2196
    %v2198 = vadd.f32 %v2197, 1.0
    %v2199 = vrcp.pop %v2198
    %v2200 = vmul.f32 1.0, %v2199
    %s2201 = scalar_lea.vmem [#allocation5], 14
    %v2202 = vld [vmem:[%s2201] sm:$0x3]
    %2203 = vmatprep.subr.mxu0 0.0
    %2204 = vmatpush1.msra.mxu0 0.0
    %2205 = vmatprep.subr.mxu0 0.0
    %2206 = vmatpush1.msra.mxu0 0.0
    %2207 = vmatprep.subr.mxu0 0.0
    %2208 = vmatpush1.msra.mxu0 0.0
    %2209 = vmatprep.subr.mxu0 0.0
    %2210 = vmatpush1.msra.mxu0 0.0
    %2211 = vmatprep.subr.mxu0 0.0
    %2212 = vmatpush1.msra.mxu0 0.0
    %2213 = vmatprep.subr.mxu0 0.0
    %2214 = vmatpush1.msra.mxu0 0.0
    %2215 = vmatprep.subr.mxu0 0.0
    %2216 = vmatpush1.msra.mxu0 0.0
    %2217 = vmatprep.subr.mxu0 0.0
    %2218 = vmatpush1.msra.mxu0 0.0
    %2219 = vmatprep.subr.mxu0 0.0
    %2220 = vmatpush1.msra.mxu0 0.0
    %2221 = vmatprep.subr.mxu0 0.0
    %2222 = vmatpush1.msra.mxu0 0.0
    %2223 = vmatprep.subr.mxu0 0.0
    %2224 = vmatpush1.msra.mxu0 0.0
    %2225 = vmatprep.subr.mxu0 0.0
    %2226 = vmatpush1.msra.mxu0 0.0
    %2227 = vmatprep.subr.mxu0 0.0
    %2228 = vmatpush1.msra.mxu0 %v341
    %2229 = vmatprep.subr.mxu0 0.0
    %2230 = vmatpush1.msra.mxu0 %v340
    %2231 = vmatprep.subr.mxu0 0.0
    %2232 = vmatpush1.msra.mxu0 %v339
    %2233 = vmatprep.subr.mxu0 0.0
    %2234 = vmatpush1.msra.mxu0 %v338
    %2235 = vmatprep.subr.mxu0 0.0
    %2236 = vmatpush2.msra.mxu0 0.0
    %2237 = vmatprep.subr.mxu0 0.0
    %2238 = vmatpush2.msra.mxu0 0.0
    %2239 = vmatprep.subr.mxu0 0.0
    %2240 = vmatpush2.msra.mxu0 0.0
    %2241 = vmatprep.subr.mxu0 0.0
    %2242 = vmatpush2.msra.mxu0 0.0
    %2243 = vmatprep.subr.mxu0 0.0
    %2244 = vmatpush2.msra.mxu0 0.0
    %2245 = vmatprep.subr.mxu0 0.0
    %2246 = vmatpush2.msra.mxu0 0.0
    %2247 = vmatprep.subr.mxu0 0.0
    %2248 = vmatpush2.msra.mxu0 0.0
    %2249 = vmatprep.subr.mxu0 0.0
    %2250 = vmatpush2.msra.mxu0 0.0
    %2251 = vmatprep.subr.mxu0 0.0
    %2252 = vmatpush2.msra.mxu0 0.0
    %2253 = vmatprep.subr.mxu0 0.0
    %2254 = vmatpush2.msra.mxu0 0.0
    %2255 = vmatprep.subr.mxu0 0.0
    %2256 = vmatpush2.msra.mxu0 0.0
    %2257 = vmatprep.subr.mxu0 0.0
    %2258 = vmatpush2.msra.mxu0 0.0
    %2259 = vmatprep.subr.mxu0 0.0
    %2260 = vmatpush2.msra.mxu0 0.0
    %2261 = vmatprep.subr.mxu0 0.0
    %2262 = vmatpush2.msra.mxu0 0.0
    %2263 = vmatprep.subr.mxu0 0.0
    %2264 = vmatpush2.msra.mxu0 0.0
    %2265 = vmatprep.subr.mxu0 0.0
    %2266 = vmatpush2.msra.mxu0 0.0
    %2267 = vmatprep.mubr.f32.mxu0 0.0
    %2268 = vmatmul.mubr.f32.gmra.mxu0 %v2041
    %v2269 = vpop.f32.mrf.mxu0
    %v2270 = vadd.f32 %v347, %v2269
    %v2271 = vpop.f32.mrf.mxu0
    %2272 = vdwg.mxu0
    %v2273 = vmul.f32 %v2191, %v2270
    %v2274 = vadd.f32 %v2202, %v2273
    %v2275 = vtanh.pop %v2274
    %v2276 = vsub.f32 1.0, %v2200
    %v2277 = vmul.f32 %v2276, %v2275
    %v2278 = vmul.f32 %v2200, %v2037
    %v2279 = vadd.f32 %v2277, %v2278
    %s2280 = scalar_lea.vmem [#allocation2], 14
    %2281 = vst.msk [vmem:[%s2280] sm:$0x3] %vm586, %v2279
    %v2282 = vld [vmem:[%s1] sm:$0xff]
    %v2283 = vld [vmem:[%s1 + $0x8] sm:$0xff]
    %v2284 = vld [vmem:[#allocation2] sm:$0xff]
    %v2285 = vld [vmem:[#allocation2 + $0x8] sm:$0xff]
    %2287 = vset.pattern.permute.xlu0 0
    %2288 = vperm.xlu0 %2287, %v2282
    %v2289 = vpop.permute.xlu0 %2288
    %2292 = vset.pattern.permute.xlu0 0
    %2293 = vperm.xlu0 %2292, %v2283
    %v2294 = vpop.permute.xlu0 %2293
    %v2296 = vmul.f32 %v2284, %v2289
    %v2297 = vmul.f32 %v2285, %v2294
    %v2298 = vsub.f32 1.0, %v2282
    %v2299 = vsub.f32 1.0, %v2283
    %v2300 = vmul.f32 %v2298, -2.0
    %v2301 = vmul.f32 %v2299, -2.0
    %2303 = vset.pattern.permute.xlu0 0
    %2304 = vperm.xlu0 %2303, %v2300
    %v2305 = vpop.permute.xlu0 %2304
    %2308 = vset.pattern.permute.xlu0 0
    %2309 = vperm.xlu0 %2308, %v2301
    %v2310 = vpop.permute.xlu0 %2309
    %v2312 = vadd.f32 %v2296, %v2305
    %v2313 = vadd.f32 %v2297, %v2310
    %v2314 = vld [vmem:[%s13] sm:$0xff]
    %v2315 = vld [vmem:[%s13 + $0x8] sm:$0xff]
    %v2316 = vld [vmem:[%s13 + $0x10] sm:$0xff]
    %v2317 = vld [vmem:[%s13 + $0x18] sm:$0xff]
    %v2318 = vld [vmem:[%s14] sm:$0x1]
    %v2320 = vlaneseq
    %v2321 = vshrl.u32 %v2320, 7
    %v2322 = vsub.s32 0, %v2321
    %v2323 = vrot.slane %v2318, %v2322
    %v2326 = vsel %vm70, %v2312, 0
    %v2329 = vsel %vm70, %v2313, 0
    %2331 = vmatprep.subr.mxu0 0.0
    %2332 = vmatpush1.msra.mxu0 0.0
    %2333 = vmatprep.subr.mxu0 0.0
    %2334 = vmatpush1.msra.mxu0 0.0
    %2335 = vmatprep.subr.mxu0 0.0
    %2336 = vmatpush1.msra.mxu0 0.0
    %2337 = vmatprep.subr.mxu0 0.0
    %2338 = vmatpush1.msra.mxu0 0.0
    %2339 = vmatprep.subr.mxu0 0.0
    %2340 = vmatpush1.msra.mxu0 0.0
    %2341 = vmatprep.subr.mxu0 0.0
    %2342 = vmatpush1.msra.mxu0 0.0
    %2343 = vmatprep.subr.mxu0 0.0
    %2344 = vmatpush1.msra.mxu0 0.0
    %2345 = vmatprep.subr.mxu0 0.0
    %2346 = vmatpush1.msra.mxu0 0.0
    %2347 = vmatprep.subr.mxu0 0.0
    %2348 = vmatpush1.msra.mxu0 0.0
    %2349 = vmatprep.subr.mxu0 0.0
    %2350 = vmatpush1.msra.mxu0 0.0
    %2351 = vmatprep.subr.mxu0 0.0
    %2352 = vmatpush1.msra.mxu0 0.0
    %2353 = vmatprep.subr.mxu0 0.0
    %2354 = vmatpush1.msra.mxu0 0.0
    %2355 = vmatprep.subr.mxu0 0.0
    %2356 = vmatpush1.msra.mxu0 %v2317
    %2357 = vmatprep.subr.mxu0 0.0
    %2358 = vmatpush1.msra.mxu0 %v2316
    %2359 = vmatprep.subr.mxu0 0.0
    %2360 = vmatpush1.msra.mxu0 %v2315
    %2361 = vmatprep.subr.mxu0 0.0
    %2362 = vmatpush1.msra.mxu0 %v2314
    %2363 = vmatprep.subr.mxu0 0.0
    %2364 = vmatpush2.msra.mxu0 0.0
    %2365 = vmatprep.subr.mxu0 0.0
    %2366 = vmatpush2.msra.mxu0 0.0
    %2367 = vmatprep.subr.mxu0 0.0
    %2368 = vmatpush2.msra.mxu0 0.0
    %2369 = vmatprep.subr.mxu0 0.0
    %2370 = vmatpush2.msra.mxu0 0.0
    %2371 = vmatprep.subr.mxu0 0.0
    %2372 = vmatpush2.msra.mxu0 0.0
    %2373 = vmatprep.subr.mxu0 0.0
    %2374 = vmatpush2.msra.mxu0 0.0
    %2375 = vmatprep.subr.mxu0 0.0
    %2376 = vmatpush2.msra.mxu0 0.0
    %2377 = vmatprep.subr.mxu0 0.0
    %2378 = vmatpush2.msra.mxu0 0.0
    %2379 = vmatprep.subr.mxu0 0.0
    %2380 = vmatpush2.msra.mxu0 0.0
    %2381 = vmatprep.subr.mxu0 0.0
    %2382 = vmatpush2.msra.mxu0 0.0
    %2383 = vmatprep.subr.mxu0 0.0
    %2384 = vmatpush2.msra.mxu0 0.0
    %2385 = vmatprep.subr.mxu0 0.0
    %2386 = vmatpush2.msra.mxu0 0.0
    %2387 = vmatprep.subr.mxu0 0.0
    %2388 = vmatpush2.msra.mxu0 0.0
    %2389 = vmatprep.subr.mxu0 0.0
    %2390 = vmatpush2.msra.mxu0 0.0
    %2391 = vmatprep.subr.mxu0 0.0
    %2392 = vmatpush2.msra.mxu0 0.0
    %2393 = vmatprep.subr.mxu0 0.0
    %2394 = vmatpush2.msra.mxu0 0.0
    %2395 = vmatprep.mubr.f32.mxu0 0.0
    %2396 = vmatmul.mubr.f32.gmra.mxu0 %v2326
    %v2397 = vpop.f32.mrf.mxu0
    %v2398 = vadd.f32 %v2323, %v2397
    %v2399 = vpop.f32.mrf.mxu0
    %2400 = vmatprep.mubr.f32.mxu0 0.0
    %2401 = vmatmul.mubr.f32.gmra.mxu0 %v2329
    %v2402 = vpop.f32.mrf.mxu0
    %v2403 = vadd.f32 %v2323, %v2402
    %v2404 = vpop.f32.mrf.mxu0
    %2405 = vdwg.mxu0
    %v2406 = vmax.f32 %v2398, 0.0
    %v2407 = vmax.f32 %v2403, 0.0
    %v2408 = vld [vmem:[%s2] sm:$0x3]
    %vm2409 = vcmask 130048
    %v2411 = vsel %vm2409, %v2408, 0
    %2413 = vmatprep.subr.mxu0 0.0
    %2414 = vmatpush1.msra.mxu0 0.0
    %2415 = vmatprep.subr.mxu0 0.0
    %2416 = vmatpush1.msra.mxu0 0.0
    %2417 = vmatprep.subr.mxu0 0.0
    %2418 = vmatpush1.msra.mxu0 0.0
    %2419 = vmatprep.subr.mxu0 0.0
    %2420 = vmatpush1.msra.mxu0 0.0
    %2421 = vmatprep.subr.mxu0 0.0
    %2422 = vmatpush1.msra.mxu0 0.0
    %2423 = vmatprep.subr.mxu0 0.0
    %2424 = vmatpush1.msra.mxu0 0.0
    %2425 = vmatprep.subr.mxu0 0.0
    %2426 = vmatpush1.msra.mxu0 0.0
    %2427 = vmatprep.subr.mxu0 0.0
    %2428 = vmatpush1.msra.mxu0 0.0
    %2429 = vmatprep.subr.mxu0 0.0
    %2430 = vmatpush1.msra.mxu0 0.0
    %2431 = vmatprep.subr.mxu0 0.0
    %2432 = vmatpush1.msra.mxu0 0.0
    %2433 = vmatprep.subr.mxu0 0.0
    %2434 = vmatpush1.msra.mxu0 0.0
    %2435 = vmatprep.subr.mxu0 0.0
    %2436 = vmatpush1.msra.mxu0 0.0
    %2437 = vmatprep.subr.mxu0 0.0
    %2438 = vmatpush1.msra.mxu0 0.0
    %2439 = vmatprep.subr.mxu0 0.0
    %2440 = vmatpush1.msra.mxu0 0.0
    %2441 = vmatprep.subr.mxu0 0.0
    %2442 = vmatpush1.msra.mxu0 %v2407
    %2443 = vmatprep.subr.mxu0 0.0
    %2444 = vmatpush1.msra.mxu0 %v2406
    %2445 = vmatprep.subr.mxu0 0.0
    %2446 = vmatpush2.msra.mxu0 0.0
    %2447 = vmatprep.subr.mxu0 0.0
    %2448 = vmatpush2.msra.mxu0 0.0
    %2449 = vmatprep.subr.mxu0 0.0
    %2450 = vmatpush2.msra.mxu0 0.0
    %2451 = vmatprep.subr.mxu0 0.0
    %2452 = vmatpush2.msra.mxu0 0.0
    %2453 = vmatprep.subr.mxu0 0.0
    %2454 = vmatpush2.msra.mxu0 0.0
    %2455 = vmatprep.subr.mxu0 0.0
    %2456 = vmatpush2.msra.mxu0 0.0
    %2457 = vmatprep.subr.mxu0 0.0
    %2458 = vmatpush2.msra.mxu0 0.0
    %2459 = vmatprep.subr.mxu0 0.0
    %2460 = vmatpush2.msra.mxu0 0.0
    %2461 = vmatprep.subr.mxu0 0.0
    %2462 = vmatpush2.msra.mxu0 0.0
    %2463 = vmatprep.subr.mxu0 0.0
    %2464 = vmatpush2.msra.mxu0 0.0
    %2465 = vmatprep.subr.mxu0 0.0
    %2466 = vmatpush2.msra.mxu0 0.0
    %2467 = vmatprep.subr.mxu0 0.0
    %2468 = vmatpush2.msra.mxu0 0.0
    %2469 = vmatprep.subr.mxu0 0.0
    %2470 = vmatpush2.msra.mxu0 0.0
    %2471 = vmatprep.subr.mxu0 0.0
    %2472 = vmatpush2.msra.mxu0 0.0
    %2473 = vmatprep.subr.mxu0 0.0
    %2474 = vmatpush2.msra.mxu0 0.0
    %2475 = vmatprep.subr.mxu0 0.0
    %2476 = vmatpush2.msra.mxu0 0.0
    %2477 = vmatprep.mubr.f32.mxu0 0.0
    %2478 = vmatmul.mubr.f32.gmra.mxu0 %v2411
    %v2479 = vpop.f32.mrf.mxu0
    %v2480 = vadd.f32 0.0, %v2479
    %v2481 = vpop.f32.mrf.mxu0
    %2482 = vdwg.mxu0
    %v2483 = vld [vmem:[%s15] sm:$0xff]
    %v2484 = vld [vmem:[%s15 + $0x8] sm:$0xff]
    %v2485 = vld [vmem:[%s15 + $0x10] sm:$0xff]
    %v2486 = vld [vmem:[%s15 + $0x18] sm:$0xff]
    %v2487 = vld [vmem:[%s16] sm:$0x1]
    %v2489 = vlaneseq
    %v2490 = vshrl.u32 %v2489, 7
    %v2491 = vsub.s32 0, %v2490
    %v2492 = vrot.slane %v2487, %v2491
    %v2495 = vsel %vm70, %v2480, 0
    %2497 = vmatprep.subr.mxu0 0.0
    %2498 = vmatpush1.msra.mxu0 0.0
    %2499 = vmatprep.subr.mxu0 0.0
    %2500 = vmatpush1.msra.mxu0 0.0
    %2501 = vmatprep.subr.mxu0 0.0
    %2502 = vmatpush1.msra.mxu0 0.0
    %2503 = vmatprep.subr.mxu0 0.0
    %2504 = vmatpush1.msra.mxu0 0.0
    %2505 = vmatprep.subr.mxu0 0.0
    %2506 = vmatpush1.msra.mxu0 0.0
    %2507 = vmatprep.subr.mxu0 0.0
    %2508 = vmatpush1.msra.mxu0 0.0
    %2509 = vmatprep.subr.mxu0 0.0
    %2510 = vmatpush1.msra.mxu0 0.0
    %2511 = vmatprep.subr.mxu0 0.0
    %2512 = vmatpush1.msra.mxu0 0.0
    %2513 = vmatprep.subr.mxu0 0.0
    %2514 = vmatpush1.msra.mxu0 0.0
    %2515 = vmatprep.subr.mxu0 0.0
    %2516 = vmatpush1.msra.mxu0 0.0
    %2517 = vmatprep.subr.mxu0 0.0
    %2518 = vmatpush1.msra.mxu0 0.0
    %2519 = vmatprep.subr.mxu0 0.0
    %2520 = vmatpush1.msra.mxu0 0.0
    %2521 = vmatprep.subr.mxu0 0.0
    %2522 = vmatpush1.msra.mxu0 %v2486
    %2523 = vmatprep.subr.mxu0 0.0
    %2524 = vmatpush1.msra.mxu0 %v2485
    %2525 = vmatprep.subr.mxu0 0.0
    %2526 = vmatpush1.msra.mxu0 %v2484
    %2527 = vmatprep.subr.mxu0 0.0
    %2528 = vmatpush1.msra.mxu0 %v2483
    %2529 = vmatprep.subr.mxu0 0.0
    %2530 = vmatpush2.msra.mxu0 0.0
    %2531 = vmatprep.subr.mxu0 0.0
    %2532 = vmatpush2.msra.mxu0 0.0
    %2533 = vmatprep.subr.mxu0 0.0
    %2534 = vmatpush2.msra.mxu0 0.0
    %2535 = vmatprep.subr.mxu0 0.0
    %2536 = vmatpush2.msra.mxu0 0.0
    %2537 = vmatprep.subr.mxu0 0.0
    %2538 = vmatpush2.msra.mxu0 0.0
    %2539 = vmatprep.subr.mxu0 0.0
    %2540 = vmatpush2.msra.mxu0 0.0
    %2541 = vmatprep.subr.mxu0 0.0
    %2542 = vmatpush2.msra.mxu0 0.0
    %2543 = vmatprep.subr.mxu0 0.0
    %2544 = vmatpush2.msra.mxu0 0.0
    %2545 = vmatprep.subr.mxu0 0.0
    %2546 = vmatpush2.msra.mxu0 0.0
    %2547 = vmatprep.subr.mxu0 0.0
    %2548 = vmatpush2.msra.mxu0 0.0
    %2549 = vmatprep.subr.mxu0 0.0
    %2550 = vmatpush2.msra.mxu0 0.0
    %2551 = vmatprep.subr.mxu0 0.0
    %2552 = vmatpush2.msra.mxu0 0.0
    %2553 = vmatprep.subr.mxu0 0.0
    %2554 = vmatpush2.msra.mxu0 0.0
    %2555 = vmatprep.subr.mxu0 0.0
    %2556 = vmatpush2.msra.mxu0 0.0
    %2557 = vmatprep.subr.mxu0 0.0
    %2558 = vmatpush2.msra.mxu0 0.0
    %2559 = vmatprep.subr.mxu0 0.0
    %2560 = vmatpush2.msra.mxu0 0.0
    %2561 = vmatprep.mubr.f32.mxu0 0.0
    %2562 = vmatmul.mubr.f32.gmra.mxu0 %v2495
    %v2563 = vpop.f32.mrf.mxu0
    %v2564 = vadd.f32 %v2492, %v2563
    %v2565 = vpop.f32.mrf.mxu0
    %2566 = vdwg.mxu0
    %vm2567 = vcmask 58368
    %2568 = vst.msk [vmem:[#allocation6] sm:$0x3] %vm2567, %v2564
    // Predicated region
    $region70: #{condition_classification_rnn.1} parent=1 // pred_check
      _
    $region71: #{condition_classification_rnn.1} parent=1 // pred_check_branch
      %2570 = sbr.rel (0) target = $region73
    $region72: #{condition_classification_rnn.1} parent=1 // pred_region
      %s2572 = ssub.s32 32, 32
      %2573 = vsyncadd [#allocation7], %s2572
      %s2575 = sshll.u32 [#allocation6], 4
      %s2576 = int_to_ptr.vmem [resolvable:$true] %s2575
      %2578 = dma.vmem_to_hbm [thread:$0]  %s2576, 32, %s17, [#allocation7]
    $region73: #{condition_classification_rnn.1} parent=1 // pred_fallthru
      _
    // Predicated region
    $region74: #{condition_classification_rnn.1} parent=1 // pred_check
      _
    $region75: #{condition_classification_rnn.1} parent=1 // pred_check_branch
      %2580 = sbr.rel (0) target = $region77
    $region76: #{condition_classification_rnn.1} parent=1 // pred_region
      %2581 = dma.done [#allocation7], 32
    $region77: #{condition_classification_rnn.1} parent=1 // pred_fallthru
      _
    %2582 = vsyncpa [#allocation7], 1

</llo_original>
